<compile_context>
chip_gen: v5e
topology: v5e:2x2
jax: 0.10.0
libtpu: 0.0.40
codegen_flags: <defaults>
</compile_context>

<pallas_src>
import functools

import jax
import jax.numpy as jnp
from jax.experimental import pallas as pl
from jax.experimental.pallas import tpu as pltpu


# ----------------------------------------------------------------------------
# Fused Pallas kernel: one grid step = Bt batch elements, everything in VMEM.
# ----------------------------------------------------------------------------
def _unet_byol_kernel(x_ref, m1_ref, b1_ref, pe_ref, po_ref, qe_ref, qo_ref,
                      m2_ref, b2_ref, pu_ref, m3u_ref, m3h_ref, b3_ref,
                      fc1w_ref, fc1b_ref, fc2w_ref, fc2b_ref,
                      o_ref, s2_ref, s3u_ref, s3h_ref, *, Bt, He, Hp):
    f32 = jnp.float32

    def mm(a, b):
        return jnp.dot(a, b, preferred_element_type=f32)

    n1 = He * Bt                      # rows of every full-resolution slab
    n2 = Hp * Bt                      # rows of the pooled slab

    # ---- conv1: averaging + F.pad + conv row-padding are folded into the
    #      host-prepared input slab / weights; three band matmuls over aligned
    #      row slices of the pre-padded input.
    h1 = (mm(x_ref[0:n1, :], m1_ref[0])
          + mm(x_ref[Bt:Bt + n1, :], m1_ref[1])
          + mm(x_ref[2 * Bt:2 * Bt + n1, :], m1_ref[2]))
    h1 = jnp.maximum(h1 + b1_ref[...], 0.0)                       # (He*Bt, We*hid)

    # ---- 2x2 max pool: row-pair max then width-pair max via host-built
    #      selection matmuls (MXU has plenty of slack; VPU only does the max).
    r = jnp.maximum(mm(pe_ref[...], h1), mm(po_ref[...], h1))     # (Hp*Bt, We*hid)
    pooled = jnp.maximum(mm(r, qe_ref[...]), mm(r, qo_ref[...]))  # (Hp*Bt, Wp*hid)

    # ---- conv2 via a zero-bordered VMEM scratch slab.  Borders are re-zeroed
    #      every step (a few KB) so the grid axis can stay "parallel" on v7x.
    z2 = jnp.zeros((Bt, s2_ref.shape[1]), f32)
    s2_ref[0:Bt, :] = z2
    s2_ref[(Hp + 1) * Bt:(Hp + 2) * Bt, :] = z2
    s2_ref[Bt:(Hp + 1) * Bt, :] = pooled
    h2 = (mm(s2_ref[0:n2, :], m2_ref[0])
          + mm(s2_ref[Bt:Bt + n2, :], m2_ref[1])
          + mm(s2_ref[2 * Bt:2 * Bt + n2, :], m2_ref[2]))
    h2 = jnp.maximum(h2 + b2_ref[...], 0.0)                       # (Hp*Bt, Wp*hid)

    # ---- nearest 2x upsample: row repeat here; lane (width) repeat is folded
    #      into the conv3 "up" weights on the host.
    rowrep = mm(pu_ref[...], h2)                                  # (He*Bt, Wp*hid)

    # ---- conv3 on concat([up, h1]): the skip concat is folded into split
    #      weights; both halves use zero-bordered scratch slabs for padding.
    z3u = jnp.zeros((Bt, s3u_ref.shape[1]), f32)
    z3h = jnp.zeros((Bt, s3h_ref.shape[1]), f32)
    s3u_ref[0:Bt, :] = z3u
    s3u_ref[(He + 1) * Bt:(He + 2) * Bt, :] = z3u
    s3u_ref[Bt:(He + 1) * Bt, :] = rowrep
    s3h_ref[0:Bt, :] = z3h
    s3h_ref[(He + 1) * Bt:(He + 2) * Bt, :] = z3h
    s3h_ref[Bt:(He + 1) * Bt, :] = h1
    out3 = (mm(s3u_ref[0:n1, :], m3u_ref[0])
            + mm(s3h_ref[0:n1, :], m3h_ref[0])
            + mm(s3u_ref[Bt:Bt + n1, :], m3u_ref[1])
            + mm(s3h_ref[Bt:Bt + n1, :], m3h_ref[1])
            + mm(s3u_ref[2 * Bt:2 * Bt + n1, :], m3u_ref[2])
            + mm(s3h_ref[2 * Bt:2 * Bt + n1, :], m3h_ref[2])
            + b3_ref[...])                                        # (He*Bt, We*cout)

    # ---- MLP: fc1 + ReLU + fc2.  The NCHW flatten is folded into He
    #      accumulating matmuls (M = Bt rows each), summed with a balanced tree
    #      to avoid a serial MXU chain.
    parts = [mm(out3[h * Bt:(h + 1) * Bt, :], fc1w_ref[h]) for h in range(He)]
    while len(parts) > 1:
        parts = [parts[i] + parts[i + 1] if i + 1 < len(parts) else parts[i]
                 for i in range(0, len(parts), 2)]
    hmlp = jnp.maximum(parts[0] + fc1b_ref[...], 0.0)             # (Bt, mlp_hidden)
    o_ref[...] = mm(hmlp, fc2w_ref[...]) + fc2b_ref[...]          # (Bt, num_out)


# ----------------------------------------------------------------------------
# One-time host-side weight preprocessing (plain XLA, tiny tensors)
# ----------------------------------------------------------------------------
def _conv_band_mats(weight, width_in, width_out, in_offset):
    """Width-band (block-Toeplitz over width) form of a 3x3 'same' conv.

    Returns M of shape (3, width_in*Cin, width_out*Cout) so that, for an
    activation slab laid out rows=h, lanes=(w, ci), conv output (rows=h_out,
    lanes=(w_out, co)) = sum_kh Xpad[h_out + kh] @ M[kh].  Input column w_in
    sits at output-grid column (w_in + in_offset); missing columns are zero
    padding and simply drop out of the band.
    """
    Cout, Cin, KH, KW = weight.shape
    w_in = jnp.arange(width_in)[:, None]
    w_out = jnp.arange(width_out)[None, :]
    mats = []
    for kh in range(KH):
        m = jnp.zeros((width_in * Cin, width_out * Cout), jnp.float32)
        for kw in range(KW):
            s = ((w_in + in_offset) == (w_out + kw - 1)).astype(jnp.float32)
            m = m + jnp.kron(s, weight[:, :, kh, kw].T)
        mats.append(m)
    return jnp.stack(mats, axis=0)


# ----------------------------------------------------------------------------
# Forward wrapper: one fused pallas_call for the whole module
# ----------------------------------------------------------------------------
def unet_byol_forward(input_patches, params, nh_size, batch_tile=16):
    """input_patches: (B*L, C, H, W) float32, L = nh_size**2 + 1."""
    f32 = jnp.float32
    hp = jax.lax.Precision.HIGHEST
    BL, C, H, W = input_patches.shape
    L = nh_size ** 2 + 1
    assert BL % L == 0
    B = BL // L
    He, We = H + 1, W + 1                  # spatial size after F.pad([1,0,1,0])
    assert He % 2 == 0 and We % 2 == 0, "UNet pooling needs even padded size"
    Hp, Wp = He // 2, We // 2
    hid = params["c1_w"].shape[0]
    cout = params["c3_w"].shape[0]
    mlp_hidden = params["fc1_w"].shape[1]
    num_out = params["fc2_w"].shape[1]
    WC = W * C
    LWC = L * WC

    Bt = min(batch_tile, B)                # batch elements per grid step
    assert B % Bt == 0
    G = B // Bt                            # grid length (keep even for v7x)

    # ---- input slab: rows = (padded row, local batch), lanes = (l, w, c).
    #      conv1's row padding (F.pad top row + conv pad) is applied here.
    patches = input_patches.reshape(B, L, C, H, W)
    x = patches.transpose(0, 3, 1, 4, 2).reshape(B, H, LWC)
    x = jnp.pad(x, ((0, 0), (2, 1), (0, 0)))                      # (B, He+2, LWC)
    x = (x.reshape(G, Bt, He + 2, LWC).transpose(0, 2, 1, 3)
         .reshape(G * (He + 2) * Bt, LWC))

    # ---- (ref + patch)/2 averaging folded into conv1 weights: x@(A@M1).
    ii = jnp.arange(LWC)[:, None]
    jj = jnp.arange(LWC)[None, :]
    A = 0.5 * ((ii == jj).astype(f32) + (ii == (jj % WC)).astype(f32))
    M1 = jnp.concatenate(
        [_conv_band_mats(params["c1_w"][:, l * C:(l + 1) * C], W, We, 1)
         for l in range(L)], axis=1)                              # (3, LWC, We*hid)
    M1 = jnp.einsum("ij,kjn->kin", A, M1, precision=hp)
    b1r = jnp.tile(params["c1_b"], (We,)).reshape(1, We * hid)

    M2 = _conv_band_mats(params["c2_w"], Wp, Wp, 0)               # (3, Wp*hid, Wp*hid)
    b2r = jnp.tile(params["c2_b"], (Wp,)).reshape(1, Wp * hid)

    M3u = _conv_band_mats(params["c3_w"][:, :hid], We, We, 0)     # "up" half of skip
    M3h = _conv_band_mats(params["c3_w"][:, hid:], We, We, 0)     # "h1" half of skip
    # fold the nearest-neighbour lane (width) repeat into the "up" weights
    su = (jnp.arange(Wp)[:, None] == (jnp.arange(We)[None, :] // 2)).astype(f32)
    Qu = jnp.kron(su, jnp.eye(hid, dtype=f32))                    # (Wp*hid, We*hid)
    M3u = jnp.einsum("ij,kjn->kin", Qu, M3u, precision=hp)        # (3, Wp*hid, We*cout)
    b3r = jnp.tile(params["c3_b"], (We,)).reshape(1, We * cout)

    # ---- pooling / upsample selection matrices (host constants, exact 0/1).
    eye_bt = jnp.eye(Bt, dtype=f32)
    eye_hid = jnp.eye(hid, dtype=f32)
    pe = jnp.kron((2 * jnp.arange(Hp)[:, None] ==
                   jnp.arange(He)[None, :]).astype(f32), eye_bt)      # (Hp*Bt, He*Bt)
    po = jnp.kron((2 * jnp.arange(Hp)[:, None] + 1 ==
                   jnp.arange(He)[None, :]).astype(f32), eye_bt)
    qe = jnp.kron((jnp.arange(We)[:, None] ==
                   2 * jnp.arange(Wp)[None, :]).astype(f32), eye_hid)  # (We*hid, Wp*hid)
    qo = jnp.kron((jnp.arange(We)[:, None] ==
                   2 * jnp.arange(Wp)[None, :] + 1).astype(f32), eye_hid)
    pu = jnp.kron((jnp.arange(He)[:, None] // 2 ==
                   jnp.arange(Hp)[None, :]).astype(f32), eye_bt)       # (He*Bt, Hp*Bt)

    # ---- fc1 rows are NCHW-flattened (c, h, w); remap to (h, (w, c)).
    fc1_k = (params["fc1_w"].reshape(cout, He, We, mlp_hidden)
             .transpose(1, 2, 0, 3).reshape(He, We * cout, mlp_hidden))
    fc1_b = params["fc1_b"].reshape(1, mlp_hidden)
    fc2_w = params["fc2_w"]
    fc2_b = params["fc2_b"].reshape(1, num_out)

    ins = (x, M1, b1r, pe, po, qe, qo, M2, b2r, pu, M3u, M3h, b3r,
           fc1_k, fc1_b, fc2_w, fc2_b)

    def _const_spec(a):
        zeros = (0,) * a.ndim
        return pl.BlockSpec(a.shape, lambda g, _z=zeros: _z)

    in_specs = ([pl.BlockSpec(((He + 2) * Bt, LWC), lambda g: (g, 0))]
                + [_const_spec(a) for a in ins[1:]])
    out_spec = pl.BlockSpec((Bt, num_out), lambda g: (g, 0))
    scratch = [pltpu.VMEM(((Hp + 2) * Bt, Wp * hid), f32),   # conv2 padded slab
               pltpu.VMEM(((He + 2) * Bt, Wp * hid), f32),   # conv3 "up" padded slab
               pltpu.VMEM(((He + 2) * Bt, We * hid), f32)]   # conv3 "h1" padded slab

    # Advisory cost estimate (per-grid-step matmul list, x G).
    dots = ([(He * Bt, LWC, We * hid)] * 3
            + [(Hp * Bt, He * Bt, We * hid)] * 2
            + [(Hp * Bt, We * hid, Wp * hid)] * 2
            + [(Hp * Bt, Wp * hid, Wp * hid)] * 3
            + [(He * Bt, Hp * Bt, Wp * hid)]
            + [(He * Bt, Wp * hid, We * cout)] * 3
            + [(He * Bt, We * hid, We * cout)] * 3
            + [(Bt, We * cout, mlp_hidden)] * He
            + [(Bt, mlp_hidden, num_out)])
    flops = G * sum(2 * m * k * n for (m, k, n) in dots)
    bytes_accessed = int(sum(int(a.size) * 4 for a in ins) + B * num_out * 4)

    kern = functools.partial(_unet_byol_kernel, Bt=Bt, He=He, Hp=Hp)
    out = pl.pallas_call(
        kern,
        out_shape=jax.ShapeDtypeStruct((B, num_out), f32),
        grid=(G,),
        in_specs=in_specs,
        out_specs=out_spec,
        scratch_shapes=scratch,
        compiler_params=pltpu.CompilerParams(
            dimension_semantics=("parallel",),        # v7x: shard grid over 2 TCs
            vmem_limit_bytes=16 * 1024 * 1024),       # working set ~2 MiB
        cost_estimate=pl.CostEstimate(flops=flops, transcendentals=0,
                                      bytes_accessed=bytes_accessed),
    )(*ins)
    return out


# ----------------------------------------------------------------------------
# Pure-JAX reference (same invented UNet_small) for validation
# ----------------------------------------------------------------------------
def reference_forward(input_patches, params, nh_size):
    # TODO(synk): UNet_small source is not provided in the reference module;
    # this minimal 2-level UNet (conv-relu / maxpool / conv-relu / nearest-up /
    # skip-concat / conv) matches the previous submission's assumption.
    P = jax.lax.Precision.HIGHEST
    BL, C, H, W = input_patches.shape
    L = nh_size ** 2 + 1
    B = BL // L
    patches = input_patches.reshape(B, L, C, H, W)
    ave = (patches[:, :1] + patches[:, 1:]) * 0.5
    ave_patches = jnp.concatenate([patches[:, :1], ave], axis=1).reshape(B, L * C, H, W)
    x = jnp.pad(ave_patches, ((0, 0), (0, 0), (1, 0), (1, 0)))

    def conv(x, w, b, relu):
        y = jax.lax.conv_general_dilated(
            x, w, (1, 1), ((1, 1), (1, 1)),
            dimension_numbers=("NCHW", "OIHW", "NCHW"), precision=P)
        y = y + b[None, :, None, None]
        return jnp.maximum(y, 0.0) if relu else y

    h1 = conv(x, params["c1_w"], params["c1_b"], True)
    Bn, Ch, He, We = h1.shape
    pool = h1.reshape(Bn, Ch, He // 2, 2, We // 2, 2).max(axis=(3, 5))
    h2 = conv(pool, params["c2_w"], params["c2_b"], True)
    up = jnp.repeat(jnp.repeat(h2, 2, axis=2), 2, axis=3)
    cat = jnp.concatenate([up, h1], axis=1)
    out3 = conv(cat, params["c3_w"], params["c3_b"], False)
    emb = out3.reshape(B, -1)
    h = jnp.maximum(jnp.dot(emb, params["fc1_w"], precision=P) + params["fc1_b"], 0.0)
    return jnp.dot(h, params["fc2_w"], precision=P) + params["fc2_b"]


# ----------------------------------------------------------------------------
# Deterministic parameter construction
# ----------------------------------------------------------------------------
def init_params(key, in_ch, hid, out_ch, unet_out_size, mlp_hidden, num_out_ftrs):
    ks = jax.random.split(key, 10)

    def w(k, shape, fan_in):
        return jax.random.normal(k, shape, jnp.float32) * (1.0 / jnp.sqrt(fan_in))

    def b(k, n):
        return jax.random.normal(k, (n,), jnp.float32) * 0.1

    return {
        "c1_w": w(ks[0], (hid, in_ch, 3, 3), in_ch * 9),
        "c1_b": b(ks[5], hid),
        "c2_w": w(ks[1], (hid, hid, 3, 3), hid * 9),
        "c2_b": b(ks[6], hid),
        "c3_w": w(ks[2], (out_ch, 2 * hid, 3, 3), 2 * hid * 9),
        "c3_b": b(ks[7], out_ch),
        "fc1_w": w(ks[3], (unet_out_size, mlp_hidden), unet_out_size),
        "fc1_b": b(ks[8], mlp_hidden),
        "fc2_w": w(ks[4], (mlp_hidden, num_out_ftrs), mlp_hidden),
        "fc2_b": b(ks[9], num_out_ftrs),
    }


if __name__ == "__main__":
    # Config consistent with the module: nh_size=2 -> L=5 patches, C=3,
    # patchsize=7 (odd) -> padded spatial 8 = patchsize_e; UNet in_ch = 15,
    # num_out_channels=4 -> unet_out_size = 256; num_out_ftrs = 32.
    # B=32 with batch_tile=16 gives grid=(2,) -> 128-row matmuls and both
    # v7x TensorCores busy.
    nh_size = 2
    L = nh_size ** 2 + 1
    B = 32
    C = 3
    patchsize = 7
    num_in_ftrs = nh_size ** 2 * C           # 12
    num_out_channels = 4
    num_out_ftrs = 32
    patchsize_e = patchsize + patchsize % 2  # 8
    unet_out_size = num_out_channels * patchsize_e ** 2  # 256
    unet_hidden = 8
    mlp_hidden = 256

    key = jax.random.PRNGKey(0)
    kx, kp = jax.random.split(key)
    x = jax.random.normal(kx, (B * L, C, patchsize, patchsize), jnp.float32)
    params = init_params(kp, num_in_ftrs + 3, unet_hidden, num_out_channels,
                         unet_out_size, mlp_hidden, num_out_ftrs)

    fwd = jax.jit(functools.partial(unet_byol_forward, nh_size=nh_size,
                                    batch_tile=16))
    out = jax.block_until_ready(fwd(x, params))
    assert out.shape == (B, num_out_ftrs), out.shape

    ref = jax.block_until_ready(
        jax.jit(functools.partial(reference_forward, nh_size=nh_size))(x, params))
    # Relative error check: Mosaic f32 matmuls are expected to be ~f32 accurate
    # (rel err ~1e-6); the 3e-2 bound only leaves room for a bf16-pass MXU
    # lowering while still flagging any real indexing bug (those give O(1)
    # relative error).
    rel_err = float(jnp.max(jnp.abs(out - ref)) /
                    jnp.maximum(jnp.max(jnp.abs(ref)), 1e-6))
    assert rel_err < 3e-2, f"Pallas kernel deviates from reference: rel_err={rel_err}"
    print("KERNEL_OK")
</pallas_src>

<mosaic_0001>
module attributes {stable_mosaic.version = 11 : i64} {
  func.func @_unet_byol_kernel(%arg0: i32, %arg1: memref<160x105xf32, #tpu.memory_space<vmem>>, %arg2: memref<3x105x64xf32, #tpu.memory_space<vmem>>, %arg3: memref<1x64xf32, #tpu.memory_space<vmem>>, %arg4: memref<64x128xf32, #tpu.memory_space<vmem>>, %arg5: memref<64x128xf32, #tpu.memory_space<vmem>>, %arg6: memref<64x32xf32, #tpu.memory_space<vmem>>, %arg7: memref<64x32xf32, #tpu.memory_space<vmem>>, %arg8: memref<3x32x32xf32, #tpu.memory_space<vmem>>, %arg9: memref<1x32xf32, #tpu.memory_space<vmem>>, %arg10: memref<128x64xf32, #tpu.memory_space<vmem>>, %arg11: memref<3x32x32xf32, #tpu.memory_space<vmem>>, %arg12: memref<3x64x32xf32, #tpu.memory_space<vmem>>, %arg13: memref<1x32xf32, #tpu.memory_space<vmem>>, %arg14: memref<8x32x256xf32, #tpu.memory_space<vmem>>, %arg15: memref<1x256xf32, #tpu.memory_space<vmem>>, %arg16: memref<256x32xf32, #tpu.memory_space<vmem>>, %arg17: memref<1x32xf32, #tpu.memory_space<vmem>>, %arg18: memref<16x32xf32, #tpu.memory_space<vmem>>, %arg19: memref<96x32xf32, #tpu.memory_space<vmem>>, %arg20: memref<160x32xf32, #tpu.memory_space<vmem>>, %arg21: memref<160x64xf32, #tpu.memory_space<vmem>>) attributes {dimension_semantics = [#tpu.dimension_semantics<parallel>], iteration_bounds = array<i64: 2>, scalar_prefetch = 0 : i64, scratch_operands = 3 : i64, tpu.core_type = #tpu.core_type<tc>, window_params = [{transform_indices = @transform_0, window_bounds = array<i64: 160, 105>}, {pipeline_mode = #tpu.pipeline_mode<synchronous>, transform_indices = @transform_1, window_bounds = array<i64: 3, 105, 64>}, {pipeline_mode = #tpu.pipeline_mode<synchronous>, transform_indices = @transform_2, window_bounds = array<i64: 1, 64>}, {pipeline_mode = #tpu.pipeline_mode<synchronous>, transform_indices = @transform_3, window_bounds = array<i64: 64, 128>}, {pipeline_mode = #tpu.pipeline_mode<synchronous>, transform_indices = @transform_4, window_bounds = array<i64: 64, 128>}, {pipeline_mode = #tpu.pipeline_mode<synchronous>, transform_indices = @transform_5, window_bounds = array<i64: 64, 32>}, {pipeline_mode = #tpu.pipeline_mode<synchronous>, transform_indices = @transform_6, window_bounds = array<i64: 64, 32>}, {pipeline_mode = #tpu.pipeline_mode<synchronous>, transform_indices = @transform_7, window_bounds = array<i64: 3, 32, 32>}, {pipeline_mode = #tpu.pipeline_mode<synchronous>, transform_indices = @transform_8, window_bounds = array<i64: 1, 32>}, {pipeline_mode = #tpu.pipeline_mode<synchronous>, transform_indices = @transform_9, window_bounds = array<i64: 128, 64>}, {pipeline_mode = #tpu.pipeline_mode<synchronous>, transform_indices = @transform_10, window_bounds = array<i64: 3, 32, 32>}, {pipeline_mode = #tpu.pipeline_mode<synchronous>, transform_indices = @transform_11, window_bounds = array<i64: 3, 64, 32>}, {pipeline_mode = #tpu.pipeline_mode<synchronous>, transform_indices = @transform_12, window_bounds = array<i64: 1, 32>}, {pipeline_mode = #tpu.pipeline_mode<synchronous>, transform_indices = @transform_13, window_bounds = array<i64: 8, 32, 256>}, {pipeline_mode = #tpu.pipeline_mode<synchronous>, transform_indices = @transform_14, window_bounds = array<i64: 1, 256>}, {pipeline_mode = #tpu.pipeline_mode<synchronous>, transform_indices = @transform_15, window_bounds = array<i64: 256, 32>}, {pipeline_mode = #tpu.pipeline_mode<synchronous>, transform_indices = @transform_16, window_bounds = array<i64: 1, 32>}, {transform_indices = @transform_17, window_bounds = array<i64: 16, 32>}]} {
    %c0 = arith.constant 0 : index
    %c0_0 = arith.constant 0 : index
    %0 = vector.load %arg1[%c0, %c0_0] : memref<160x105xf32, #tpu.memory_space<vmem>>, vector<128x105xf32>
    %c0_1 = arith.constant 0 : index
    %c0_2 = arith.constant 0 : index
    %c0_3 = arith.constant 0 : index
    %1 = vector.load %arg2[%c0_1, %c0_2, %c0_3] : memref<3x105x64xf32, #tpu.memory_space<vmem>>, vector<1x105x64xf32>
    %2 = vector.shape_cast %1 : vector<1x105x64xf32> to vector<105x64xf32>
    %cst = arith.constant dense<0.000000e+00> : vector<128x64xf32>
    %3 = tpu.matmul %0, %2, %cst {dimension_numbers = #tpu.dot_dimension_numbers<[1], [0], [0], [1], [0, 0, 1, 1], [], []>} : vector<128x105xf32>, vector<105x64xf32>, vector<128x64xf32> -> vector<128x64xf32>
    %c16 = arith.constant 16 : index
    %c0_4 = arith.constant 0 : index
    %4 = vector.load %arg1[%c16, %c0_4] : memref<160x105xf32, #tpu.memory_space<vmem>>, vector<128x105xf32>
    %c1 = arith.constant 1 : index
    %c0_5 = arith.constant 0 : index
    %c0_6 = arith.constant 0 : index
    %5 = vector.load %arg2[%c1, %c0_5, %c0_6] : memref<3x105x64xf32, #tpu.memory_space<vmem>>, vector<1x105x64xf32>
    %6 = vector.shape_cast %5 : vector<1x105x64xf32> to vector<105x64xf32>
    %cst_7 = arith.constant dense<0.000000e+00> : vector<128x64xf32>
    %7 = tpu.matmul %4, %6, %cst_7 {dimension_numbers = #tpu.dot_dimension_numbers<[1], [0], [0], [1], [0, 0, 1, 1], [], []>} : vector<128x105xf32>, vector<105x64xf32>, vector<128x64xf32> -> vector<128x64xf32>
    %8 = arith.addf %3, %7 : vector<128x64xf32>
    %c32 = arith.constant 32 : index
    %c0_8 = arith.constant 0 : index
    %9 = vector.load %arg1[%c32, %c0_8] : memref<160x105xf32, #tpu.memory_space<vmem>>, vector<128x105xf32>
    %c2 = arith.constant 2 : index
    %c0_9 = arith.constant 0 : index
    %c0_10 = arith.constant 0 : index
    %10 = vector.load %arg2[%c2, %c0_9, %c0_10] : memref<3x105x64xf32, #tpu.memory_space<vmem>>, vector<1x105x64xf32>
    %11 = vector.shape_cast %10 : vector<1x105x64xf32> to vector<105x64xf32>
    %cst_11 = arith.constant dense<0.000000e+00> : vector<128x64xf32>
    %12 = tpu.matmul %9, %11, %cst_11 {dimension_numbers = #tpu.dot_dimension_numbers<[1], [0], [0], [1], [0, 0, 1, 1], [], []>} : vector<128x105xf32>, vector<105x64xf32>, vector<128x64xf32> -> vector<128x64xf32>
    %13 = arith.addf %8, %12 : vector<128x64xf32>
    %c0_12 = arith.constant 0 : index
    %c0_13 = arith.constant 0 : index
    %14 = vector.load %arg3[%c0_12, %c0_13] : memref<1x64xf32, #tpu.memory_space<vmem>>, vector<1x64xf32>
    %15 = vector.broadcast %14 : vector<1x64xf32> to vector<128x64xf32>
    %16 = arith.addf %13, %15 : vector<128x64xf32>
    %cst_14 = arith.constant 0.000000e+00 : f32
    %17 = vector.broadcast %cst_14 : f32 to vector<128x64xf32>
    %18 = arith.maximumf %16, %17 : vector<128x64xf32>
    %c0_15 = arith.constant 0 : index
    %c0_16 = arith.constant 0 : index
    %19 = vector.load %arg4[%c0_15, %c0_16] : memref<64x128xf32, #tpu.memory_space<vmem>>, vector<64x128xf32>
    %cst_17 = arith.constant dense<0.000000e+00> : vector<64x64xf32>
    %20 = tpu.matmul %19, %18, %cst_17 {dimension_numbers = #tpu.dot_dimension_numbers<[1], [0], [0], [1], [0, 0, 1, 1], [], []>} : vector<64x128xf32>, vector<128x64xf32>, vector<64x64xf32> -> vector<64x64xf32>
    %c0_18 = arith.constant 0 : index
    %c0_19 = arith.constant 0 : index
    %21 = vector.load %arg5[%c0_18, %c0_19] : memref<64x128xf32, #tpu.memory_space<vmem>>, vector<64x128xf32>
    %cst_20 = arith.constant dense<0.000000e+00> : vector<64x64xf32>
    %22 = tpu.matmul %21, %18, %cst_20 {dimension_numbers = #tpu.dot_dimension_numbers<[1], [0], [0], [1], [0, 0, 1, 1], [], []>} : vector<64x128xf32>, vector<128x64xf32>, vector<64x64xf32> -> vector<64x64xf32>
    %23 = arith.maximumf %20, %22 : vector<64x64xf32>
    %c0_21 = arith.constant 0 : index
    %c0_22 = arith.constant 0 : index
    %24 = vector.load %arg6[%c0_21, %c0_22] : memref<64x32xf32, #tpu.memory_space<vmem>>, vector<64x32xf32>
    %cst_23 = arith.constant dense<0.000000e+00> : vector<64x32xf32>
    %25 = tpu.matmul %23, %24, %cst_23 {dimension_numbers = #tpu.dot_dimension_numbers<[1], [0], [0], [1], [0, 0, 1, 1], [], []>} : vector<64x64xf32>, vector<64x32xf32>, vector<64x32xf32> -> vector<64x32xf32>
    %c0_24 = arith.constant 0 : index
    %c0_25 = arith.constant 0 : index
    %26 = vector.load %arg7[%c0_24, %c0_25] : memref<64x32xf32, #tpu.memory_space<vmem>>, vector<64x32xf32>
    %cst_26 = arith.constant dense<0.000000e+00> : vector<64x32xf32>
    %27 = tpu.matmul %23, %26, %cst_26 {dimension_numbers = #tpu.dot_dimension_numbers<[1], [0], [0], [1], [0, 0, 1, 1], [], []>} : vector<64x64xf32>, vector<64x32xf32>, vector<64x32xf32> -> vector<64x32xf32>
    %28 = arith.maximumf %25, %27 : vector<64x32xf32>
    %cst_27 = arith.constant 0.000000e+00 : f32
    %29 = vector.broadcast %cst_27 : f32 to vector<16x32xf32>
    %c0_28 = arith.constant 0 : index
    %c0_29 = arith.constant 0 : index
    %30 = vector.load %arg19[%c0_28, %c0_29] : memref<96x32xf32, #tpu.memory_space<vmem>>, vector<16x32xf32>
    tpu.vector_store %arg19[%c0_28, %c0_29], %29 {strides = array<i32>} : memref<96x32xf32, #tpu.memory_space<vmem>>, vector<16x32xf32>,
    %c80 = arith.constant 80 : index
    %c0_30 = arith.constant 0 : index
    %31 = vector.load %arg19[%c80, %c0_30] : memref<96x32xf32, #tpu.memory_space<vmem>>, vector<16x32xf32>
    tpu.vector_store %arg19[%c80, %c0_30], %29 {strides = array<i32>} : memref<96x32xf32, #tpu.memory_space<vmem>>, vector<16x32xf32>,
    %c16_31 = arith.constant 16 : index
    %c0_32 = arith.constant 0 : index
    %32 = vector.load %arg19[%c16_31, %c0_32] : memref<96x32xf32, #tpu.memory_space<vmem>>, vector<64x32xf32>
    tpu.vector_store %arg19[%c16_31, %c0_32], %28 {strides = array<i32>} : memref<96x32xf32, #tpu.memory_space<vmem>>, vector<64x32xf32>,
    %c0_33 = arith.constant 0 : index
    %c0_34 = arith.constant 0 : index
    %33 = vector.load %arg19[%c0_33, %c0_34] : memref<96x32xf32, #tpu.memory_space<vmem>>, vector<64x32xf32>
    %c0_35 = arith.constant 0 : index
    %c0_36 = arith.constant 0 : index
    %c0_37 = arith.constant 0 : index
    %34 = vector.load %arg8[%c0_35, %c0_36, %c0_37] : memref<3x32x32xf32, #tpu.memory_space<vmem>>, vector<1x32x32xf32>
    %35 = vector.shape_cast %34 : vector<1x32x32xf32> to vector<32x32xf32>
    %cst_38 = arith.constant dense<0.000000e+00> : vector<64x32xf32>
    %36 = tpu.matmul %33, %35, %cst_38 {dimension_numbers = #tpu.dot_dimension_numbers<[1], [0], [0], [1], [0, 0, 1, 1], [], []>} : vector<64x32xf32>, vector<32x32xf32>, vector<64x32xf32> -> vector<64x32xf32>
    %c16_39 = arith.constant 16 : index
    %c0_40 = arith.constant 0 : index
    %37 = vector.load %arg19[%c16_39, %c0_40] : memref<96x32xf32, #tpu.memory_space<vmem>>, vector<64x32xf32>
    %c1_41 = arith.constant 1 : index
    %c0_42 = arith.constant 0 : index
    %c0_43 = arith.constant 0 : index
    %38 = vector.load %arg8[%c1_41, %c0_42, %c0_43] : memref<3x32x32xf32, #tpu.memory_space<vmem>>, vector<1x32x32xf32>
    %39 = vector.shape_cast %38 : vector<1x32x32xf32> to vector<32x32xf32>
    %cst_44 = arith.constant dense<0.000000e+00> : vector<64x32xf32>
    %40 = tpu.matmul %37, %39, %cst_44 {dimension_numbers = #tpu.dot_dimension_numbers<[1], [0], [0], [1], [0, 0, 1, 1], [], []>} : vector<64x32xf32>, vector<32x32xf32>, vector<64x32xf32> -> vector<64x32xf32>
    %41 = arith.addf %36, %40 : vector<64x32xf32>
    %c32_45 = arith.constant 32 : index
    %c0_46 = arith.constant 0 : index
    %42 = vector.load %arg19[%c32_45, %c0_46] : memref<96x32xf32, #tpu.memory_space<vmem>>, vector<64x32xf32>
    %c2_47 = arith.constant 2 : index
    %c0_48 = arith.constant 0 : index
    %c0_49 = arith.constant 0 : index
    %43 = vector.load %arg8[%c2_47, %c0_48, %c0_49] : memref<3x32x32xf32, #tpu.memory_space<vmem>>, vector<1x32x32xf32>
    %44 = vector.shape_cast %43 : vector<1x32x32xf32> to vector<32x32xf32>
    %cst_50 = arith.constant dense<0.000000e+00> : vector<64x32xf32>
    %45 = tpu.matmul %42, %44, %cst_50 {dimension_numbers = #tpu.dot_dimension_numbers<[1], [0], [0], [1], [0, 0, 1, 1], [], []>} : vector<64x32xf32>, vector<32x32xf32>, vector<64x32xf32> -> vector<64x32xf32>
    %46 = arith.addf %41, %45 : vector<64x32xf32>
    %c0_51 = arith.constant 0 : index
    %c0_52 = arith.constant 0 : index
    %47 = vector.load %arg9[%c0_51, %c0_52] : memref<1x32xf32, #tpu.memory_space<vmem>>, vector<1x32xf32>
    %48 = vector.broadcast %47 : vector<1x32xf32> to vector<64x32xf32>
    %49 = arith.addf %46, %48 : vector<64x32xf32>
    %cst_53 = arith.constant 0.000000e+00 : f32
    %50 = vector.broadcast %cst_53 : f32 to vector<64x32xf32>
    %51 = arith.maximumf %49, %50 : vector<64x32xf32>
    %c0_54 = arith.constant 0 : index
    %c0_55 = arith.constant 0 : index
    %52 = vector.load %arg10[%c0_54, %c0_55] : memref<128x64xf32, #tpu.memory_space<vmem>>, vector<128x64xf32>
    %cst_56 = arith.constant dense<0.000000e+00> : vector<128x32xf32>
    %53 = tpu.matmul %52, %51, %cst_56 {dimension_numbers = #tpu.dot_dimension_numbers<[1], [0], [0], [1], [0, 0, 1, 1], [], []>} : vector<128x64xf32>, vector<64x32xf32>, vector<128x32xf32> -> vector<128x32xf32>
    %cst_57 = arith.constant 0.000000e+00 : f32
    %54 = vector.broadcast %cst_57 : f32 to vector<16x32xf32>
    %cst_58 = arith.constant 0.000000e+00 : f32
    %55 = vector.broadcast %cst_58 : f32 to vector<16x64xf32>
    %c0_59 = arith.constant 0 : index
    %c0_60 = arith.constant 0 : index
    %56 = vector.load %arg20[%c0_59, %c0_60] : memref<160x32xf32, #tpu.memory_space<vmem>>, vector<16x32xf32>
    tpu.vector_store %arg20[%c0_59, %c0_60], %54 {strides = array<i32>} : memref<160x32xf32, #tpu.memory_space<vmem>>, vector<16x32xf32>,
    %c144 = arith.constant 144 : index
    %c0_61 = arith.constant 0 : index
    %57 = vector.load %arg20[%c144, %c0_61] : memref<160x32xf32, #tpu.memory_space<vmem>>, vector<16x32xf32>
    tpu.vector_store %arg20[%c144, %c0_61], %54 {strides = array<i32>} : memref<160x32xf32, #tpu.memory_space<vmem>>, vector<16x32xf32>,
    %c16_62 = arith.constant 16 : index
    %c0_63 = arith.constant 0 : index
    %58 = vector.load %arg20[%c16_62, %c0_63] : memref<160x32xf32, #tpu.memory_space<vmem>>, vector<128x32xf32>
    tpu.vector_store %arg20[%c16_62, %c0_63], %53 {strides = array<i32>} : memref<160x32xf32, #tpu.memory_space<vmem>>, vector<128x32xf32>,
    %c0_64 = arith.constant 0 : index
    %c0_65 = arith.constant 0 : index
    %59 = vector.load %arg21[%c0_64, %c0_65] : memref<160x64xf32, #tpu.memory_space<vmem>>, vector<16x64xf32>
    tpu.vector_store %arg21[%c0_64, %c0_65], %55 {strides = array<i32>} : memref<160x64xf32, #tpu.memory_space<vmem>>, vector<16x64xf32>,
    %c144_66 = arith.constant 144 : index
    %c0_67 = arith.constant 0 : index
    %60 = vector.load %arg21[%c144_66, %c0_67] : memref<160x64xf32, #tpu.memory_space<vmem>>, vector<16x64xf32>
    tpu.vector_store %arg21[%c144_66, %c0_67], %55 {strides = array<i32>} : memref<160x64xf32, #tpu.memory_space<vmem>>, vector<16x64xf32>,
    %c16_68 = arith.constant 16 : index
    %c0_69 = arith.constant 0 : index
    %61 = vector.load %arg21[%c16_68, %c0_69] : memref<160x64xf32, #tpu.memory_space<vmem>>, vector<128x64xf32>
    tpu.vector_store %arg21[%c16_68, %c0_69], %18 {strides = array<i32>} : memref<160x64xf32, #tpu.memory_space<vmem>>, vector<128x64xf32>,
    %c0_70 = arith.constant 0 : index
    %c0_71 = arith.constant 0 : index
    %62 = vector.load %arg20[%c0_70, %c0_71] : memref<160x32xf32, #tpu.memory_space<vmem>>, vector<128x32xf32>
    %c0_72 = arith.constant 0 : index
    %c0_73 = arith.constant 0 : index
    %c0_74 = arith.constant 0 : index
    %63 = vector.load %arg11[%c0_72, %c0_73, %c0_74] : memref<3x32x32xf32, #tpu.memory_space<vmem>>, vector<1x32x32xf32>
    %64 = vector.shape_cast %63 : vector<1x32x32xf32> to vector<32x32xf32>
    %cst_75 = arith.constant dense<0.000000e+00> : vector<128x32xf32>
    %65 = tpu.matmul %62, %64, %cst_75 {dimension_numbers = #tpu.dot_dimension_numbers<[1], [0], [0], [1], [0, 0, 1, 1], [], []>} : vector<128x32xf32>, vector<32x32xf32>, vector<128x32xf32> -> vector<128x32xf32>
    %c0_76 = arith.constant 0 : index
    %c0_77 = arith.constant 0 : index
    %66 = vector.load %arg21[%c0_76, %c0_77] : memref<160x64xf32, #tpu.memory_space<vmem>>, vector<128x64xf32>
    %c0_78 = arith.constant 0 : index
    %c0_79 = arith.constant 0 : index
    %c0_80 = arith.constant 0 : index
    %67 = vector.load %arg12[%c0_78, %c0_79, %c0_80] : memref<3x64x32xf32, #tpu.memory_space<vmem>>, vector<1x64x32xf32>
    %68 = vector.shape_cast %67 : vector<1x64x32xf32> to vector<64x32xf32>
    %cst_81 = arith.constant dense<0.000000e+00> : vector<128x32xf32>
    %69 = tpu.matmul %66, %68, %cst_81 {dimension_numbers = #tpu.dot_dimension_numbers<[1], [0], [0], [1], [0, 0, 1, 1], [], []>} : vector<128x64xf32>, vector<64x32xf32>, vector<128x32xf32> -> vector<128x32xf32>
    %70 = arith.addf %65, %69 : vector<128x32xf32>
    %c16_82 = arith.constant 16 : index
    %c0_83 = arith.constant 0 : index
    %71 = vector.load %arg20[%c16_82, %c0_83] : memref<160x32xf32, #tpu.memory_space<vmem>>, vector<128x32xf32>
    %c1_84 = arith.constant 1 : index
    %c0_85 = arith.constant 0 : index
    %c0_86 = arith.constant 0 : index
    %72 = vector.load %arg11[%c1_84, %c0_85, %c0_86] : memref<3x32x32xf32, #tpu.memory_space<vmem>>, vector<1x32x32xf32>
    %73 = vector.shape_cast %72 : vector<1x32x32xf32> to vector<32x32xf32>
    %cst_87 = arith.constant dense<0.000000e+00> : vector<128x32xf32>
    %74 = tpu.matmul %71, %73, %cst_87 {dimension_numbers = #tpu.dot_dimension_numbers<[1], [0], [0], [1], [0, 0, 1, 1], [], []>} : vector<128x32xf32>, vector<32x32xf32>, vector<128x32xf32> -> vector<128x32xf32>
    %75 = arith.addf %70, %74 : vector<128x32xf32>
    %c16_88 = arith.constant 16 : index
    %c0_89 = arith.constant 0 : index
    %76 = vector.load %arg21[%c16_88, %c0_89] : memref<160x64xf32, #tpu.memory_space<vmem>>, vector<128x64xf32>
    %c1_90 = arith.constant 1 : index
    %c0_91 = arith.constant 0 : index
    %c0_92 = arith.constant 0 : index
    %77 = vector.load %arg12[%c1_90, %c0_91, %c0_92] : memref<3x64x32xf32, #tpu.memory_space<vmem>>, vector<1x64x32xf32>
    %78 = vector.shape_cast %77 : vector<1x64x32xf32> to vector<64x32xf32>
    %cst_93 = arith.constant dense<0.000000e+00> : vector<128x32xf32>
    %79 = tpu.matmul %76, %78, %cst_93 {dimension_numbers = #tpu.dot_dimension_numbers<[1], [0], [0], [1], [0, 0, 1, 1], [], []>} : vector<128x64xf32>, vector<64x32xf32>, vector<128x32xf32> -> vector<128x32xf32>
    %80 = arith.addf %75, %79 : vector<128x32xf32>
    %c32_94 = arith.constant 32 : index
    %c0_95 = arith.constant 0 : index
    %81 = vector.load %arg20[%c32_94, %c0_95] : memref<160x32xf32, #tpu.memory_space<vmem>>, vector<128x32xf32>
    %c2_96 = arith.constant 2 : index
    %c0_97 = arith.constant 0 : index
    %c0_98 = arith.constant 0 : index
    %82 = vector.load %arg11[%c2_96, %c0_97, %c0_98] : memref<3x32x32xf32, #tpu.memory_space<vmem>>, vector<1x32x32xf32>
    %83 = vector.shape_cast %82 : vector<1x32x32xf32> to vector<32x32xf32>
    %cst_99 = arith.constant dense<0.000000e+00> : vector<128x32xf32>
    %84 = tpu.matmul %81, %83, %cst_99 {dimension_numbers = #tpu.dot_dimension_numbers<[1], [0], [0], [1], [0, 0, 1, 1], [], []>} : vector<128x32xf32>, vector<32x32xf32>, vector<128x32xf32> -> vector<128x32xf32>
    %85 = arith.addf %80, %84 : vector<128x32xf32>
    %c32_100 = arith.constant 32 : index
    %c0_101 = arith.constant 0 : index
    %86 = vector.load %arg21[%c32_100, %c0_101] : memref<160x64xf32, #tpu.memory_space<vmem>>, vector<128x64xf32>
    %c2_102 = arith.constant 2 : index
    %c0_103 = arith.constant 0 : index
    %c0_104 = arith.constant 0 : index
    %87 = vector.load %arg12[%c2_102, %c0_103, %c0_104] : memref<3x64x32xf32, #tpu.memory_space<vmem>>, vector<1x64x32xf32>
    %88 = vector.shape_cast %87 : vector<1x64x32xf32> to vector<64x32xf32>
    %cst_105 = arith.constant dense<0.000000e+00> : vector<128x32xf32>
    %89 = tpu.matmul %86, %88, %cst_105 {dimension_numbers = #tpu.dot_dimension_numbers<[1], [0], [0], [1], [0, 0, 1, 1], [], []>} : vector<128x64xf32>, vector<64x32xf32>, vector<128x32xf32> -> vector<128x32xf32>
    %90 = arith.addf %85, %89 : vector<128x32xf32>
    %c0_106 = arith.constant 0 : index
    %c0_107 = arith.constant 0 : index
    %91 = vector.load %arg13[%c0_106, %c0_107] : memref<1x32xf32, #tpu.memory_space<vmem>>, vector<1x32xf32>
    %92 = vector.broadcast %91 : vector<1x32xf32> to vector<128x32xf32>
    %93 = arith.addf %90, %92 : vector<128x32xf32>
    %94 = vector.extract_strided_slice %93 {offsets = [0, 0], sizes = [16, 32], strides = [1, 1]} : vector<128x32xf32> to vector<16x32xf32>
    %c0_108 = arith.constant 0 : index
    %c0_109 = arith.constant 0 : index
    %c0_110 = arith.constant 0 : index
    %95 = vector.load %arg14[%c0_108, %c0_109, %c0_110] : memref<8x32x256xf32, #tpu.memory_space<vmem>>, vector<1x32x256xf32>
    %96 = vector.shape_cast %95 : vector<1x32x256xf32> to vector<32x256xf32>
    %cst_111 = arith.constant dense<0.000000e+00> : vector<16x256xf32>
    %97 = tpu.matmul %94, %96, %cst_111 {dimension_numbers = #tpu.dot_dimension_numbers<[1], [0], [0], [1], [0, 0, 1, 1], [], []>} : vector<16x32xf32>, vector<32x256xf32>, vector<16x256xf32> -> vector<16x256xf32>
    %98 = vector.extract_strided_slice %93 {offsets = [16, 0], sizes = [16, 32], strides = [1, 1]} : vector<128x32xf32> to vector<16x32xf32>
    %c1_112 = arith.constant 1 : index
    %c0_113 = arith.constant 0 : index
    %c0_114 = arith.constant 0 : index
    %99 = vector.load %arg14[%c1_112, %c0_113, %c0_114] : memref<8x32x256xf32, #tpu.memory_space<vmem>>, vector<1x32x256xf32>
    %100 = vector.shape_cast %99 : vector<1x32x256xf32> to vector<32x256xf32>
    %cst_115 = arith.constant dense<0.000000e+00> : vector<16x256xf32>
    %101 = tpu.matmul %98, %100, %cst_115 {dimension_numbers = #tpu.dot_dimension_numbers<[1], [0], [0], [1], [0, 0, 1, 1], [], []>} : vector<16x32xf32>, vector<32x256xf32>, vector<16x256xf32> -> vector<16x256xf32>
    %102 = vector.extract_strided_slice %93 {offsets = [32, 0], sizes = [16, 32], strides = [1, 1]} : vector<128x32xf32> to vector<16x32xf32>
    %c2_116 = arith.constant 2 : index
    %c0_117 = arith.constant 0 : index
    %c0_118 = arith.constant 0 : index
    %103 = vector.load %arg14[%c2_116, %c0_117, %c0_118] : memref<8x32x256xf32, #tpu.memory_space<vmem>>, vector<1x32x256xf32>
    %104 = vector.shape_cast %103 : vector<1x32x256xf32> to vector<32x256xf32>
    %cst_119 = arith.constant dense<0.000000e+00> : vector<16x256xf32>
    %105 = tpu.matmul %102, %104, %cst_119 {dimension_numbers = #tpu.dot_dimension_numbers<[1], [0], [0], [1], [0, 0, 1, 1], [], []>} : vector<16x32xf32>, vector<32x256xf32>, vector<16x256xf32> -> vector<16x256xf32>
    %106 = vector.extract_strided_slice %93 {offsets = [48, 0], sizes = [16, 32], strides = [1, 1]} : vector<128x32xf32> to vector<16x32xf32>
    %c3 = arith.constant 3 : index
    %c0_120 = arith.constant 0 : index
    %c0_121 = arith.constant 0 : index
    %107 = vector.load %arg14[%c3, %c0_120, %c0_121] : memref<8x32x256xf32, #tpu.memory_space<vmem>>, vector<1x32x256xf32>
    %108 = vector.shape_cast %107 : vector<1x32x256xf32> to vector<32x256xf32>
    %cst_122 = arith.constant dense<0.000000e+00> : vector<16x256xf32>
    %109 = tpu.matmul %106, %108, %cst_122 {dimension_numbers = #tpu.dot_dimension_numbers<[1], [0], [0], [1], [0, 0, 1, 1], [], []>} : vector<16x32xf32>, vector<32x256xf32>, vector<16x256xf32> -> vector<16x256xf32>
    %110 = vector.extract_strided_slice %93 {offsets = [64, 0], sizes = [16, 32], strides = [1, 1]} : vector<128x32xf32> to vector<16x32xf32>
    %c4 = arith.constant 4 : index
    %c0_123 = arith.constant 0 : index
    %c0_124 = arith.constant 0 : index
    %111 = vector.load %arg14[%c4, %c0_123, %c0_124] : memref<8x32x256xf32, #tpu.memory_space<vmem>>, vector<1x32x256xf32>
    %112 = vector.shape_cast %111 : vector<1x32x256xf32> to vector<32x256xf32>
    %cst_125 = arith.constant dense<0.000000e+00> : vector<16x256xf32>
    %113 = tpu.matmul %110, %112, %cst_125 {dimension_numbers = #tpu.dot_dimension_numbers<[1], [0], [0], [1], [0, 0, 1, 1], [], []>} : vector<16x32xf32>, vector<32x256xf32>, vector<16x256xf32> -> vector<16x256xf32>
    %114 = vector.extract_strided_slice %93 {offsets = [80, 0], sizes = [16, 32], strides = [1, 1]} : vector<128x32xf32> to vector<16x32xf32>
    %c5 = arith.constant 5 : index
    %c0_126 = arith.constant 0 : index
    %c0_127 = arith.constant 0 : index
    %115 = vector.load %arg14[%c5, %c0_126, %c0_127] : memref<8x32x256xf32, #tpu.memory_space<vmem>>, vector<1x32x256xf32>
    %116 = vector.shape_cast %115 : vector<1x32x256xf32> to vector<32x256xf32>
    %cst_128 = arith.constant dense<0.000000e+00> : vector<16x256xf32>
    %117 = tpu.matmul %114, %116, %cst_128 {dimension_numbers = #tpu.dot_dimension_numbers<[1], [0], [0], [1], [0, 0, 1, 1], [], []>} : vector<16x32xf32>, vector<32x256xf32>, vector<16x256xf32> -> vector<16x256xf32>
    %118 = vector.extract_strided_slice %93 {offsets = [96, 0], sizes = [16, 32], strides = [1, 1]} : vector<128x32xf32> to vector<16x32xf32>
    %c6 = arith.constant 6 : index
    %c0_129 = arith.constant 0 : index
    %c0_130 = arith.constant 0 : index
    %119 = vector.load %arg14[%c6, %c0_129, %c0_130] : memref<8x32x256xf32, #tpu.memory_space<vmem>>, vector<1x32x256xf32>
    %120 = vector.shape_cast %119 : vector<1x32x256xf32> to vector<32x256xf32>
    %cst_131 = arith.constant dense<0.000000e+00> : vector<16x256xf32>
    %121 = tpu.matmul %118, %120, %cst_131 {dimension_numbers = #tpu.dot_dimension_numbers<[1], [0], [0], [1], [0, 0, 1, 1], [], []>} : vector<16x32xf32>, vector<32x256xf32>, vector<16x256xf32> -> vector<16x256xf32>
    %122 = vector.extract_strided_slice %93 {offsets = [112, 0], sizes = [16, 32], strides = [1, 1]} : vector<128x32xf32> to vector<16x32xf32>
    %c7 = arith.constant 7 : index
    %c0_132 = arith.constant 0 : index
    %c0_133 = arith.constant 0 : index
    %123 = vector.load %arg14[%c7, %c0_132, %c0_133] : memref<8x32x256xf32, #tpu.memory_space<vmem>>, vector<1x32x256xf32>
    %124 = vector.shape_cast %123 : vector<1x32x256xf32> to vector<32x256xf32>
    %cst_134 = arith.constant dense<0.000000e+00> : vector<16x256xf32>
    %125 = tpu.matmul %122, %124, %cst_134 {dimension_numbers = #tpu.dot_dimension_numbers<[1], [0], [0], [1], [0, 0, 1, 1], [], []>} : vector<16x32xf32>, vector<32x256xf32>, vector<16x256xf32> -> vector<16x256xf32>
    %126 = arith.addf %97, %101 : vector<16x256xf32>
    %127 = arith.addf %105, %109 : vector<16x256xf32>
    %128 = arith.addf %113, %117 : vector<16x256xf32>
    %129 = arith.addf %121, %125 : vector<16x256xf32>
    %130 = arith.addf %126, %127 : vector<16x256xf32>
    %131 = arith.addf %128, %129 : vector<16x256xf32>
    %132 = arith.addf %130, %131 : vector<16x256xf32>
    %c0_135 = arith.constant 0 : index
    %c0_136 = arith.constant 0 : index
    %133 = vector.load %arg15[%c0_135, %c0_136] : memref<1x256xf32, #tpu.memory_space<vmem>>, vector<1x256xf32>
    %134 = vector.broadcast %133 : vector<1x256xf32> to vector<16x256xf32>
    %135 = arith.addf %132, %134 : vector<16x256xf32>
    %cst_137 = arith.constant 0.000000e+00 : f32
    %136 = vector.broadcast %cst_137 : f32 to vector<16x256xf32>
    %137 = arith.maximumf %135, %136 : vector<16x256xf32>
    %c0_138 = arith.constant 0 : index
    %c0_139 = arith.constant 0 : index
    %138 = vector.load %arg16[%c0_138, %c0_139] : memref<256x32xf32, #tpu.memory_space<vmem>>, vector<256x32xf32>
    %cst_140 = arith.constant dense<0.000000e+00> : vector<16x32xf32>
    %139 = tpu.matmul %137, %138, %cst_140 {dimension_numbers = #tpu.dot_dimension_numbers<[1], [0], [0], [1], [0, 0, 1, 1], [], []>} : vector<16x256xf32>, vector<256x32xf32>, vector<16x32xf32> -> vector<16x32xf32>
    %c0_141 = arith.constant 0 : index
    %c0_142 = arith.constant 0 : index
    %140 = vector.load %arg17[%c0_141, %c0_142] : memref<1x32xf32, #tpu.memory_space<vmem>>, vector<1x32xf32>
    %141 = vector.broadcast %140 : vector<1x32xf32> to vector<16x32xf32>
    %142 = arith.addf %139, %141 : vector<16x32xf32>
    %c0_143 = arith.constant 0 : index
    %c0_144 = arith.constant 0 : index
    %143 = vector.load %arg18[%c0_143, %c0_144] : memref<16x32xf32, #tpu.memory_space<vmem>>, vector<16x32xf32>
    tpu.vector_store %arg18[%c0_143, %c0_144], %142 {strides = array<i32>} : memref<16x32xf32, #tpu.memory_space<vmem>>, vector<16x32xf32>,
    return
  }
  func.func @transform_0(%arg0: i32) -> (i32, i32) {
    %c0_i32 = arith.constant 0 : i32
    %c0_i32_0 = arith.constant 0 : i32
    return %arg0, %c0_i32 : i32, i32
  }
  func.func @transform_1(%arg0: i32) -> (i32, i32, i32) {
    %c0_i32 = arith.constant 0 : i32
    %c0_i32_0 = arith.constant 0 : i32
    %c0_i32_1 = arith.constant 0 : i32
    %c0_i32_2 = arith.constant 0 : i32
    return %c0_i32, %c0_i32_0, %c0_i32_1 : i32, i32, i32
  }
  func.func @transform_2(%arg0: i32) -> (i32, i32) {
    %c0_i32 = arith.constant 0 : i32
    %c0_i32_0 = arith.constant 0 : i32
    %c0_i32_1 = arith.constant 0 : i32
    return %c0_i32, %c0_i32_0 : i32, i32
  }
  func.func @transform_3(%arg0: i32) -> (i32, i32) {
    %c0_i32 = arith.constant 0 : i32
    %c0_i32_0 = arith.constant 0 : i32
    %c0_i32_1 = arith.constant 0 : i32
    return %c0_i32, %c0_i32_0 : i32, i32
  }
  func.func @transform_4(%arg0: i32) -> (i32, i32) {
    %c0_i32 = arith.constant 0 : i32
    %c0_i32_0 = arith.constant 0 : i32
    %c0_i32_1 = arith.constant 0 : i32
    return %c0_i32, %c0_i32_0 : i32, i32
  }
  func.func @transform_5(%arg0: i32) -> (i32, i32) {
    %c0_i32 = arith.constant 0 : i32
    %c0_i32_0 = arith.constant 0 : i32
    %c0_i32_1 = arith.constant 0 : i32
    return %c0_i32, %c0_i32_0 : i32, i32
  }
  func.func @transform_6(%arg0: i32) -> (i32, i32) {
    %c0_i32 = arith.constant 0 : i32
    %c0_i32_0 = arith.constant 0 : i32
    %c0_i32_1 = arith.constant 0 : i32
    return %c0_i32, %c0_i32_0 : i32, i32
  }
  func.func @transform_7(%arg0: i32) -> (i32, i32, i32) {
    %c0_i32 = arith.constant 0 : i32
    %c0_i32_0 = arith.constant 0 : i32
    %c0_i32_1 = arith.constant 0 : i32
    %c0_i32_2 = arith.constant 0 : i32
    return %c0_i32, %c0_i32_0, %c0_i32_1 : i32, i32, i32
  }
  func.func @transform_8(%arg0: i32) -> (i32, i32) {
    %c0_i32 = arith.constant 0 : i32
    %c0_i32_0 = arith.constant 0 : i32
    %c0_i32_1 = arith.constant 0 : i32
    return %c0_i32, %c0_i32_0 : i32, i32
  }
  func.func @transform_9(%arg0: i32) -> (i32, i32) {
    %c0_i32 = arith.constant 0 : i32
    %c0_i32_0 = arith.constant 0 : i32
    %c0_i32_1 = arith.constant 0 : i32
    return %c0_i32, %c0_i32_0 : i32, i32
  }
  func.func @transform_10(%arg0: i32) -> (i32, i32, i32) {
    %c0_i32 = arith.constant 0 : i32
    %c0_i32_0 = arith.constant 0 : i32
    %c0_i32_1 = arith.constant 0 : i32
    %c0_i32_2 = arith.constant 0 : i32
    return %c0_i32, %c0_i32_0, %c0_i32_1 : i32, i32, i32
  }
  func.func @transform_11(%arg0: i32) -> (i32, i32, i32) {
    %c0_i32 = arith.constant 0 : i32
    %c0_i32_0 = arith.constant 0 : i32
    %c0_i32_1 = arith.constant 0 : i32
    %c0_i32_2 = arith.constant 0 : i32
    return %c0_i32, %c0_i32_0, %c0_i32_1 : i32, i32, i32
  }
  func.func @transform_12(%arg0: i32) -> (i32, i32) {
    %c0_i32 = arith.constant 0 : i32
    %c0_i32_0 = arith.constant 0 : i32
    %c0_i32_1 = arith.constant 0 : i32
    return %c0_i32, %c0_i32_0 : i32, i32
  }
  func.func @transform_13(%arg0: i32) -> (i32, i32, i32) {
    %c0_i32 = arith.constant 0 : i32
    %c0_i32_0 = arith.constant 0 : i32
    %c0_i32_1 = arith.constant 0 : i32
    %c0_i32_2 = arith.constant 0 : i32
    return %c0_i32, %c0_i32_0, %c0_i32_1 : i32, i32, i32
  }
  func.func @transform_14(%arg0: i32) -> (i32, i32) {
    %c0_i32 = arith.constant 0 : i32
    %c0_i32_0 = arith.constant 0 : i32
    %c0_i32_1 = arith.constant 0 : i32
    return %c0_i32, %c0_i32_0 : i32, i32
  }
  func.func @transform_15(%arg0: i32) -> (i32, i32) {
    %c0_i32 = arith.constant 0 : i32
    %c0_i32_0 = arith.constant 0 : i32
    %c0_i32_1 = arith.constant 0 : i32
    return %c0_i32, %c0_i32_0 : i32, i32
  }
  func.func @transform_16(%arg0: i32) -> (i32, i32) {
    %c0_i32 = arith.constant 0 : i32
    %c0_i32_0 = arith.constant 0 : i32
    %c0_i32_1 = arith.constant 0 : i32
    return %c0_i32, %c0_i32_0 : i32, i32
  }
  func.func @transform_17(%arg0: i32) -> (i32, i32) {
    %c0_i32 = arith.constant 0 : i32
    %c0_i32_0 = arith.constant 0 : i32
    return %arg0, %c0_i32 : i32, i32
  }
}

</mosaic_0001>

<llo_original>
// kernel: tile.18
$region0: #{tile.18}
  #allocation0 [shape = 's32[1]{0}', space=sflag, size = 0x4, scoped, tag = 'scoped memory for tile.18']
  %s0 = inlined_call_operand.vmem [shape: f32[8], index: 0, kind: input, shape index: {}]
  %s1 = inlined_call_operand.vmem [shape: f32[8,8], index: 1, kind: output, shape index: {}]
  // Predicated region
  $region2: #{tile.18} parent=0 // pred_check
    _
  $region3: #{tile.18} parent=0 // pred_check_branch
    %3 = sbr.rel (0) target = $region5
  $region4: #{tile.18} parent=0 // pred_region
    _
  $region5: #{tile.18} parent=0 // pred_fallthru
    _
  %v4 = vld [vmem:[%s0] ss:$0 sm:$0xff]
  %5 = vst [vmem:[%s1] sm:$0xff] %v4

// kernel: tile.19
$region0: #{tile.19}
  %s0 = inlined_call_operand.vmem [shape: f32[8,8], index: 0, kind: input, shape index: {}]
  %s1 = inlined_call_operand.vmem [shape: f32[1,64], index: 1, kind: output, shape index: {}]
  $region1: #{tile.19} parent=0
    #allocation0 [shape = 'u8[4096]{0}', space=vmem, size = 0x1000, scoped, tag = 'scoped mem for output reshape']
    %v2 = vld [vmem:[%s0] sm:$0x1]
    %vm3 = vcmask 64512
    %4 = vst.msk [vmem:[#allocation0] sm:$0x1] %vm3, %v2
    %s5 = scalar_lea.vmem %s0, 7
    %v6 = vld [vmem:[%s5] sm:$0x1]
    %7 = vrot.lane.b32.xlu0 %v6, 56
    %v8 = vpop.permute.xlu0 %7
    %vm9 = vcmask 523712
    %10 = vst.msk [vmem:[#allocation0] sm:$0x1] %vm9, %v8
    %s11 = scalar_lea.vmem %s0, 6
    %v12 = vld [vmem:[%s11] sm:$0x1]
    %13 = vrot.lane.b32.xlu0 %v12, 48
    %v14 = vpop.permute.xlu0 %13
    %vm15 = vcmask 458112
    %16 = vst.msk [vmem:[#allocation0] sm:$0x1] %vm15, %v14
    %s17 = scalar_lea.vmem %s0, 5
    %v18 = vld [vmem:[%s17] sm:$0x1]
    %19 = vrot.lane.b32.xlu0 %v18, 40
    %v20 = vpop.permute.xlu0 %19
    %vm21 = vcmask 392512
    %22 = vst.msk [vmem:[#allocation0] sm:$0x1] %vm21, %v20
    %s23 = scalar_lea.vmem %s0, 4
    %v24 = vld [vmem:[%s23] sm:$0x1]
    %25 = vrot.lane.b32.xlu0 %v24, 32
    %v26 = vpop.permute.xlu0 %25
    %vm27 = vcmask 326912
    %28 = vst.msk [vmem:[#allocation0] sm:$0x1] %vm27, %v26
    %s29 = scalar_lea.vmem %s0, 3
    %v30 = vld [vmem:[%s29] sm:$0x1]
    %31 = vrot.lane.b32.xlu0 %v30, 24
    %v32 = vpop.permute.xlu0 %31
    %vm33 = vcmask 261312
    %34 = vst.msk [vmem:[#allocation0] sm:$0x1] %vm33, %v32
    %s35 = scalar_lea.vmem %s0, 2
    %v36 = vld [vmem:[%s35] sm:$0x1]
    %37 = vrot.lane.b32.xlu0 %v36, 16
    %v38 = vpop.permute.xlu0 %37
    %vm39 = vcmask 195712
    %40 = vst.msk [vmem:[#allocation0] sm:$0x1] %vm39, %v38
    %s41 = scalar_lea.vmem %s0, 1
    %v42 = vld [vmem:[%s41] sm:$0x1]
    %43 = vrot.lane.b32.xlu0 %v42, 8
    %v44 = vpop.permute.xlu0 %43
    %vm45 = vcmask 130112
    %46 = vst.msk [vmem:[#allocation0] sm:$0x1] %vm45, %v44
    %s48 = ssub.s32 2, 1
    %v49 = vld [vmem:[#allocation0] sm:%s48]
    %s51 = ssub.s32 2, 1
    %52 = vst [vmem:[%s1] sm:%s51] %v49

// kernel: tile.23
$region0: #{tile.23}
  #allocation0 [shape = 's32[1]{0}', space=sflag, size = 0x4, scoped, tag = 'scoped memory for tile.23']
  %s0 = inlined_call_operand.vmem [shape: f32[8], index: 0, kind: input, shape index: {}]
  %s1 = inlined_call_operand.vmem [shape: f32[4,8], index: 1, kind: output, shape index: {}]
  // Predicated region
  $region2: #{tile.23} parent=0 // pred_check
    _
  $region3: #{tile.23} parent=0 // pred_check_branch
    %3 = sbr.rel (0) target = $region5
  $region4: #{tile.23} parent=0 // pred_region
    _
  $region5: #{tile.23} parent=0 // pred_fallthru
    _
  %v4 = vld [vmem:[%s0] ss:$0 sm:$0xff]
  %5 = vst [vmem:[%s1] sm:$0xf] %v4

// kernel: tile.24
$region0: #{tile.24}
  %s0 = inlined_call_operand.vmem [shape: f32[4,8], index: 0, kind: input, shape index: {}]
  %s1 = inlined_call_operand.vmem [shape: f32[1,32], index: 1, kind: output, shape index: {}]
  $region1: #{tile.24} parent=0
    #allocation0 [shape = 'u8[4096]{0}', space=vmem, size = 0x1000, scoped, tag = 'scoped mem for output reshape']
    #allocation1 [shape = 'u8[4096]{0}', space=vmem, size = 0x1000, scoped, tag = 'scoped mem for input reshape']
    %s3 = ssub.s32 16, 1
    %v4 = vld [vmem:[%s0] sm:%s3]
    %5 = vst [vmem:[#allocation1] sm:%s3] %v4
    %v6 = vld [vmem:[#allocation1] sm:$0x1]
    %vm7 = vcmask 64512
    %8 = vst.msk [vmem:[#allocation0] sm:$0x1] %vm7, %v6
    %s9 = scalar_lea.vmem [#allocation1], 3
    %v10 = vld [vmem:[%s9] sm:$0x1]
    %11 = vrot.lane.b32.xlu0 %v10, 24
    %v12 = vpop.permute.xlu0 %11
    %vm13 = vcmask 261312
    %14 = vst.msk [vmem:[#allocation0] sm:$0x1] %vm13, %v12
    %s15 = scalar_lea.vmem [#allocation1], 2
    %v16 = vld [vmem:[%s15] sm:$0x1]
    %17 = vrot.lane.b32.xlu0 %v16, 16
    %v18 = vpop.permute.xlu0 %17
    %vm19 = vcmask 195712
    %20 = vst.msk [vmem:[#allocation0] sm:$0x1] %vm19, %v18
    %s21 = scalar_lea.vmem [#allocation1], 1
    %v22 = vld [vmem:[%s21] sm:$0x1]
    %23 = vrot.lane.b32.xlu0 %v22, 8
    %v24 = vpop.permute.xlu0 %23
    %vm25 = vcmask 130112
    %26 = vst.msk [vmem:[#allocation0] sm:$0x1] %vm25, %v24
    %s28 = ssub.s32 2, 1
    %v29 = vld [vmem:[#allocation0] sm:%s28]
    %s31 = ssub.s32 2, 1
    %32 = vst [vmem:[%s1] sm:%s31] %v29

// kernel: tile.28
$region0: #{tile.28}
  #allocation0 [shape = 's32[1]{0}', space=sflag, size = 0x4, scoped, tag = 'scoped memory for tile.28']
  %s0 = inlined_call_operand.vmem [shape: f32[4], index: 0, kind: input, shape index: {}]
  %s1 = inlined_call_operand.vmem [shape: f32[8,4], index: 1, kind: output, shape index: {}]
  // Predicated region
  $region2: #{tile.28} parent=0 // pred_check
    _
  $region3: #{tile.28} parent=0 // pred_check_branch
    %3 = sbr.rel (0) target = $region5
  $region4: #{tile.28} parent=0 // pred_region
    _
  $region5: #{tile.28} parent=0 // pred_fallthru
    _
  %v4 = vld [vmem:[%s0] ss:$0 sm:$0xff]
  %5 = vst [vmem:[%s1] sm:$0xff] %v4

// kernel: tile.29
$region0: #{tile.29}
  %s0 = inlined_call_operand.vmem [shape: f32[8,4], index: 0, kind: input, shape index: {}]
  %s1 = inlined_call_operand.vmem [shape: f32[1,32], index: 1, kind: output, shape index: {}]
  $region1: #{tile.29} parent=0
    #allocation0 [shape = 'u8[4096]{0}', space=vmem, size = 0x1000, scoped, tag = 'scoped mem for output reshape']
    %v2 = vld [vmem:[%s0] sm:$0x1]
    %vm3 = vcmask 31744
    %4 = vst.msk [vmem:[#allocation0] sm:$0x1] %vm3, %v2
    %s5 = scalar_lea.vmem %s0, 7
    %v6 = vld [vmem:[%s5] sm:$0x1]
    %7 = vrot.lane.b32.xlu0 %v6, 28
    %v8 = vpop.permute.xlu0 %7
    %vm9 = vcmask 261344
    %10 = vst.msk [vmem:[#allocation0] sm:$0x1] %vm9, %v8
    %s11 = scalar_lea.vmem %s0, 6
    %v12 = vld [vmem:[%s11] sm:$0x1]
    %13 = vrot.lane.b32.xlu0 %v12, 24
    %v14 = vpop.permute.xlu0 %13
    %vm15 = vcmask 228544
    %16 = vst.msk [vmem:[#allocation0] sm:$0x1] %vm15, %v14
    %s17 = scalar_lea.vmem %s0, 5
    %v18 = vld [vmem:[%s17] sm:$0x1]
    %19 = vrot.lane.b32.xlu0 %v18, 20
    %v20 = vpop.permute.xlu0 %19
    %vm21 = vcmask 195744
    %22 = vst.msk [vmem:[#allocation0] sm:$0x1] %vm21, %v20
    %s23 = scalar_lea.vmem %s0, 4
    %v24 = vld [vmem:[%s23] sm:$0x1]
    %25 = vrot.lane.b32.xlu0 %v24, 16
    %v26 = vpop.permute.xlu0 %25
    %vm27 = vcmask 162944
    %28 = vst.msk [vmem:[#allocation0] sm:$0x1] %vm27, %v26
    %s29 = scalar_lea.vmem %s0, 3
    %v30 = vld [vmem:[%s29] sm:$0x1]
    %31 = vrot.lane.b32.xlu0 %v30, 12
    %v32 = vpop.permute.xlu0 %31
    %vm33 = vcmask 130144
    %34 = vst.msk [vmem:[#allocation0] sm:$0x1] %vm33, %v32
    %s35 = scalar_lea.vmem %s0, 2
    %v36 = vld [vmem:[%s35] sm:$0x1]
    %37 = vrot.lane.b32.xlu0 %v36, 8
    %v38 = vpop.permute.xlu0 %37
    %vm39 = vcmask 97344
    %40 = vst.msk [vmem:[#allocation0] sm:$0x1] %vm39, %v38
    %s41 = scalar_lea.vmem %s0, 1
    %v42 = vld [vmem:[%s41] sm:$0x1]
    %43 = vrot.lane.b32.xlu0 %v42, 4
    %v44 = vpop.permute.xlu0 %43
    %vm45 = vcmask 64544
    %46 = vst.msk [vmem:[#allocation0] sm:$0x1] %vm45, %v44
    %s48 = ssub.s32 2, 1
    %v49 = vld [vmem:[#allocation0] sm:%s48]
    %s51 = ssub.s32 2, 1
    %52 = vst [vmem:[%s1] sm:%s51] %v49

// kernel: unet_byol_forward.1
$region0: #{unet_byol_forward.1}
  #allocation0 [shape = 'u32[]', space=smem, size = 0x4, offset = 0x4, fixed_abs, tag = 'smem constant byte address 0x4 - core index']
  #allocation1 [shape = 'u32[72,128]{1,0:T(1,128)}', space=vmem, size = 0x9000, scoped, tag = 'internal scratch']
  #allocation2 [shape = 'f32[96,32]{1,0:T(8,128)}', space=vmem, size = 0xc000, scoped, tag = 'scratch operand']
  #allocation3 [shape = 'f32[160,32]{1,0:T(8,128)}', space=vmem, size = 0x14000, scoped, tag = 'scratch operand']
  #allocation4 [shape = 'f32[160,64]{1,0:T(8,128)}', space=vmem, size = 0x14000, scoped, tag = 'scratch operand']
  %s0 = inlined_call_operand.vmem [shape: f32[320,105], index: 0, kind: input, shape index: {}]
  %s1 = inlined_call_operand.vmem [shape: f32[3,105,64], index: 1, kind: input, shape index: {}]
  %s2 = inlined_call_operand.vmem [shape: f32[1,64], index: 2, kind: input, shape index: {}]
  %s3 = inlined_call_operand.vmem [shape: f32[64,128], index: 3, kind: input, shape index: {}]
  %s4 = inlined_call_operand.vmem [shape: f32[64,128], index: 4, kind: input, shape index: {}]
  %s5 = inlined_call_operand.vmem [shape: f32[64,32], index: 5, kind: input, shape index: {}]
  %s6 = inlined_call_operand.vmem [shape: f32[64,32], index: 6, kind: input, shape index: {}]
  %s7 = inlined_call_operand.vmem [shape: f32[3,32,32], index: 7, kind: input, shape index: {}]
  %s8 = inlined_call_operand.vmem [shape: f32[1,32], index: 8, kind: input, shape index: {}]
  %s9 = inlined_call_operand.vmem [shape: f32[128,64], index: 9, kind: input, shape index: {}]
  %s10 = inlined_call_operand.vmem [shape: f32[3,32,32], index: 10, kind: input, shape index: {}]
  %s11 = inlined_call_operand.vmem [shape: f32[3,64,32], index: 11, kind: input, shape index: {}]
  %s12 = inlined_call_operand.vmem [shape: f32[1,32], index: 12, kind: input, shape index: {}]
  %s13 = inlined_call_operand.vmem [shape: f32[8,32,256], index: 13, kind: input, shape index: {}]
  %s14 = inlined_call_operand.vmem [shape: f32[1,256], index: 14, kind: input, shape index: {}]
  %s15 = inlined_call_operand.vmem [shape: f32[256,32], index: 15, kind: input, shape index: {}]
  %s16 = inlined_call_operand.vmem [shape: f32[1,32], index: 16, kind: input, shape index: {}]
  %s17 = inlined_call_operand.hbm [shape: f32[32,32], index: 17, kind: output, shape index: {}]
  %s18 = sld [smem:[#allocation0]]
  $region101: #{unet_byol_forward.1} parent=0
    _
  %s20 = ssub.s32 1, %s18
  %s21 = scalar_select 0, %s20, %s18
  $region1: #{unet_byol_forward.1} parent=0
    #allocation5 [shape = 'u8[16384]{0}', space=vmem, size = 0x4000, scoped, tag = 'output window, operand 0']
    #allocation6 [shape = 's32[2]{0}', space=sflag, size = 0x8, scoped, tag = 'scoped memory for unet_byol_forward.1']
    %22 = vsyncpa [#allocation6], 0
    %s23 = scalar_lea.sflag [#allocation6], 1
    %24 = vsyncpa %s23, 0
    loop: start=0, step=1, limit=4
    $region2: #{unet_byol_forward.1} parent=1 // loop_pre_header
      _
    $region3: #{unet_byol_forward.1} parent=1 // loop_header
      %s26 = sphi 0, %s30
      %p27 = scmp.ge.s32.totalorder %s26, 4
      %s36 = sphi 0, %s38
      %s39 = sphi 0, %s36
      %s40 = sphi 0, %s39
      %s56 = sphi 0, %s40
      %s60 = sphi 0, %s60
      %s62 = sphi 0, %s60
      %s63 = sphi 0, %s62
      %s77 = sphi 0, %s63
      %s81 = sphi 0, %s81
      %s83 = sphi 0, %s81
      %s84 = sphi 0, %s83
      %s98 = sphi 0, %s84
      %s102 = sphi 0, %s102
      %s104 = sphi 0, %s102
      %s105 = sphi 0, %s104
      %s119 = sphi 0, %s105
      %s123 = sphi 0, %s123
      %s125 = sphi 0, %s123
      %s126 = sphi 0, %s125
      %s140 = sphi 0, %s126
      %s144 = sphi 0, %s144
      %s146 = sphi 0, %s144
      %s147 = sphi 0, %s146
      %s161 = sphi 0, %s147
      %s165 = sphi 0, %s165
      %s167 = sphi 0, %s165
      %s168 = sphi 0, %s167
      %s182 = sphi 0, %s168
      %s186 = sphi 0, %s186
      %s188 = sphi 0, %s186
      %s189 = sphi 0, %s188
      %s203 = sphi 0, %s189
      %s207 = sphi 0, %s207
      %s209 = sphi 0, %s207
      %s210 = sphi 0, %s209
      %s224 = sphi 0, %s210
      %s228 = sphi 0, %s228
      %s230 = sphi 0, %s228
      %s231 = sphi 0, %s230
      %s245 = sphi 0, %s231
      %s249 = sphi 0, %s249
      %s251 = sphi 0, %s249
      %s252 = sphi 0, %s251
      %s266 = sphi 0, %s252
      %s270 = sphi 0, %s270
      %s272 = sphi 0, %s270
      %s273 = sphi 0, %s272
      %s287 = sphi 0, %s273
      %s291 = sphi 0, %s291
      %s293 = sphi 0, %s291
      %s294 = sphi 0, %s293
      %s308 = sphi 0, %s294
      %s312 = sphi 0, %s312
      %s314 = sphi 0, %s312
      %s315 = sphi 0, %s314
      %s329 = sphi 0, %s315
      %s333 = sphi 0, %s333
      %s335 = sphi 0, %s333
      %s336 = sphi 0, %s335
      %s350 = sphi 0, %s336
      %s354 = sphi 0, %s354
      %s356 = sphi 0, %s354
      %s357 = sphi 0, %s356
      %s371 = sphi 0, %s357
      %s375 = sphi 0, %s375
      %s377 = sphi 0, %s375
      %s378 = sphi 0, %s377
      %s392 = sphi 0, %s378
      %s398 = sphi 0, %s400
      %s401 = sphi 0, %s398
      %s402 = sphi 0, %s401
      %s418 = sphi 0, %s402
    $region4: #{unet_byol_forward.1} parent=1 // loop_header_branch
      %29 = sbr.rel (%p27) target = $region8
    $region5: #{unet_byol_forward.1} parent=1 // loop_body
      %s31 = ssub.s32 %s26, 1
      %s32 = ssub.s32 %s26, 2
      %s33 = sadd.s32 %s26, 1
      %s34 = ssub.s32 %s26, %s33
      %p35 = scmp.eq.s32.totalorder %s34, 0
      %s37 = sadd.s32 %s36, 1
      %s38 = scalar_select %p35, %s36, %s37
      %p41 = pneg %p35
      %p42 = scmp.eq.s32.totalorder %s26, 1
      %p43 = por %p41, %p42
      %p44 = scmp.ne.s32.totalorder %s36, %s39
      %p45 = scmp.eq.s32.totalorder %s26, 0
      %p46 = por %p44, %p45
      %p47 = scmp.ne.s32.totalorder %s36, %s39
      %p48 = scmp.eq.s32.totalorder %s31, 1
      %p49 = por %p47, %p48
      %p50 = scmp.ne.s32.totalorder %s39, %s40
      %p51 = scmp.eq.s32.totalorder %s31, 0
      %p52 = por %p50, %p51
      %p53 = scmp.ne.s32.totalorder %s39, %s40
      %p54 = scmp.eq.s32.totalorder %s32, 1
      %p55 = por %p53, %p54
      %p57 = scmp.ne.s32.totalorder %s40, %s56
      %p58 = scmp.eq.s32.totalorder %s32, 0
      %p59 = por %p57, %p58
      %s61 = sadd.s32 %s60, 1
      %p64 = scmp.eq.s32.totalorder %s26, 1
      %p65 = scmp.ne.s32.totalorder %s60, %s62
      %p66 = scmp.eq.s32.totalorder %s26, 0
      %p67 = por %p65, %p66
      %p68 = scmp.ne.s32.totalorder %s60, %s62
      %p69 = scmp.eq.s32.totalorder %s31, 1
      %p70 = por %p68, %p69
      %p71 = scmp.ne.s32.totalorder %s62, %s63
      %p72 = scmp.eq.s32.totalorder %s31, 0
      %p73 = por %p71, %p72
      %p74 = scmp.ne.s32.totalorder %s62, %s63
      %p75 = scmp.eq.s32.totalorder %s32, 1
      %p76 = por %p74, %p75
      %p78 = scmp.ne.s32.totalorder %s63, %s77
      %p79 = scmp.eq.s32.totalorder %s32, 0
      %p80 = por %p78, %p79
      %s82 = sadd.s32 %s81, 1
      %p85 = scmp.eq.s32.totalorder %s26, 1
      %p86 = scmp.ne.s32.totalorder %s81, %s83
      %p87 = scmp.eq.s32.totalorder %s26, 0
      %p88 = por %p86, %p87
      %p89 = scmp.ne.s32.totalorder %s81, %s83
      %p90 = scmp.eq.s32.totalorder %s31, 1
      %p91 = por %p89, %p90
      %p92 = scmp.ne.s32.totalorder %s83, %s84
      %p93 = scmp.eq.s32.totalorder %s31, 0
      %p94 = por %p92, %p93
      %p95 = scmp.ne.s32.totalorder %s83, %s84
      %p96 = scmp.eq.s32.totalorder %s32, 1
      %p97 = por %p95, %p96
      %p99 = scmp.ne.s32.totalorder %s84, %s98
      %p100 = scmp.eq.s32.totalorder %s32, 0
      %p101 = por %p99, %p100
      %s103 = sadd.s32 %s102, 1
      %p106 = scmp.eq.s32.totalorder %s26, 1
      %p107 = scmp.ne.s32.totalorder %s102, %s104
      %p108 = scmp.eq.s32.totalorder %s26, 0
      %p109 = por %p107, %p108
      %p110 = scmp.ne.s32.totalorder %s102, %s104
      %p111 = scmp.eq.s32.totalorder %s31, 1
      %p112 = por %p110, %p111
      %p113 = scmp.ne.s32.totalorder %s104, %s105
      %p114 = scmp.eq.s32.totalorder %s31, 0
      %p115 = por %p113, %p114
      %p116 = scmp.ne.s32.totalorder %s104, %s105
      %p117 = scmp.eq.s32.totalorder %s32, 1
      %p118 = por %p116, %p117
      %p120 = scmp.ne.s32.totalorder %s105, %s119
      %p121 = scmp.eq.s32.totalorder %s32, 0
      %p122 = por %p120, %p121
      %s124 = sadd.s32 %s123, 1
      %p127 = scmp.eq.s32.totalorder %s26, 1
      %p128 = scmp.ne.s32.totalorder %s123, %s125
      %p129 = scmp.eq.s32.totalorder %s26, 0
      %p130 = por %p128, %p129
      %p131 = scmp.ne.s32.totalorder %s123, %s125
      %p132 = scmp.eq.s32.totalorder %s31, 1
      %p133 = por %p131, %p132
      %p134 = scmp.ne.s32.totalorder %s125, %s126
      %p135 = scmp.eq.s32.totalorder %s31, 0
      %p136 = por %p134, %p135
      %p137 = scmp.ne.s32.totalorder %s125, %s126
      %p138 = scmp.eq.s32.totalorder %s32, 1
      %p139 = por %p137, %p138
      %p141 = scmp.ne.s32.totalorder %s126, %s140
      %p142 = scmp.eq.s32.totalorder %s32, 0
      %p143 = por %p141, %p142
      %s145 = sadd.s32 %s144, 1
      %p148 = scmp.eq.s32.totalorder %s26, 1
      %p149 = scmp.ne.s32.totalorder %s144, %s146
      %p150 = scmp.eq.s32.totalorder %s26, 0
      %p151 = por %p149, %p150
      %p152 = scmp.ne.s32.totalorder %s144, %s146
      %p153 = scmp.eq.s32.totalorder %s31, 1
      %p154 = por %p152, %p153
      %p155 = scmp.ne.s32.totalorder %s146, %s147
      %p156 = scmp.eq.s32.totalorder %s31, 0
      %p157 = por %p155, %p156
      %p158 = scmp.ne.s32.totalorder %s146, %s147
      %p159 = scmp.eq.s32.totalorder %s32, 1
      %p160 = por %p158, %p159
      %p162 = scmp.ne.s32.totalorder %s147, %s161
      %p163 = scmp.eq.s32.totalorder %s32, 0
      %p164 = por %p162, %p163
      %s166 = sadd.s32 %s165, 1
      %p169 = scmp.eq.s32.totalorder %s26, 1
      %p170 = scmp.ne.s32.totalorder %s165, %s167
      %p171 = scmp.eq.s32.totalorder %s26, 0
      %p172 = por %p170, %p171
      %p173 = scmp.ne.s32.totalorder %s165, %s167
      %p174 = scmp.eq.s32.totalorder %s31, 1
      %p175 = por %p173, %p174
      %p176 = scmp.ne.s32.totalorder %s167, %s168
      %p177 = scmp.eq.s32.totalorder %s31, 0
      %p178 = por %p176, %p177
      %p179 = scmp.ne.s32.totalorder %s167, %s168
      %p180 = scmp.eq.s32.totalorder %s32, 1
      %p181 = por %p179, %p180
      %p183 = scmp.ne.s32.totalorder %s168, %s182
      %p184 = scmp.eq.s32.totalorder %s32, 0
      %p185 = por %p183, %p184
      %s187 = sadd.s32 %s186, 1
      %p190 = scmp.eq.s32.totalorder %s26, 1
      %p191 = scmp.ne.s32.totalorder %s186, %s188
      %p192 = scmp.eq.s32.totalorder %s26, 0
      %p193 = por %p191, %p192
      %p194 = scmp.ne.s32.totalorder %s186, %s188
      %p195 = scmp.eq.s32.totalorder %s31, 1
      %p196 = por %p194, %p195
      %p197 = scmp.ne.s32.totalorder %s188, %s189
      %p198 = scmp.eq.s32.totalorder %s31, 0
      %p199 = por %p197, %p198
      %p200 = scmp.ne.s32.totalorder %s188, %s189
      %p201 = scmp.eq.s32.totalorder %s32, 1
      %p202 = por %p200, %p201
      %p204 = scmp.ne.s32.totalorder %s189, %s203
      %p205 = scmp.eq.s32.totalorder %s32, 0
      %p206 = por %p204, %p205
      %s208 = sadd.s32 %s207, 1
      %p211 = scmp.eq.s32.totalorder %s26, 1
      %p212 = scmp.ne.s32.totalorder %s207, %s209
      %p213 = scmp.eq.s32.totalorder %s26, 0
      %p214 = por %p212, %p213
      %p215 = scmp.ne.s32.totalorder %s207, %s209
      %p216 = scmp.eq.s32.totalorder %s31, 1
      %p217 = por %p215, %p216
      %p218 = scmp.ne.s32.totalorder %s209, %s210
      %p219 = scmp.eq.s32.totalorder %s31, 0
      %p220 = por %p218, %p219
      %p221 = scmp.ne.s32.totalorder %s209, %s210
      %p222 = scmp.eq.s32.totalorder %s32, 1
      %p223 = por %p221, %p222
      %p225 = scmp.ne.s32.totalorder %s210, %s224
      %p226 = scmp.eq.s32.totalorder %s32, 0
      %p227 = por %p225, %p226
      %s229 = sadd.s32 %s228, 1
      %p232 = scmp.eq.s32.totalorder %s26, 1
      %p233 = scmp.ne.s32.totalorder %s228, %s230
      %p234 = scmp.eq.s32.totalorder %s26, 0
      %p235 = por %p233, %p234
      %p236 = scmp.ne.s32.totalorder %s228, %s230
      %p237 = scmp.eq.s32.totalorder %s31, 1
      %p238 = por %p236, %p237
      %p239 = scmp.ne.s32.totalorder %s230, %s231
      %p240 = scmp.eq.s32.totalorder %s31, 0
      %p241 = por %p239, %p240
      %p242 = scmp.ne.s32.totalorder %s230, %s231
      %p243 = scmp.eq.s32.totalorder %s32, 1
      %p244 = por %p242, %p243
      %p246 = scmp.ne.s32.totalorder %s231, %s245
      %p247 = scmp.eq.s32.totalorder %s32, 0
      %p248 = por %p246, %p247
      %s250 = sadd.s32 %s249, 1
      %p253 = scmp.eq.s32.totalorder %s26, 1
      %p254 = scmp.ne.s32.totalorder %s249, %s251
      %p255 = scmp.eq.s32.totalorder %s26, 0
      %p256 = por %p254, %p255
      %p257 = scmp.ne.s32.totalorder %s249, %s251
      %p258 = scmp.eq.s32.totalorder %s31, 1
      %p259 = por %p257, %p258
      %p260 = scmp.ne.s32.totalorder %s251, %s252
      %p261 = scmp.eq.s32.totalorder %s31, 0
      %p262 = por %p260, %p261
      %p263 = scmp.ne.s32.totalorder %s251, %s252
      %p264 = scmp.eq.s32.totalorder %s32, 1
      %p265 = por %p263, %p264
      %p267 = scmp.ne.s32.totalorder %s252, %s266
      %p268 = scmp.eq.s32.totalorder %s32, 0
      %p269 = por %p267, %p268
      %s271 = sadd.s32 %s270, 1
      %p274 = scmp.eq.s32.totalorder %s26, 1
      %p275 = scmp.ne.s32.totalorder %s270, %s272
      %p276 = scmp.eq.s32.totalorder %s26, 0
      %p277 = por %p275, %p276
      %p278 = scmp.ne.s32.totalorder %s270, %s272
      %p279 = scmp.eq.s32.totalorder %s31, 1
      %p280 = por %p278, %p279
      %p281 = scmp.ne.s32.totalorder %s272, %s273
      %p282 = scmp.eq.s32.totalorder %s31, 0
      %p283 = por %p281, %p282
      %p284 = scmp.ne.s32.totalorder %s272, %s273
      %p285 = scmp.eq.s32.totalorder %s32, 1
      %p286 = por %p284, %p285
      %p288 = scmp.ne.s32.totalorder %s273, %s287
      %p289 = scmp.eq.s32.totalorder %s32, 0
      %p290 = por %p288, %p289
      %s292 = sadd.s32 %s291, 1
      %p295 = scmp.eq.s32.totalorder %s26, 1
      %p296 = scmp.ne.s32.totalorder %s291, %s293
      %p297 = scmp.eq.s32.totalorder %s26, 0
      %p298 = por %p296, %p297
      %p299 = scmp.ne.s32.totalorder %s291, %s293
      %p300 = scmp.eq.s32.totalorder %s31, 1
      %p301 = por %p299, %p300
      %p302 = scmp.ne.s32.totalorder %s293, %s294
      %p303 = scmp.eq.s32.totalorder %s31, 0
      %p304 = por %p302, %p303
      %p305 = scmp.ne.s32.totalorder %s293, %s294
      %p306 = scmp.eq.s32.totalorder %s32, 1
      %p307 = por %p305, %p306
      %p309 = scmp.ne.s32.totalorder %s294, %s308
      %p310 = scmp.eq.s32.totalorder %s32, 0
      %p311 = por %p309, %p310
      %s313 = sadd.s32 %s312, 1
      %p316 = scmp.eq.s32.totalorder %s26, 1
      %p317 = scmp.ne.s32.totalorder %s312, %s314
      %p318 = scmp.eq.s32.totalorder %s26, 0
      %p319 = por %p317, %p318
      %p320 = scmp.ne.s32.totalorder %s312, %s314
      %p321 = scmp.eq.s32.totalorder %s31, 1
      %p322 = por %p320, %p321
      %p323 = scmp.ne.s32.totalorder %s314, %s315
      %p324 = scmp.eq.s32.totalorder %s31, 0
      %p325 = por %p323, %p324
      %p326 = scmp.ne.s32.totalorder %s314, %s315
      %p327 = scmp.eq.s32.totalorder %s32, 1
      %p328 = por %p326, %p327
      %p330 = scmp.ne.s32.totalorder %s315, %s329
      %p331 = scmp.eq.s32.totalorder %s32, 0
      %p332 = por %p330, %p331
      %s334 = sadd.s32 %s333, 1
      %p337 = scmp.eq.s32.totalorder %s26, 1
      %p338 = scmp.ne.s32.totalorder %s333, %s335
      %p339 = scmp.eq.s32.totalorder %s26, 0
      %p340 = por %p338, %p339
      %p341 = scmp.ne.s32.totalorder %s333, %s335
      %p342 = scmp.eq.s32.totalorder %s31, 1
      %p343 = por %p341, %p342
      %p344 = scmp.ne.s32.totalorder %s335, %s336
      %p345 = scmp.eq.s32.totalorder %s31, 0
      %p346 = por %p344, %p345
      %p347 = scmp.ne.s32.totalorder %s335, %s336
      %p348 = scmp.eq.s32.totalorder %s32, 1
      %p349 = por %p347, %p348
      %p351 = scmp.ne.s32.totalorder %s336, %s350
      %p352 = scmp.eq.s32.totalorder %s32, 0
      %p353 = por %p351, %p352
      %s355 = sadd.s32 %s354, 1
      %p358 = scmp.eq.s32.totalorder %s26, 1
      %p359 = scmp.ne.s32.totalorder %s354, %s356
      %p360 = scmp.eq.s32.totalorder %s26, 0
      %p361 = por %p359, %p360
      %p362 = scmp.ne.s32.totalorder %s354, %s356
      %p363 = scmp.eq.s32.totalorder %s31, 1
      %p364 = por %p362, %p363
      %p365 = scmp.ne.s32.totalorder %s356, %s357
      %p366 = scmp.eq.s32.totalorder %s31, 0
      %p367 = por %p365, %p366
      %p368 = scmp.ne.s32.totalorder %s356, %s357
      %p369 = scmp.eq.s32.totalorder %s32, 1
      %p370 = por %p368, %p369
      %p372 = scmp.ne.s32.totalorder %s357, %s371
      %p373 = scmp.eq.s32.totalorder %s32, 0
      %p374 = por %p372, %p373
      %s376 = sadd.s32 %s375, 1
      %p379 = scmp.eq.s32.totalorder %s26, 1
      %p380 = scmp.ne.s32.totalorder %s375, %s377
      %p381 = scmp.eq.s32.totalorder %s26, 0
      %p382 = por %p380, %p381
      %p383 = scmp.ne.s32.totalorder %s375, %s377
      %p384 = scmp.eq.s32.totalorder %s31, 1
      %p385 = por %p383, %p384
      %p386 = scmp.ne.s32.totalorder %s377, %s378
      %p387 = scmp.eq.s32.totalorder %s31, 0
      %p388 = por %p386, %p387
      %p389 = scmp.ne.s32.totalorder %s377, %s378
      %p390 = scmp.eq.s32.totalorder %s32, 1
      %p391 = por %p389, %p390
      %p393 = scmp.ne.s32.totalorder %s378, %s392
      %p394 = scmp.eq.s32.totalorder %s32, 0
      %p395 = por %p393, %p394
      %s396 = ssub.s32 %s26, %s33
      %p397 = scmp.eq.s32.totalorder %s396, 0
      %s399 = sadd.s32 %s398, 1
      %s400 = scalar_select %p397, %s398, %s399
      %p403 = pneg %p397
      %p404 = scmp.eq.s32.totalorder %s26, 1
      %p405 = por %p403, %p404
      %p406 = scmp.ne.s32.totalorder %s398, %s401
      %p407 = scmp.eq.s32.totalorder %s26, 0
      %p408 = por %p406, %p407
      %p409 = scmp.ne.s32.totalorder %s398, %s401
      %p410 = scmp.eq.s32.totalorder %s31, 1
      %p411 = por %p409, %p410
      %p412 = scmp.ne.s32.totalorder %s401, %s402
      %p413 = scmp.eq.s32.totalorder %s31, 0
      %p414 = por %p412, %p413
      %p415 = scmp.ne.s32.totalorder %s401, %s402
      %p416 = scmp.eq.s32.totalorder %s32, 1
      %p417 = por %p415, %p416
      %p419 = scmp.ne.s32.totalorder %s402, %s418
      %p420 = scmp.eq.s32.totalorder %s32, 0
      %p421 = por %p419, %p420
      %p422 = scmp.le.s32.totalorder 1, %s26
      %p423 = scmp.lt.s32.totalorder %s26, 3
      %p424 = pnand %p422, %p423
      %p425 = pneg %p424
      // Predicated region
      $region9: #{unet_byol_forward.1} parent=5 // pred_check
        _
      $region10: #{unet_byol_forward.1} parent=5 // pred_check_branch
        %427 = sbr.rel (%p424) target = $region12
      $region11: #{unet_byol_forward.1} parent=5 // pred_region
        %s428 = ssub.s32 %s26, 1
        // Predicated region
        $region13: #{unet_byol_forward.1} parent=11 // pred_check
          %p429 = pneg %p73
        $region14: #{unet_byol_forward.1} parent=11 // pred_check_branch
          %431 = sbr.rel (%p429) target = $region16
        $region15: #{unet_byol_forward.1} parent=11 // pred_region
          _
        $region16: #{unet_byol_forward.1} parent=11 // pred_fallthru
          _
        // Predicated region
        $region17: #{unet_byol_forward.1} parent=11 // pred_check
          %p432 = pneg %p94
        $region18: #{unet_byol_forward.1} parent=11 // pred_check_branch
          %434 = sbr.rel (%p432) target = $region20
        $region19: #{unet_byol_forward.1} parent=11 // pred_region
          _
        $region20: #{unet_byol_forward.1} parent=11 // pred_fallthru
          _
        // Predicated region
        $region21: #{unet_byol_forward.1} parent=11 // pred_check
          %p435 = pneg %p115
        $region22: #{unet_byol_forward.1} parent=11 // pred_check_branch
          %437 = sbr.rel (%p435) target = $region24
        $region23: #{unet_byol_forward.1} parent=11 // pred_region
          _
        $region24: #{unet_byol_forward.1} parent=11 // pred_fallthru
          _
        // Predicated region
        $region25: #{unet_byol_forward.1} parent=11 // pred_check
          %p438 = pneg %p136
        $region26: #{unet_byol_forward.1} parent=11 // pred_check_branch
          %440 = sbr.rel (%p438) target = $region28
        $region27: #{unet_byol_forward.1} parent=11 // pred_region
          _
        $region28: #{unet_byol_forward.1} parent=11 // pred_fallthru
          _
        // Predicated region
        $region29: #{unet_byol_forward.1} parent=11 // pred_check
          %p441 = pneg %p157
        $region30: #{unet_byol_forward.1} parent=11 // pred_check_branch
          %443 = sbr.rel (%p441) target = $region32
        $region31: #{unet_byol_forward.1} parent=11 // pred_region
          _
        $region32: #{unet_byol_forward.1} parent=11 // pred_fallthru
          _
        // Predicated region
        $region33: #{unet_byol_forward.1} parent=11 // pred_check
          %p444 = pneg %p178
        $region34: #{unet_byol_forward.1} parent=11 // pred_check_branch
          %446 = sbr.rel (%p444) target = $region36
        $region35: #{unet_byol_forward.1} parent=11 // pred_region
          _
        $region36: #{unet_byol_forward.1} parent=11 // pred_fallthru
          _
        // Predicated region
        $region37: #{unet_byol_forward.1} parent=11 // pred_check
          %p447 = pneg %p199
        $region38: #{unet_byol_forward.1} parent=11 // pred_check_branch
          %449 = sbr.rel (%p447) target = $region40
        $region39: #{unet_byol_forward.1} parent=11 // pred_region
          _
        $region40: #{unet_byol_forward.1} parent=11 // pred_fallthru
          _
        // Predicated region
        $region41: #{unet_byol_forward.1} parent=11 // pred_check
          %p450 = pneg %p220
        $region42: #{unet_byol_forward.1} parent=11 // pred_check_branch
          %452 = sbr.rel (%p450) target = $region44
        $region43: #{unet_byol_forward.1} parent=11 // pred_region
          _
        $region44: #{unet_byol_forward.1} parent=11 // pred_fallthru
          _
        // Predicated region
        $region45: #{unet_byol_forward.1} parent=11 // pred_check
          %p453 = pneg %p241
        $region46: #{unet_byol_forward.1} parent=11 // pred_check_branch
          %455 = sbr.rel (%p453) target = $region48
        $region47: #{unet_byol_forward.1} parent=11 // pred_region
          _
        $region48: #{unet_byol_forward.1} parent=11 // pred_fallthru
          _
        // Predicated region
        $region49: #{unet_byol_forward.1} parent=11 // pred_check
          %p456 = pneg %p262
        $region50: #{unet_byol_forward.1} parent=11 // pred_check_branch
          %458 = sbr.rel (%p456) target = $region52
        $region51: #{unet_byol_forward.1} parent=11 // pred_region
          _
        $region52: #{unet_byol_forward.1} parent=11 // pred_fallthru
          _
        // Predicated region
        $region53: #{unet_byol_forward.1} parent=11 // pred_check
          %p459 = pneg %p283
        $region54: #{unet_byol_forward.1} parent=11 // pred_check_branch
          %461 = sbr.rel (%p459) target = $region56
        $region55: #{unet_byol_forward.1} parent=11 // pred_region
          _
        $region56: #{unet_byol_forward.1} parent=11 // pred_fallthru
          _
        // Predicated region
        $region57: #{unet_byol_forward.1} parent=11 // pred_check
          %p462 = pneg %p304
        $region58: #{unet_byol_forward.1} parent=11 // pred_check_branch
          %464 = sbr.rel (%p462) target = $region60
        $region59: #{unet_byol_forward.1} parent=11 // pred_region
          _
        $region60: #{unet_byol_forward.1} parent=11 // pred_fallthru
          _
        // Predicated region
        $region61: #{unet_byol_forward.1} parent=11 // pred_check
          %p465 = pneg %p325
        $region62: #{unet_byol_forward.1} parent=11 // pred_check_branch
          %467 = sbr.rel (%p465) target = $region64
        $region63: #{unet_byol_forward.1} parent=11 // pred_region
          _
        $region64: #{unet_byol_forward.1} parent=11 // pred_fallthru
          _
        // Predicated region
        $region65: #{unet_byol_forward.1} parent=11 // pred_check
          %p468 = pneg %p346
        $region66: #{unet_byol_forward.1} parent=11 // pred_check_branch
          %470 = sbr.rel (%p468) target = $region68
        $region67: #{unet_byol_forward.1} parent=11 // pred_region
          _
        $region68: #{unet_byol_forward.1} parent=11 // pred_fallthru
          _
        // Predicated region
        $region69: #{unet_byol_forward.1} parent=11 // pred_check
          %p471 = pneg %p367
        $region70: #{unet_byol_forward.1} parent=11 // pred_check_branch
          %473 = sbr.rel (%p471) target = $region72
        $region71: #{unet_byol_forward.1} parent=11 // pred_region
          _
        $region72: #{unet_byol_forward.1} parent=11 // pred_fallthru
          _
        // Predicated region
        $region73: #{unet_byol_forward.1} parent=11 // pred_check
          %p474 = pneg %p388
        $region74: #{unet_byol_forward.1} parent=11 // pred_check_branch
          %476 = sbr.rel (%p474) target = $region76
        $region75: #{unet_byol_forward.1} parent=11 // pred_region
          _
        $region76: #{unet_byol_forward.1} parent=11 // pred_fallthru
          _
      $region12: #{unet_byol_forward.1} parent=5 // pred_fallthru
        _
      %p477 = scmp.lt.s32.totalorder %s26, 2
      // Predicated region
      $region77: #{unet_byol_forward.1} parent=5 // pred_check
        %p478 = pneg %p477
      $region78: #{unet_byol_forward.1} parent=5 // pred_check_branch
        %480 = sbr.rel (%p478) target = $region80
      $region79: #{unet_byol_forward.1} parent=5 // pred_region
        // Predicated region
        $region81: #{unet_byol_forward.1} parent=79 // pred_check
          %p481 = pneg %p46
        $region82: #{unet_byol_forward.1} parent=79 // pred_check_branch
          %483 = sbr.rel (%p481) target = $region84
        $region83: #{unet_byol_forward.1} parent=79 // pred_region
          %s484 = smul.u32 20, %s26
          %p485 = scmp.lt.s32.totalorder %s484, 39
          %s486 = scalar_select %p485, %s484, 39
          %s487 = smul.addr %s486, 8
          %s488 = scalar_lea.vmem %s0, %s487
          %s489 = smul.u32 20, %s26
        $region84: #{unet_byol_forward.1} parent=79 // pred_fallthru
          _
      $region80: #{unet_byol_forward.1} parent=5 // pred_fallthru
        _
      %p490 = scmp.le.s32.totalorder 1, %s26
      %p491 = scmp.lt.s32.totalorder %s26, 3
      %p492 = pnand %p490, %p491
      %p493 = pneg %p492
      // Predicated region
      $region85: #{unet_byol_forward.1} parent=5 // pred_check
        _
      $region86: #{unet_byol_forward.1} parent=5 // pred_check_branch
        %495 = sbr.rel (%p492) target = $region88
      $region87: #{unet_byol_forward.1} parent=5 // pred_region
        %s496 = ssub.s32 %s26, 1
        %s497 = smul.u32 20, %s31
        %p498 = scmp.lt.s32.totalorder %s497, 39
        %s499 = scalar_select %p498, %s497, 39
        %s500 = smul.addr %s499, 8
        %s501 = scalar_lea.vmem %s0, %s500
        %p502 = pneg %p52
        %p503 = pneg %p49
        %p504 = pneg %p73
        %p505 = pneg %p70
        %p506 = pneg %p94
        %p507 = pneg %p91
        %p508 = pneg %p115
        %p509 = pneg %p112
        %p510 = pneg %p136
        %p511 = pneg %p133
        %p512 = pneg %p157
        %p513 = pneg %p154
        %p514 = pneg %p178
        %p515 = pneg %p175
        %p516 = pneg %p199
        %p517 = pneg %p196
        %p518 = pneg %p220
        %p519 = pneg %p217
        %p520 = pneg %p241
        %p521 = pneg %p238
        %p522 = pneg %p262
        %p523 = pneg %p259
        %p524 = pneg %p283
        %p525 = pneg %p280
        %p526 = pneg %p304
        %p527 = pneg %p301
        %p528 = pneg %p325
        %p529 = pneg %p322
        %p530 = pneg %p346
        %p531 = pneg %p343
        %p532 = pneg %p367
        %p533 = pneg %p364
        %p534 = pneg %p388
        %p535 = pneg %p385
        %p536 = pneg %p414
        %p537 = pneg %p411
        %s538 = sand.u32 %s401, 1
        %s539 = scalar_lea.sflag [#allocation6], %s538
        %s540 = sand.u32 %s401, 1
        %s541 = smul.addr %s540, 16
        %s542 = scalar_lea.vmem [#allocation5], %s541
        %s543 = smul.u32 20, %s31
        %p544 = scmp.lt.s32.totalorder %s543, 39
        %s545 = scalar_select %p544, %s543, 39
        %s546 = smul.addr %s545, 8
        %s547 = scalar_lea.vmem %s0, %s546
        %s548 = smul.u32 20, %s31
        %s549 = smul.u32 2, %s31
        %v550 = vld [vmem:[%s547] sm:$0xff]
        %v551 = vld [vmem:[%s547 + $0x8] sm:$0xff]
        %v552 = vld [vmem:[%s547 + $0x10] sm:$0xff]
        %v553 = vld [vmem:[%s547 + $0x18] sm:$0xff]
        %v554 = vld [vmem:[%s547 + $0x20] sm:$0xff]
        %v555 = vld [vmem:[%s547 + $0x28] sm:$0xff]
        %v556 = vld [vmem:[%s547 + $0x30] sm:$0xff]
        %v557 = vld [vmem:[%s547 + $0x38] sm:$0xff]
        %v558 = vld [vmem:[%s547 + $0x40] sm:$0xff]
        %v559 = vld [vmem:[%s547 + $0x48] sm:$0xff]
        %v560 = vld [vmem:[%s547 + $0x50] sm:$0xff]
        %v561 = vld [vmem:[%s547 + $0x58] sm:$0xff]
        %v562 = vld [vmem:[%s547 + $0x60] sm:$0xff]
        %v563 = vld [vmem:[%s547 + $0x68] sm:$0xff]
        %v564 = vld [vmem:[%s547 + $0x70] sm:$0xff]
        %v565 = vld [vmem:[%s547 + $0x78] sm:$0xff]
        %v566 = vld [vmem:[%s1] sm:$0xff]
        %v567 = vld [vmem:[%s1 + $0x8] sm:$0xff]
        %v568 = vld [vmem:[%s1 + $0x10] sm:$0xff]
        %v569 = vld [vmem:[%s1 + $0x18] sm:$0xff]
        %v570 = vld [vmem:[%s1 + $0x20] sm:$0xff]
        %v571 = vld [vmem:[%s1 + $0x28] sm:$0xff]
        %v572 = vld [vmem:[%s1 + $0x30] sm:$0xff]
        %v573 = vld [vmem:[%s1 + $0x38] sm:$0xff]
        %v574 = vld [vmem:[%s1 + $0x40] sm:$0xff]
        %v575 = vld [vmem:[%s1 + $0x48] sm:$0xff]
        %v576 = vld [vmem:[%s1 + $0x50] sm:$0xff]
        %v577 = vld [vmem:[%s1 + $0x58] sm:$0xff]
        %v578 = vld [vmem:[%s1 + $0x60] sm:$0xff]
        %v579 = vld [vmem:[%s1 + $0x68] sm:$0x1]
        %v580 = vld [vmem:[%s547 + $0x80] sm:$0xff]
        %v581 = vld [vmem:[%s547 + $0x88] sm:$0xff]
        %s582 = scalar_lea.vmem %s1, 112
        %v583 = vld [vmem:[%s582] sm:$0xff]
        %v584 = vld [vmem:[%s582 + $0x8] sm:$0xff]
        %v585 = vld [vmem:[%s582 + $0x10] sm:$0xff]
        %v586 = vld [vmem:[%s582 + $0x18] sm:$0xff]
        %v587 = vld [vmem:[%s582 + $0x20] sm:$0xff]
        %v588 = vld [vmem:[%s582 + $0x28] sm:$0xff]
        %v589 = vld [vmem:[%s582 + $0x30] sm:$0xff]
        %v590 = vld [vmem:[%s582 + $0x38] sm:$0xff]
        %v591 = vld [vmem:[%s582 + $0x40] sm:$0xff]
        %v592 = vld [vmem:[%s582 + $0x48] sm:$0xff]
        %v593 = vld [vmem:[%s582 + $0x50] sm:$0xff]
        %v594 = vld [vmem:[%s582 + $0x58] sm:$0xff]
        %v595 = vld [vmem:[%s582 + $0x60] sm:$0xff]
        %v596 = vld [vmem:[%s582 + $0x68] sm:$0x1]
        %vm597 = vcmask 859136
        %v599 = vsel %vm597, %v552, 0
        %v602 = vsel %vm597, %v553, 0
        %v605 = vsel %vm597, %v554, 0
        %v608 = vsel %vm597, %v555, 0
        %v611 = vsel %vm597, %v556, 0
        %v614 = vsel %vm597, %v557, 0
        %v617 = vsel %vm597, %v558, 0
        %v620 = vsel %vm597, %v559, 0
        %v623 = vsel %vm597, %v560, 0
        %v626 = vsel %vm597, %v561, 0
        %v629 = vsel %vm597, %v562, 0
        %v632 = vsel %vm597, %v563, 0
        %v635 = vsel %vm597, %v564, 0
        %v638 = vsel %vm597, %v565, 0
        %v641 = vsel %vm597, %v580, 0
        %v644 = vsel %vm597, %v581, 0
        %vm646 = vcmask 1040384
        %v648 = vsel %vm646, %v596, 0
        %650 = vmatpush.msra.mxu0 0.0
        %651 = vmatpush.msra.mxu0 0.0
        %652 = vmatpush.msra.mxu0 %v648
        %653 = vmatpush.msra.mxu0 %v595
        %654 = vmatpush.msra.mxu0 %v594
        %655 = vmatpush.msra.mxu0 %v593
        %656 = vmatpush.msra.mxu0 %v592
        %657 = vmatpush.msra.mxu0 %v591
        %658 = vmatpush.msra.mxu0 %v590
        %659 = vmatpush.msra.mxu0 %v589
        %660 = vmatpush.msra.mxu0 %v588
        %661 = vmatpush.msra.mxu0 %v587
        %662 = vmatpush.msra.mxu0 %v586
        %663 = vmatpush.msra.mxu0 %v585
        %664 = vmatpush.msra.mxu0 %v584
        %665 = vmatpush.msra.mxu0 %v583
        %666 = vmatmul.f32.gmra.mxu0 %v599
        %v667 = vpop.f32.mrf.mxu0
        %v668 = vadd.f32 0.0, %v667
        %669 = vmatmul.f32.gmra.mxu0 %v602
        %v670 = vpop.f32.mrf.mxu0
        %v671 = vadd.f32 0.0, %v670
        %672 = vmatmul.f32.gmra.mxu0 %v605
        %v673 = vpop.f32.mrf.mxu0
        %v674 = vadd.f32 0.0, %v673
        %675 = vmatmul.f32.gmra.mxu0 %v608
        %v676 = vpop.f32.mrf.mxu0
        %v677 = vadd.f32 0.0, %v676
        %678 = vmatmul.f32.gmra.mxu0 %v611
        %v679 = vpop.f32.mrf.mxu0
        %v680 = vadd.f32 0.0, %v679
        %681 = vmatmul.f32.gmra.mxu0 %v614
        %v682 = vpop.f32.mrf.mxu0
        %v683 = vadd.f32 0.0, %v682
        %684 = vmatmul.f32.gmra.mxu0 %v617
        %v685 = vpop.f32.mrf.mxu0
        %v686 = vadd.f32 0.0, %v685
        %687 = vmatmul.f32.gmra.mxu0 %v620
        %v688 = vpop.f32.mrf.mxu0
        %v689 = vadd.f32 0.0, %v688
        %690 = vmatmul.f32.gmra.mxu0 %v623
        %v691 = vpop.f32.mrf.mxu0
        %v692 = vadd.f32 0.0, %v691
        %693 = vmatmul.f32.gmra.mxu0 %v626
        %v694 = vpop.f32.mrf.mxu0
        %v695 = vadd.f32 0.0, %v694
        %696 = vmatmul.f32.gmra.mxu0 %v629
        %v697 = vpop.f32.mrf.mxu0
        %v698 = vadd.f32 0.0, %v697
        %699 = vmatmul.f32.gmra.mxu0 %v632
        %v700 = vpop.f32.mrf.mxu0
        %v701 = vadd.f32 0.0, %v700
        %702 = vmatmul.f32.gmra.mxu0 %v635
        %v703 = vpop.f32.mrf.mxu0
        %v704 = vadd.f32 0.0, %v703
        %705 = vmatmul.f32.gmra.mxu0 %v638
        %v706 = vpop.f32.mrf.mxu0
        %v707 = vadd.f32 0.0, %v706
        %708 = vmatmul.f32.gmra.mxu0 %v641
        %v709 = vpop.f32.mrf.mxu0
        %v710 = vadd.f32 0.0, %v709
        %711 = vmatmul.f32.gmra.mxu0 %v644
        %v712 = vpop.f32.mrf.mxu0
        %v713 = vadd.f32 0.0, %v712
        %714 = vdwg.mxu0
        %v716 = vsel %vm597, %v550, 0
        %v719 = vsel %vm597, %v551, 0
        %v722 = vsel %vm646, %v579, 0
        %724 = vmatpush.msra.mxu0 0.0
        %725 = vmatpush.msra.mxu0 0.0
        %726 = vmatpush.msra.mxu0 %v722
        %727 = vmatpush.msra.mxu0 %v578
        %728 = vmatpush.msra.mxu0 %v577
        %729 = vmatpush.msra.mxu0 %v576
        %730 = vmatpush.msra.mxu0 %v575
        %731 = vmatpush.msra.mxu0 %v574
        %732 = vmatpush.msra.mxu0 %v573
        %733 = vmatpush.msra.mxu0 %v572
        %734 = vmatpush.msra.mxu0 %v571
        %735 = vmatpush.msra.mxu0 %v570
        %736 = vmatpush.msra.mxu0 %v569
        %737 = vmatpush.msra.mxu0 %v568
        %738 = vmatpush.msra.mxu0 %v567
        %739 = vmatpush.msra.mxu0 %v566
        %740 = vmatmul.f32.gmra.mxu0 %v716
        %v741 = vpop.f32.mrf.mxu0
        %v742 = vadd.f32 %v668, %v741
        %743 = vmatmul.f32.gmra.mxu0 %v719
        %v744 = vpop.f32.mrf.mxu0
        %v745 = vadd.f32 %v671, %v744
        %746 = vmatmul.f32.gmra.mxu0 %v599
        %v747 = vpop.f32.mrf.mxu0
        %v748 = vadd.f32 %v674, %v747
        %749 = vmatmul.f32.gmra.mxu0 %v602
        %v750 = vpop.f32.mrf.mxu0
        %v751 = vadd.f32 %v677, %v750
        %752 = vmatmul.f32.gmra.mxu0 %v605
        %v753 = vpop.f32.mrf.mxu0
        %v754 = vadd.f32 %v680, %v753
        %755 = vmatmul.f32.gmra.mxu0 %v608
        %v756 = vpop.f32.mrf.mxu0
        %v757 = vadd.f32 %v683, %v756
        %758 = vmatmul.f32.gmra.mxu0 %v611
        %v759 = vpop.f32.mrf.mxu0
        %v760 = vadd.f32 %v686, %v759
        %761 = vmatmul.f32.gmra.mxu0 %v614
        %v762 = vpop.f32.mrf.mxu0
        %v763 = vadd.f32 %v689, %v762
        %764 = vmatmul.f32.gmra.mxu0 %v617
        %v765 = vpop.f32.mrf.mxu0
        %v766 = vadd.f32 %v692, %v765
        %767 = vmatmul.f32.gmra.mxu0 %v620
        %v768 = vpop.f32.mrf.mxu0
        %v769 = vadd.f32 %v695, %v768
        %770 = vmatmul.f32.gmra.mxu0 %v623
        %v771 = vpop.f32.mrf.mxu0
        %v772 = vadd.f32 %v698, %v771
        %773 = vmatmul.f32.gmra.mxu0 %v626
        %v774 = vpop.f32.mrf.mxu0
        %v775 = vadd.f32 %v701, %v774
        %776 = vmatmul.f32.gmra.mxu0 %v629
        %v777 = vpop.f32.mrf.mxu0
        %v778 = vadd.f32 %v704, %v777
        %779 = vmatmul.f32.gmra.mxu0 %v632
        %v780 = vpop.f32.mrf.mxu0
        %v781 = vadd.f32 %v707, %v780
        %782 = vmatmul.f32.gmra.mxu0 %v635
        %v783 = vpop.f32.mrf.mxu0
        %v784 = vadd.f32 %v710, %v783
        %785 = vmatmul.f32.gmra.mxu0 %v638
        %v786 = vpop.f32.mrf.mxu0
        %v787 = vadd.f32 %v713, %v786
        %788 = vdwg.mxu0
        %v789 = vld [vmem:[%s547 + $0x20] sm:$0xff]
        %v790 = vld [vmem:[%s547 + $0x28] sm:$0xff]
        %v791 = vld [vmem:[%s547 + $0x30] sm:$0xff]
        %v792 = vld [vmem:[%s547 + $0x38] sm:$0xff]
        %v793 = vld [vmem:[%s547 + $0x40] sm:$0xff]
        %v794 = vld [vmem:[%s547 + $0x48] sm:$0xff]
        %v795 = vld [vmem:[%s547 + $0x50] sm:$0xff]
        %v796 = vld [vmem:[%s547 + $0x58] sm:$0xff]
        %v797 = vld [vmem:[%s547 + $0x60] sm:$0xff]
        %v798 = vld [vmem:[%s547 + $0x68] sm:$0xff]
        %v799 = vld [vmem:[%s547 + $0x70] sm:$0xff]
        %v800 = vld [vmem:[%s547 + $0x78] sm:$0xff]
        %v801 = vld [vmem:[%s547 + $0x80] sm:$0xff]
        %v802 = vld [vmem:[%s547 + $0x88] sm:$0xff]
        %v803 = vld [vmem:[%s547 + $0x90] sm:$0xff]
        %v804 = vld [vmem:[%s547 + $0x98] sm:$0xff]
        %s805 = scalar_lea.vmem %s1, 224
        %v806 = vld [vmem:[%s805] sm:$0xff]
        %v807 = vld [vmem:[%s805 + $0x8] sm:$0xff]
        %v808 = vld [vmem:[%s805 + $0x10] sm:$0xff]
        %v809 = vld [vmem:[%s805 + $0x18] sm:$0xff]
        %v810 = vld [vmem:[%s805 + $0x20] sm:$0xff]
        %v811 = vld [vmem:[%s805 + $0x28] sm:$0xff]
        %v812 = vld [vmem:[%s805 + $0x30] sm:$0xff]
        %v813 = vld [vmem:[%s805 + $0x38] sm:$0xff]
        %v814 = vld [vmem:[%s805 + $0x40] sm:$0xff]
        %v815 = vld [vmem:[%s805 + $0x48] sm:$0xff]
        %v816 = vld [vmem:[%s805 + $0x50] sm:$0xff]
        %v817 = vld [vmem:[%s805 + $0x58] sm:$0xff]
        %v818 = vld [vmem:[%s805 + $0x60] sm:$0xff]
        %v819 = vld [vmem:[%s805 + $0x68] sm:$0x1]
        %v821 = vsel %vm597, %v789, 0
        %v824 = vsel %vm597, %v790, 0
        %v827 = vsel %vm597, %v791, 0
        %v830 = vsel %vm597, %v792, 0
        %v833 = vsel %vm597, %v793, 0
        %v836 = vsel %vm597, %v794, 0
        %v839 = vsel %vm597, %v795, 0
        %v842 = vsel %vm597, %v796, 0
        %v845 = vsel %vm597, %v797, 0
        %v848 = vsel %vm597, %v798, 0
        %v851 = vsel %vm597, %v799, 0
        %v854 = vsel %vm597, %v800, 0
        %v857 = vsel %vm597, %v801, 0
        %v860 = vsel %vm597, %v802, 0
        %v863 = vsel %vm597, %v803, 0
        %v866 = vsel %vm597, %v804, 0
        %v869 = vsel %vm646, %v819, 0
        %871 = vmatpush.msra.mxu0 0.0
        %872 = vmatpush.msra.mxu0 0.0
        %873 = vmatpush.msra.mxu0 %v869
        %874 = vmatpush.msra.mxu0 %v818
        %875 = vmatpush.msra.mxu0 %v817
        %876 = vmatpush.msra.mxu0 %v816
        %877 = vmatpush.msra.mxu0 %v815
        %878 = vmatpush.msra.mxu0 %v814
        %879 = vmatpush.msra.mxu0 %v813
        %880 = vmatpush.msra.mxu0 %v812
        %881 = vmatpush.msra.mxu0 %v811
        %882 = vmatpush.msra.mxu0 %v810
        %883 = vmatpush.msra.mxu0 %v809
        %884 = vmatpush.msra.mxu0 %v808
        %885 = vmatpush.msra.mxu0 %v807
        %886 = vmatpush.msra.mxu0 %v806
        %887 = vmatmul.f32.gmra.mxu0 %v821
        %v888 = vpop.f32.mrf.mxu0
        %v889 = vadd.f32 0.0, %v888
        %890 = vmatmul.f32.gmra.mxu0 %v824
        %v891 = vpop.f32.mrf.mxu0
        %v892 = vadd.f32 0.0, %v891
        %893 = vmatmul.f32.gmra.mxu0 %v827
        %v894 = vpop.f32.mrf.mxu0
        %v895 = vadd.f32 0.0, %v894
        %896 = vmatmul.f32.gmra.mxu0 %v830
        %v897 = vpop.f32.mrf.mxu0
        %v898 = vadd.f32 0.0, %v897
        %899 = vmatmul.f32.gmra.mxu0 %v833
        %v900 = vpop.f32.mrf.mxu0
        %v901 = vadd.f32 0.0, %v900
        %902 = vmatmul.f32.gmra.mxu0 %v836
        %v903 = vpop.f32.mrf.mxu0
        %v904 = vadd.f32 0.0, %v903
        %905 = vmatmul.f32.gmra.mxu0 %v839
        %v906 = vpop.f32.mrf.mxu0
        %v907 = vadd.f32 0.0, %v906
        %908 = vmatmul.f32.gmra.mxu0 %v842
        %v909 = vpop.f32.mrf.mxu0
        %v910 = vadd.f32 0.0, %v909
        %911 = vmatmul.f32.gmra.mxu0 %v845
        %v912 = vpop.f32.mrf.mxu0
        %v913 = vadd.f32 0.0, %v912
        %914 = vmatmul.f32.gmra.mxu0 %v848
        %v915 = vpop.f32.mrf.mxu0
        %v916 = vadd.f32 0.0, %v915
        %917 = vmatmul.f32.gmra.mxu0 %v851
        %v918 = vpop.f32.mrf.mxu0
        %v919 = vadd.f32 0.0, %v918
        %920 = vmatmul.f32.gmra.mxu0 %v854
        %v921 = vpop.f32.mrf.mxu0
        %v922 = vadd.f32 0.0, %v921
        %923 = vmatmul.f32.gmra.mxu0 %v857
        %v924 = vpop.f32.mrf.mxu0
        %v925 = vadd.f32 0.0, %v924
        %926 = vmatmul.f32.gmra.mxu0 %v860
        %v927 = vpop.f32.mrf.mxu0
        %v928 = vadd.f32 0.0, %v927
        %929 = vmatmul.f32.gmra.mxu0 %v863
        %v930 = vpop.f32.mrf.mxu0
        %v931 = vadd.f32 0.0, %v930
        %932 = vmatmul.f32.gmra.mxu0 %v866
        %v933 = vpop.f32.mrf.mxu0
        %v934 = vadd.f32 0.0, %v933
        %935 = vdwg.mxu0
        %v936 = vadd.f32 %v742, %v889
        %v937 = vadd.f32 %v745, %v892
        %v938 = vadd.f32 %v748, %v895
        %v939 = vadd.f32 %v751, %v898
        %v940 = vadd.f32 %v754, %v901
        %v941 = vadd.f32 %v757, %v904
        %v942 = vadd.f32 %v760, %v907
        %v943 = vadd.f32 %v763, %v910
        %v944 = vadd.f32 %v766, %v913
        %v945 = vadd.f32 %v769, %v916
        %v946 = vadd.f32 %v772, %v919
        %v947 = vadd.f32 %v775, %v922
        %v948 = vadd.f32 %v778, %v925
        %v949 = vadd.f32 %v781, %v928
        %v950 = vadd.f32 %v784, %v931
        %v951 = vadd.f32 %v787, %v934
        %v952 = vld [vmem:[%s2] sm:$0x1]
        %v954 = vperm.slane %v952, 0
        %v956 = vadd.f32 %v936, %v954
        %v957 = vadd.f32 %v937, %v954
        %v958 = vadd.f32 %v938, %v954
        %v959 = vadd.f32 %v939, %v954
        %v960 = vadd.f32 %v940, %v954
        %v961 = vadd.f32 %v941, %v954
        %v962 = vadd.f32 %v942, %v954
        %v963 = vadd.f32 %v943, %v954
        %v964 = vadd.f32 %v944, %v954
        %v965 = vadd.f32 %v945, %v954
        %v966 = vadd.f32 %v946, %v954
        %v967 = vadd.f32 %v947, %v954
        %v968 = vadd.f32 %v948, %v954
        %v969 = vadd.f32 %v949, %v954
        %v970 = vadd.f32 %v950, %v954
        %v971 = vadd.f32 %v951, %v954
        %v972 = vmax.f32 %v956, 0.0
        %v973 = vmax.f32 %v957, 0.0
        %v974 = vmax.f32 %v958, 0.0
        %v975 = vmax.f32 %v959, 0.0
        %v976 = vmax.f32 %v960, 0.0
        %v977 = vmax.f32 %v961, 0.0
        %v978 = vmax.f32 %v962, 0.0
        %v979 = vmax.f32 %v963, 0.0
        %v980 = vmax.f32 %v964, 0.0
        %v981 = vmax.f32 %v965, 0.0
        %v982 = vmax.f32 %v966, 0.0
        %v983 = vmax.f32 %v967, 0.0
        %v984 = vmax.f32 %v968, 0.0
        %v985 = vmax.f32 %v969, 0.0
        %v986 = vmax.f32 %v970, 0.0
        %v987 = vmax.f32 %v971, 0.0
        %v988 = vld [vmem:[%s3] sm:$0xff]
        %v989 = vld [vmem:[%s3 + $0x8] sm:$0xff]
        %v990 = vld [vmem:[%s3 + $0x10] sm:$0xff]
        %v991 = vld [vmem:[%s3 + $0x18] sm:$0xff]
        %v992 = vld [vmem:[%s3 + $0x20] sm:$0xff]
        %v993 = vld [vmem:[%s3 + $0x28] sm:$0xff]
        %v994 = vld [vmem:[%s3 + $0x30] sm:$0xff]
        %v995 = vld [vmem:[%s3 + $0x38] sm:$0xff]
        %996 = vmatpush.msra.mxu0 %v987
        %997 = vmatpush.msra.mxu0 %v986
        %998 = vmatpush.msra.mxu0 %v985
        %999 = vmatpush.msra.mxu0 %v984
        %1000 = vmatpush.msra.mxu0 %v983
        %1001 = vmatpush.msra.mxu0 %v982
        %1002 = vmatpush.msra.mxu0 %v981
        %1003 = vmatpush.msra.mxu0 %v980
        %1004 = vmatpush.msra.mxu0 %v979
        %1005 = vmatpush.msra.mxu0 %v978
        %1006 = vmatpush.msra.mxu0 %v977
        %1007 = vmatpush.msra.mxu0 %v976
        %1008 = vmatpush.msra.mxu0 %v975
        %1009 = vmatpush.msra.mxu0 %v974
        %1010 = vmatpush.msra.mxu0 %v973
        %1011 = vmatpush.msra.mxu0 %v972
        %1012 = vmatmul.f32.gmra.mxu0 %v988
        %v1013 = vpop.f32.mrf.mxu0
        %v1014 = vadd.f32 0.0, %v1013
        %1015 = vmatmul.f32.gmra.mxu0 %v989
        %v1016 = vpop.f32.mrf.mxu0
        %v1017 = vadd.f32 0.0, %v1016
        %1018 = vmatmul.f32.gmra.mxu0 %v990
        %v1019 = vpop.f32.mrf.mxu0
        %v1020 = vadd.f32 0.0, %v1019
        %1021 = vmatmul.f32.gmra.mxu0 %v991
        %v1022 = vpop.f32.mrf.mxu0
        %v1023 = vadd.f32 0.0, %v1022
        %1024 = vmatmul.f32.gmra.mxu0 %v992
        %v1025 = vpop.f32.mrf.mxu0
        %v1026 = vadd.f32 0.0, %v1025
        %1027 = vmatmul.f32.gmra.mxu0 %v993
        %v1028 = vpop.f32.mrf.mxu0
        %v1029 = vadd.f32 0.0, %v1028
        %1030 = vmatmul.f32.gmra.mxu0 %v994
        %v1031 = vpop.f32.mrf.mxu0
        %v1032 = vadd.f32 0.0, %v1031
        %1033 = vmatmul.f32.gmra.mxu0 %v995
        %v1034 = vpop.f32.mrf.mxu0
        %v1035 = vadd.f32 0.0, %v1034
        %1036 = vdwg.mxu0
        %v1037 = vld [vmem:[%s4] sm:$0xff]
        %v1038 = vld [vmem:[%s4 + $0x8] sm:$0xff]
        %v1039 = vld [vmem:[%s4 + $0x10] sm:$0xff]
        %v1040 = vld [vmem:[%s4 + $0x18] sm:$0xff]
        %v1041 = vld [vmem:[%s4 + $0x20] sm:$0xff]
        %v1042 = vld [vmem:[%s4 + $0x28] sm:$0xff]
        %v1043 = vld [vmem:[%s4 + $0x30] sm:$0xff]
        %v1044 = vld [vmem:[%s4 + $0x38] sm:$0xff]
        %1045 = vmatpush.msra.mxu0 %v987
        %1046 = vmatpush.msra.mxu0 %v986
        %1047 = vmatpush.msra.mxu0 %v985
        %1048 = vmatpush.msra.mxu0 %v984
        %1049 = vmatpush.msra.mxu0 %v983
        %1050 = vmatpush.msra.mxu0 %v982
        %1051 = vmatpush.msra.mxu0 %v981
        %1052 = vmatpush.msra.mxu0 %v980
        %1053 = vmatpush.msra.mxu0 %v979
        %1054 = vmatpush.msra.mxu0 %v978
        %1055 = vmatpush.msra.mxu0 %v977
        %1056 = vmatpush.msra.mxu0 %v976
        %1057 = vmatpush.msra.mxu0 %v975
        %1058 = vmatpush.msra.mxu0 %v974
        %1059 = vmatpush.msra.mxu0 %v973
        %1060 = vmatpush.msra.mxu0 %v972
        %1061 = vmatmul.f32.gmra.mxu0 %v1037
        %v1062 = vpop.f32.mrf.mxu0
        %v1063 = vadd.f32 0.0, %v1062
        %1064 = vmatmul.f32.gmra.mxu0 %v1038
        %v1065 = vpop.f32.mrf.mxu0
        %v1066 = vadd.f32 0.0, %v1065
        %1067 = vmatmul.f32.gmra.mxu0 %v1039
        %v1068 = vpop.f32.mrf.mxu0
        %v1069 = vadd.f32 0.0, %v1068
        %1070 = vmatmul.f32.gmra.mxu0 %v1040
        %v1071 = vpop.f32.mrf.mxu0
        %v1072 = vadd.f32 0.0, %v1071
        %1073 = vmatmul.f32.gmra.mxu0 %v1041
        %v1074 = vpop.f32.mrf.mxu0
        %v1075 = vadd.f32 0.0, %v1074
        %1076 = vmatmul.f32.gmra.mxu0 %v1042
        %v1077 = vpop.f32.mrf.mxu0
        %v1078 = vadd.f32 0.0, %v1077
        %1079 = vmatmul.f32.gmra.mxu0 %v1043
        %v1080 = vpop.f32.mrf.mxu0
        %v1081 = vadd.f32 0.0, %v1080
        %1082 = vmatmul.f32.gmra.mxu0 %v1044
        %v1083 = vpop.f32.mrf.mxu0
        %v1084 = vadd.f32 0.0, %v1083
        %1085 = vdwg.mxu0
        %v1086 = vmax.f32 %v1014, %v1063
        %v1087 = vmax.f32 %v1017, %v1066
        %v1088 = vmax.f32 %v1020, %v1069
        %v1089 = vmax.f32 %v1023, %v1072
        %v1090 = vmax.f32 %v1026, %v1075
        %v1091 = vmax.f32 %v1029, %v1078
        %v1092 = vmax.f32 %v1032, %v1081
        %v1093 = vmax.f32 %v1035, %v1084
        %v1094 = vld [vmem:[%s5] sm:$0xff]
        %v1095 = vld [vmem:[%s5 + $0x8] sm:$0xff]
        %v1096 = vld [vmem:[%s5 + $0x10] sm:$0xff]
        %v1097 = vld [vmem:[%s5 + $0x18] sm:$0xff]
        %v1098 = vld [vmem:[%s5 + $0x20] sm:$0xff]
        %v1099 = vld [vmem:[%s5 + $0x28] sm:$0xff]
        %v1100 = vld [vmem:[%s5 + $0x30] sm:$0xff]
        %v1101 = vld [vmem:[%s5 + $0x38] sm:$0xff]
        %vm1102 = vcmask 523264
        %v1104 = vsel %vm1102, %v1086, 0
        %v1107 = vsel %vm1102, %v1087, 0
        %v1110 = vsel %vm1102, %v1088, 0
        %v1113 = vsel %vm1102, %v1089, 0
        %v1116 = vsel %vm1102, %v1090, 0
        %v1119 = vsel %vm1102, %v1091, 0
        %v1122 = vsel %vm1102, %v1092, 0
        %v1125 = vsel %vm1102, %v1093, 0
        %1127 = vmatpush.msra.mxu0 0.0
        %1128 = vmatpush.msra.mxu0 0.0
        %1129 = vmatpush.msra.mxu0 0.0
        %1130 = vmatpush.msra.mxu0 0.0
        %1131 = vmatpush.msra.mxu0 0.0
        %1132 = vmatpush.msra.mxu0 0.0
        %1133 = vmatpush.msra.mxu0 0.0
        %1134 = vmatpush.msra.mxu0 0.0
        %1135 = vmatpush.msra.mxu0 %v1101
        %1136 = vmatpush.msra.mxu0 %v1100
        %1137 = vmatpush.msra.mxu0 %v1099
        %1138 = vmatpush.msra.mxu0 %v1098
        %1139 = vmatpush.msra.mxu0 %v1097
        %1140 = vmatpush.msra.mxu0 %v1096
        %1141 = vmatpush.msra.mxu0 %v1095
        %1142 = vmatpush.msra.mxu0 %v1094
        %1143 = vmatmul.f32.gmra.mxu0 %v1104
        %v1144 = vpop.f32.mrf.mxu0
        %v1145 = vadd.f32 0.0, %v1144
        %1146 = vmatmul.f32.gmra.mxu0 %v1107
        %v1147 = vpop.f32.mrf.mxu0
        %v1148 = vadd.f32 0.0, %v1147
        %1149 = vmatmul.f32.gmra.mxu0 %v1110
        %v1150 = vpop.f32.mrf.mxu0
        %v1151 = vadd.f32 0.0, %v1150
        %1152 = vmatmul.f32.gmra.mxu0 %v1113
        %v1153 = vpop.f32.mrf.mxu0
        %v1154 = vadd.f32 0.0, %v1153
        %1155 = vmatmul.f32.gmra.mxu0 %v1116
        %v1156 = vpop.f32.mrf.mxu0
        %v1157 = vadd.f32 0.0, %v1156
        %1158 = vmatmul.f32.gmra.mxu0 %v1119
        %v1159 = vpop.f32.mrf.mxu0
        %v1160 = vadd.f32 0.0, %v1159
        %1161 = vmatmul.f32.gmra.mxu0 %v1122
        %v1162 = vpop.f32.mrf.mxu0
        %v1163 = vadd.f32 0.0, %v1162
        %1164 = vmatmul.f32.gmra.mxu0 %v1125
        %v1165 = vpop.f32.mrf.mxu0
        %v1166 = vadd.f32 0.0, %v1165
        %1167 = vdwg.mxu0
        %v1168 = vld [vmem:[%s6] sm:$0xff]
        %v1169 = vld [vmem:[%s6 + $0x8] sm:$0xff]
        %v1170 = vld [vmem:[%s6 + $0x10] sm:$0xff]
        %v1171 = vld [vmem:[%s6 + $0x18] sm:$0xff]
        %v1172 = vld [vmem:[%s6 + $0x20] sm:$0xff]
        %v1173 = vld [vmem:[%s6 + $0x28] sm:$0xff]
        %v1174 = vld [vmem:[%s6 + $0x30] sm:$0xff]
        %v1175 = vld [vmem:[%s6 + $0x38] sm:$0xff]
        %1176 = vmatpush.msra.mxu0 0.0
        %1177 = vmatpush.msra.mxu0 0.0
        %1178 = vmatpush.msra.mxu0 0.0
        %1179 = vmatpush.msra.mxu0 0.0
        %1180 = vmatpush.msra.mxu0 0.0
        %1181 = vmatpush.msra.mxu0 0.0
        %1182 = vmatpush.msra.mxu0 0.0
        %1183 = vmatpush.msra.mxu0 0.0
        %1184 = vmatpush.msra.mxu0 %v1175
        %1185 = vmatpush.msra.mxu0 %v1174
        %1186 = vmatpush.msra.mxu0 %v1173
        %1187 = vmatpush.msra.mxu0 %v1172
        %1188 = vmatpush.msra.mxu0 %v1171
        %1189 = vmatpush.msra.mxu0 %v1170
        %1190 = vmatpush.msra.mxu0 %v1169
        %1191 = vmatpush.msra.mxu0 %v1168
        %1192 = vmatmul.f32.gmra.mxu0 %v1104
        %v1193 = vpop.f32.mrf.mxu0
        %v1194 = vadd.f32 0.0, %v1193
        %1195 = vmatmul.f32.gmra.mxu0 %v1107
        %v1196 = vpop.f32.mrf.mxu0
        %v1197 = vadd.f32 0.0, %v1196
        %1198 = vmatmul.f32.gmra.mxu0 %v1110
        %v1199 = vpop.f32.mrf.mxu0
        %v1200 = vadd.f32 0.0, %v1199
        %1201 = vmatmul.f32.gmra.mxu0 %v1113
        %v1202 = vpop.f32.mrf.mxu0
        %v1203 = vadd.f32 0.0, %v1202
        %1204 = vmatmul.f32.gmra.mxu0 %v1116
        %v1205 = vpop.f32.mrf.mxu0
        %v1206 = vadd.f32 0.0, %v1205
        %1207 = vmatmul.f32.gmra.mxu0 %v1119
        %v1208 = vpop.f32.mrf.mxu0
        %v1209 = vadd.f32 0.0, %v1208
        %1210 = vmatmul.f32.gmra.mxu0 %v1122
        %v1211 = vpop.f32.mrf.mxu0
        %v1212 = vadd.f32 0.0, %v1211
        %1213 = vmatmul.f32.gmra.mxu0 %v1125
        %v1214 = vpop.f32.mrf.mxu0
        %v1215 = vadd.f32 0.0, %v1214
        %1216 = vdwg.mxu0
        %v1217 = vmax.f32 %v1145, %v1194
        %v1218 = vmax.f32 %v1148, %v1197
        %v1219 = vmax.f32 %v1151, %v1200
        %v1220 = vmax.f32 %v1154, %v1203
        %v1221 = vmax.f32 %v1157, %v1206
        %v1222 = vmax.f32 %v1160, %v1209
        %v1223 = vmax.f32 %v1163, %v1212
        %v1224 = vmax.f32 %v1166, %v1215
        %vm1225 = vcmask 261120
        %1226 = vst.msk [vmem:[#allocation2] sm:$0xff] %vm1225, 0.0
        %1227 = vst.msk [vmem:[#allocation2 + $0x8] sm:$0xff] %vm1225, 0.0
        %1228 = vst.msk [vmem:[#allocation2 + $0x50] sm:$0xff] %vm1225, 0.0
        %1229 = vst.msk [vmem:[#allocation2 + $0x58] sm:$0xff] %vm1225, 0.0
        %1230 = vst.msk [vmem:[#allocation2 + $0x10] sm:$0xff] %vm1225, %v1217
        %1231 = vst.msk [vmem:[#allocation2 + $0x18] sm:$0xff] %vm1225, %v1218
        %1232 = vst.msk [vmem:[#allocation2 + $0x20] sm:$0xff] %vm1225, %v1219
        %1233 = vst.msk [vmem:[#allocation2 + $0x28] sm:$0xff] %vm1225, %v1220
        %1234 = vst.msk [vmem:[#allocation2 + $0x30] sm:$0xff] %vm1225, %v1221
        %1235 = vst.msk [vmem:[#allocation2 + $0x38] sm:$0xff] %vm1225, %v1222
        %1236 = vst.msk [vmem:[#allocation2 + $0x40] sm:$0xff] %vm1225, %v1223
        %1237 = vst.msk [vmem:[#allocation2 + $0x48] sm:$0xff] %vm1225, %v1224
        %v1238 = vld [vmem:[#allocation2] sm:$0xff]
        %v1239 = vld [vmem:[#allocation2 + $0x8] sm:$0xff]
        %v1240 = vld [vmem:[#allocation2 + $0x10] sm:$0xff]
        %v1241 = vld [vmem:[#allocation2 + $0x18] sm:$0xff]
        %v1242 = vld [vmem:[#allocation2 + $0x20] sm:$0xff]
        %v1243 = vld [vmem:[#allocation2 + $0x28] sm:$0xff]
        %v1244 = vld [vmem:[#allocation2 + $0x30] sm:$0xff]
        %v1245 = vld [vmem:[#allocation2 + $0x38] sm:$0xff]
        %v1246 = vld [vmem:[%s7] sm:$0xff]
        %v1247 = vld [vmem:[%s7 + $0x8] sm:$0xff]
        %v1248 = vld [vmem:[%s7 + $0x10] sm:$0xff]
        %v1249 = vld [vmem:[%s7 + $0x18] sm:$0xff]
        %v1250 = vld [vmem:[#allocation2 + $0x40] sm:$0xff]
        %v1251 = vld [vmem:[#allocation2 + $0x48] sm:$0xff]
        %s1252 = scalar_lea.vmem %s7, 32
        %v1253 = vld [vmem:[%s1252] sm:$0xff]
        %v1254 = vld [vmem:[%s1252 + $0x8] sm:$0xff]
        %v1255 = vld [vmem:[%s1252 + $0x10] sm:$0xff]
        %v1256 = vld [vmem:[%s1252 + $0x18] sm:$0xff]
        %v1258 = vsel %vm1225, %v1240, 0
        %v1261 = vsel %vm1225, %v1241, 0
        %v1264 = vsel %vm1225, %v1242, 0
        %v1267 = vsel %vm1225, %v1243, 0
        %v1270 = vsel %vm1225, %v1244, 0
        %v1273 = vsel %vm1225, %v1245, 0
        %v1276 = vsel %vm1225, %v1250, 0
        %v1279 = vsel %vm1225, %v1251, 0
        %1281 = vmatpush.msra.mxu0 0.0
        %1282 = vmatpush.msra.mxu0 0.0
        %1283 = vmatpush.msra.mxu0 0.0
        %1284 = vmatpush.msra.mxu0 0.0
        %1285 = vmatpush.msra.mxu0 0.0
        %1286 = vmatpush.msra.mxu0 0.0
        %1287 = vmatpush.msra.mxu0 0.0
        %1288 = vmatpush.msra.mxu0 0.0
        %1289 = vmatpush.msra.mxu0 0.0
        %1290 = vmatpush.msra.mxu0 0.0
        %1291 = vmatpush.msra.mxu0 0.0
        %1292 = vmatpush.msra.mxu0 0.0
        %1293 = vmatpush.msra.mxu0 %v1256
        %1294 = vmatpush.msra.mxu0 %v1255
        %1295 = vmatpush.msra.mxu0 %v1254
        %1296 = vmatpush.msra.mxu0 %v1253
        %1297 = vmatmul.f32.gmra.mxu0 %v1258
        %v1298 = vpop.f32.mrf.mxu0
        %v1299 = vadd.f32 0.0, %v1298
        %1300 = vmatmul.f32.gmra.mxu0 %v1261
        %v1301 = vpop.f32.mrf.mxu0
        %v1302 = vadd.f32 0.0, %v1301
        %1303 = vmatmul.f32.gmra.mxu0 %v1264
        %v1304 = vpop.f32.mrf.mxu0
        %v1305 = vadd.f32 0.0, %v1304
        %1306 = vmatmul.f32.gmra.mxu0 %v1267
        %v1307 = vpop.f32.mrf.mxu0
        %v1308 = vadd.f32 0.0, %v1307
        %1309 = vmatmul.f32.gmra.mxu0 %v1270
        %v1310 = vpop.f32.mrf.mxu0
        %v1311 = vadd.f32 0.0, %v1310
        %1312 = vmatmul.f32.gmra.mxu0 %v1273
        %v1313 = vpop.f32.mrf.mxu0
        %v1314 = vadd.f32 0.0, %v1313
        %1315 = vmatmul.f32.gmra.mxu0 %v1276
        %v1316 = vpop.f32.mrf.mxu0
        %v1317 = vadd.f32 0.0, %v1316
        %1318 = vmatmul.f32.gmra.mxu0 %v1279
        %v1319 = vpop.f32.mrf.mxu0
        %v1320 = vadd.f32 0.0, %v1319
        %1321 = vdwg.mxu0
        %v1323 = vsel %vm1225, %v1238, 0
        %v1326 = vsel %vm1225, %v1239, 0
        %1328 = vmatpush.msra.mxu0 0.0
        %1329 = vmatpush.msra.mxu0 0.0
        %1330 = vmatpush.msra.mxu0 0.0
        %1331 = vmatpush.msra.mxu0 0.0
        %1332 = vmatpush.msra.mxu0 0.0
        %1333 = vmatpush.msra.mxu0 0.0
        %1334 = vmatpush.msra.mxu0 0.0
        %1335 = vmatpush.msra.mxu0 0.0
        %1336 = vmatpush.msra.mxu0 0.0
        %1337 = vmatpush.msra.mxu0 0.0
        %1338 = vmatpush.msra.mxu0 0.0
        %1339 = vmatpush.msra.mxu0 0.0
        %1340 = vmatpush.msra.mxu0 %v1249
        %1341 = vmatpush.msra.mxu0 %v1248
        %1342 = vmatpush.msra.mxu0 %v1247
        %1343 = vmatpush.msra.mxu0 %v1246
        %1344 = vmatmul.f32.gmra.mxu0 %v1323
        %v1345 = vpop.f32.mrf.mxu0
        %v1346 = vadd.f32 %v1299, %v1345
        %1347 = vmatmul.f32.gmra.mxu0 %v1326
        %v1348 = vpop.f32.mrf.mxu0
        %v1349 = vadd.f32 %v1302, %v1348
        %1350 = vmatmul.f32.gmra.mxu0 %v1258
        %v1351 = vpop.f32.mrf.mxu0
        %v1352 = vadd.f32 %v1305, %v1351
        %1353 = vmatmul.f32.gmra.mxu0 %v1261
        %v1354 = vpop.f32.mrf.mxu0
        %v1355 = vadd.f32 %v1308, %v1354
        %1356 = vmatmul.f32.gmra.mxu0 %v1264
        %v1357 = vpop.f32.mrf.mxu0
        %v1358 = vadd.f32 %v1311, %v1357
        %1359 = vmatmul.f32.gmra.mxu0 %v1267
        %v1360 = vpop.f32.mrf.mxu0
        %v1361 = vadd.f32 %v1314, %v1360
        %1362 = vmatmul.f32.gmra.mxu0 %v1270
        %v1363 = vpop.f32.mrf.mxu0
        %v1364 = vadd.f32 %v1317, %v1363
        %1365 = vmatmul.f32.gmra.mxu0 %v1273
        %v1366 = vpop.f32.mrf.mxu0
        %v1367 = vadd.f32 %v1320, %v1366
        %1368 = vdwg.mxu0
        %v1369 = vld [vmem:[#allocation2 + $0x20] sm:$0xff]
        %v1370 = vld [vmem:[#allocation2 + $0x28] sm:$0xff]
        %v1371 = vld [vmem:[#allocation2 + $0x30] sm:$0xff]
        %v1372 = vld [vmem:[#allocation2 + $0x38] sm:$0xff]
        %v1373 = vld [vmem:[#allocation2 + $0x40] sm:$0xff]
        %v1374 = vld [vmem:[#allocation2 + $0x48] sm:$0xff]
        %v1375 = vld [vmem:[#allocation2 + $0x50] sm:$0xff]
        %v1376 = vld [vmem:[#allocation2 + $0x58] sm:$0xff]
        %s1377 = scalar_lea.vmem %s7, 64
        %v1378 = vld [vmem:[%s1377] sm:$0xff]
        %v1379 = vld [vmem:[%s1377 + $0x8] sm:$0xff]
        %v1380 = vld [vmem:[%s1377 + $0x10] sm:$0xff]
        %v1381 = vld [vmem:[%s1377 + $0x18] sm:$0xff]
        %v1383 = vsel %vm1225, %v1369, 0
        %v1386 = vsel %vm1225, %v1370, 0
        %v1389 = vsel %vm1225, %v1371, 0
        %v1392 = vsel %vm1225, %v1372, 0
        %v1395 = vsel %vm1225, %v1373, 0
        %v1398 = vsel %vm1225, %v1374, 0
        %v1401 = vsel %vm1225, %v1375, 0
        %v1404 = vsel %vm1225, %v1376, 0
        %1406 = vmatpush.msra.mxu0 0.0
        %1407 = vmatpush.msra.mxu0 0.0
        %1408 = vmatpush.msra.mxu0 0.0
        %1409 = vmatpush.msra.mxu0 0.0
        %1410 = vmatpush.msra.mxu0 0.0
        %1411 = vmatpush.msra.mxu0 0.0
        %1412 = vmatpush.msra.mxu0 0.0
        %1413 = vmatpush.msra.mxu0 0.0
        %1414 = vmatpush.msra.mxu0 0.0
        %1415 = vmatpush.msra.mxu0 0.0
        %1416 = vmatpush.msra.mxu0 0.0
        %1417 = vmatpush.msra.mxu0 0.0
        %1418 = vmatpush.msra.mxu0 %v1381
        %1419 = vmatpush.msra.mxu0 %v1380
        %1420 = vmatpush.msra.mxu0 %v1379
        %1421 = vmatpush.msra.mxu0 %v1378
        %1422 = vmatmul.f32.gmra.mxu0 %v1383
        %v1423 = vpop.f32.mrf.mxu0
        %v1424 = vadd.f32 0.0, %v1423
        %1425 = vmatmul.f32.gmra.mxu0 %v1386
        %v1426 = vpop.f32.mrf.mxu0
        %v1427 = vadd.f32 0.0, %v1426
        %1428 = vmatmul.f32.gmra.mxu0 %v1389
        %v1429 = vpop.f32.mrf.mxu0
        %v1430 = vadd.f32 0.0, %v1429
        %1431 = vmatmul.f32.gmra.mxu0 %v1392
        %v1432 = vpop.f32.mrf.mxu0
        %v1433 = vadd.f32 0.0, %v1432
        %1434 = vmatmul.f32.gmra.mxu0 %v1395
        %v1435 = vpop.f32.mrf.mxu0
        %v1436 = vadd.f32 0.0, %v1435
        %1437 = vmatmul.f32.gmra.mxu0 %v1398
        %v1438 = vpop.f32.mrf.mxu0
        %v1439 = vadd.f32 0.0, %v1438
        %1440 = vmatmul.f32.gmra.mxu0 %v1401
        %v1441 = vpop.f32.mrf.mxu0
        %v1442 = vadd.f32 0.0, %v1441
        %1443 = vmatmul.f32.gmra.mxu0 %v1404
        %v1444 = vpop.f32.mrf.mxu0
        %v1445 = vadd.f32 0.0, %v1444
        %1446 = vdwg.mxu0
        %v1447 = vadd.f32 %v1346, %v1424
        %v1448 = vadd.f32 %v1349, %v1427
        %v1449 = vadd.f32 %v1352, %v1430
        %v1450 = vadd.f32 %v1355, %v1433
        %v1451 = vadd.f32 %v1358, %v1436
        %v1452 = vadd.f32 %v1361, %v1439
        %v1453 = vadd.f32 %v1364, %v1442
        %v1454 = vadd.f32 %v1367, %v1445
        %v1455 = vld [vmem:[%s8] sm:$0x1]
        %v1457 = vperm.slane %v1455, 0
        %v1459 = vadd.f32 %v1447, %v1457
        %v1460 = vadd.f32 %v1448, %v1457
        %v1461 = vadd.f32 %v1449, %v1457
        %v1462 = vadd.f32 %v1450, %v1457
        %v1463 = vadd.f32 %v1451, %v1457
        %v1464 = vadd.f32 %v1452, %v1457
        %v1465 = vadd.f32 %v1453, %v1457
        %v1466 = vadd.f32 %v1454, %v1457
        %v1467 = vmax.f32 %v1459, 0.0
        %v1468 = vmax.f32 %v1460, 0.0
        %v1469 = vmax.f32 %v1461, 0.0
        %v1470 = vmax.f32 %v1462, 0.0
        %v1471 = vmax.f32 %v1463, 0.0
        %v1472 = vmax.f32 %v1464, 0.0
        %v1473 = vmax.f32 %v1465, 0.0
        %v1474 = vmax.f32 %v1466, 0.0
        %v1475 = vld [vmem:[%s9] sm:$0xff]
        %v1476 = vld [vmem:[%s9 + $0x8] sm:$0xff]
        %v1477 = vld [vmem:[%s9 + $0x10] sm:$0xff]
        %v1478 = vld [vmem:[%s9 + $0x18] sm:$0xff]
        %v1479 = vld [vmem:[%s9 + $0x20] sm:$0xff]
        %v1480 = vld [vmem:[%s9 + $0x28] sm:$0xff]
        %v1481 = vld [vmem:[%s9 + $0x30] sm:$0xff]
        %v1482 = vld [vmem:[%s9 + $0x38] sm:$0xff]
        %v1483 = vld [vmem:[%s9 + $0x40] sm:$0xff]
        %v1484 = vld [vmem:[%s9 + $0x48] sm:$0xff]
        %v1485 = vld [vmem:[%s9 + $0x50] sm:$0xff]
        %v1486 = vld [vmem:[%s9 + $0x58] sm:$0xff]
        %v1487 = vld [vmem:[%s9 + $0x60] sm:$0xff]
        %v1488 = vld [vmem:[%s9 + $0x68] sm:$0xff]
        %v1489 = vld [vmem:[%s9 + $0x70] sm:$0xff]
        %v1490 = vld [vmem:[%s9 + $0x78] sm:$0xff]
        %v1492 = vsel %vm1102, %v1475, 0
        %v1495 = vsel %vm1102, %v1476, 0
        %v1498 = vsel %vm1102, %v1477, 0
        %v1501 = vsel %vm1102, %v1478, 0
        %v1504 = vsel %vm1102, %v1479, 0
        %v1507 = vsel %vm1102, %v1480, 0
        %v1510 = vsel %vm1102, %v1481, 0
        %v1513 = vsel %vm1102, %v1482, 0
        %v1516 = vsel %vm1102, %v1483, 0
        %v1519 = vsel %vm1102, %v1484, 0
        %v1522 = vsel %vm1102, %v1485, 0
        %v1525 = vsel %vm1102, %v1486, 0
        %v1528 = vsel %vm1102, %v1487, 0
        %v1531 = vsel %vm1102, %v1488, 0
        %v1534 = vsel %vm1102, %v1489, 0
        %v1537 = vsel %vm1102, %v1490, 0
        %1539 = vmatpush.msra.mxu0 0.0
        %1540 = vmatpush.msra.mxu0 0.0
        %1541 = vmatpush.msra.mxu0 0.0
        %1542 = vmatpush.msra.mxu0 0.0
        %1543 = vmatpush.msra.mxu0 0.0
        %1544 = vmatpush.msra.mxu0 0.0
        %1545 = vmatpush.msra.mxu0 0.0
        %1546 = vmatpush.msra.mxu0 0.0
        %1547 = vmatpush.msra.mxu0 %v1474
        %1548 = vmatpush.msra.mxu0 %v1473
        %1549 = vmatpush.msra.mxu0 %v1472
        %1550 = vmatpush.msra.mxu0 %v1471
        %1551 = vmatpush.msra.mxu0 %v1470
        %1552 = vmatpush.msra.mxu0 %v1469
        %1553 = vmatpush.msra.mxu0 %v1468
        %1554 = vmatpush.msra.mxu0 %v1467
        %1555 = vmatmul.f32.gmra.mxu0 %v1492
        %v1556 = vpop.f32.mrf.mxu0
        %v1557 = vadd.f32 0.0, %v1556
        %1558 = vmatmul.f32.gmra.mxu0 %v1495
        %v1559 = vpop.f32.mrf.mxu0
        %v1560 = vadd.f32 0.0, %v1559
        %1561 = vmatmul.f32.gmra.mxu0 %v1498
        %v1562 = vpop.f32.mrf.mxu0
        %v1563 = vadd.f32 0.0, %v1562
        %1564 = vmatmul.f32.gmra.mxu0 %v1501
        %v1565 = vpop.f32.mrf.mxu0
        %v1566 = vadd.f32 0.0, %v1565
        %1567 = vmatmul.f32.gmra.mxu0 %v1504
        %v1568 = vpop.f32.mrf.mxu0
        %v1569 = vadd.f32 0.0, %v1568
        %1570 = vmatmul.f32.gmra.mxu0 %v1507
        %v1571 = vpop.f32.mrf.mxu0
        %v1572 = vadd.f32 0.0, %v1571
        %1573 = vmatmul.f32.gmra.mxu0 %v1510
        %v1574 = vpop.f32.mrf.mxu0
        %v1575 = vadd.f32 0.0, %v1574
        %1576 = vmatmul.f32.gmra.mxu0 %v1513
        %v1577 = vpop.f32.mrf.mxu0
        %v1578 = vadd.f32 0.0, %v1577
        %1579 = vmatmul.f32.gmra.mxu0 %v1516
        %v1580 = vpop.f32.mrf.mxu0
        %v1581 = vadd.f32 0.0, %v1580
        %1582 = vmatmul.f32.gmra.mxu0 %v1519
        %v1583 = vpop.f32.mrf.mxu0
        %v1584 = vadd.f32 0.0, %v1583
        %1585 = vmatmul.f32.gmra.mxu0 %v1522
        %v1586 = vpop.f32.mrf.mxu0
        %v1587 = vadd.f32 0.0, %v1586
        %1588 = vmatmul.f32.gmra.mxu0 %v1525
        %v1589 = vpop.f32.mrf.mxu0
        %v1590 = vadd.f32 0.0, %v1589
        %1591 = vmatmul.f32.gmra.mxu0 %v1528
        %v1592 = vpop.f32.mrf.mxu0
        %v1593 = vadd.f32 0.0, %v1592
        %1594 = vmatmul.f32.gmra.mxu0 %v1531
        %v1595 = vpop.f32.mrf.mxu0
        %v1596 = vadd.f32 0.0, %v1595
        %1597 = vmatmul.f32.gmra.mxu0 %v1534
        %v1598 = vpop.f32.mrf.mxu0
        %v1599 = vadd.f32 0.0, %v1598
        %1600 = vmatmul.f32.gmra.mxu0 %v1537
        %v1601 = vpop.f32.mrf.mxu0
        %v1602 = vadd.f32 0.0, %v1601
        %1603 = vdwg.mxu0
        %1604 = vst.msk [vmem:[#allocation3] sm:$0xff] %vm1225, 0.0
        %1605 = vst.msk [vmem:[#allocation3 + $0x8] sm:$0xff] %vm1225, 0.0
        %1606 = vst.msk [vmem:[#allocation3 + $0x90] sm:$0xff] %vm1225, 0.0
        %1607 = vst.msk [vmem:[#allocation3 + $0x98] sm:$0xff] %vm1225, 0.0
        %1608 = vst.msk [vmem:[#allocation3 + $0x10] sm:$0xff] %vm1225, %v1557
        %1609 = vst.msk [vmem:[#allocation3 + $0x18] sm:$0xff] %vm1225, %v1560
        %1610 = vst.msk [vmem:[#allocation3 + $0x20] sm:$0xff] %vm1225, %v1563
        %1611 = vst.msk [vmem:[#allocation3 + $0x28] sm:$0xff] %vm1225, %v1566
        %1612 = vst.msk [vmem:[#allocation3 + $0x30] sm:$0xff] %vm1225, %v1569
        %1613 = vst.msk [vmem:[#allocation3 + $0x38] sm:$0xff] %vm1225, %v1572
        %1614 = vst.msk [vmem:[#allocation3 + $0x40] sm:$0xff] %vm1225, %v1575
        %1615 = vst.msk [vmem:[#allocation3 + $0x48] sm:$0xff] %vm1225, %v1578
        %1616 = vst.msk [vmem:[#allocation3 + $0x50] sm:$0xff] %vm1225, %v1581
        %1617 = vst.msk [vmem:[#allocation3 + $0x58] sm:$0xff] %vm1225, %v1584
        %1618 = vst.msk [vmem:[#allocation3 + $0x60] sm:$0xff] %vm1225, %v1587
        %1619 = vst.msk [vmem:[#allocation3 + $0x68] sm:$0xff] %vm1225, %v1590
        %1620 = vst.msk [vmem:[#allocation3 + $0x70] sm:$0xff] %vm1225, %v1593
        %1621 = vst.msk [vmem:[#allocation3 + $0x78] sm:$0xff] %vm1225, %v1596
        %1622 = vst.msk [vmem:[#allocation3 + $0x80] sm:$0xff] %vm1225, %v1599
        %1623 = vst.msk [vmem:[#allocation3 + $0x88] sm:$0xff] %vm1225, %v1602
        %1624 = vst.msk [vmem:[#allocation4] sm:$0xff] %vm1102, 0.0
        %1625 = vst.msk [vmem:[#allocation4 + $0x8] sm:$0xff] %vm1102, 0.0
        %1626 = vst.msk [vmem:[#allocation4 + $0x90] sm:$0xff] %vm1102, 0.0
        %1627 = vst.msk [vmem:[#allocation4 + $0x98] sm:$0xff] %vm1102, 0.0
        %1628 = vst.msk [vmem:[#allocation4 + $0x10] sm:$0xff] %vm1102, %v972
        %1629 = vst.msk [vmem:[#allocation4 + $0x18] sm:$0xff] %vm1102, %v973
        %1630 = vst.msk [vmem:[#allocation4 + $0x20] sm:$0xff] %vm1102, %v974
        %1631 = vst.msk [vmem:[#allocation4 + $0x28] sm:$0xff] %vm1102, %v975
        %1632 = vst.msk [vmem:[#allocation4 + $0x30] sm:$0xff] %vm1102, %v976
        %1633 = vst.msk [vmem:[#allocation4 + $0x38] sm:$0xff] %vm1102, %v977
        %1634 = vst.msk [vmem:[#allocation4 + $0x40] sm:$0xff] %vm1102, %v978
        %1635 = vst.msk [vmem:[#allocation4 + $0x48] sm:$0xff] %vm1102, %v979
        %1636 = vst.msk [vmem:[#allocation4 + $0x50] sm:$0xff] %vm1102, %v980
        %1637 = vst.msk [vmem:[#allocation4 + $0x58] sm:$0xff] %vm1102, %v981
        %1638 = vst.msk [vmem:[#allocation4 + $0x60] sm:$0xff] %vm1102, %v982
        %1639 = vst.msk [vmem:[#allocation4 + $0x68] sm:$0xff] %vm1102, %v983
        %1640 = vst.msk [vmem:[#allocation4 + $0x70] sm:$0xff] %vm1102, %v984
        %1641 = vst.msk [vmem:[#allocation4 + $0x78] sm:$0xff] %vm1102, %v985
        %1642 = vst.msk [vmem:[#allocation4 + $0x80] sm:$0xff] %vm1102, %v986
        %1643 = vst.msk [vmem:[#allocation4 + $0x88] sm:$0xff] %vm1102, %v987
        %v1644 = vld [vmem:[#allocation3] sm:$0xff]
        %v1645 = vld [vmem:[#allocation3 + $0x8] sm:$0xff]
        %v1646 = vld [vmem:[#allocation3 + $0x10] sm:$0xff]
        %v1647 = vld [vmem:[#allocation3 + $0x18] sm:$0xff]
        %v1648 = vld [vmem:[#allocation3 + $0x20] sm:$0xff]
        %v1649 = vld [vmem:[#allocation3 + $0x28] sm:$0xff]
        %v1650 = vld [vmem:[#allocation3 + $0x30] sm:$0xff]
        %v1651 = vld [vmem:[#allocation3 + $0x38] sm:$0xff]
        %v1652 = vld [vmem:[#allocation3 + $0x40] sm:$0xff]
        %v1653 = vld [vmem:[#allocation3 + $0x48] sm:$0xff]
        %v1654 = vld [vmem:[#allocation3 + $0x50] sm:$0xff]
        %v1655 = vld [vmem:[#allocation3 + $0x58] sm:$0xff]
        %v1656 = vld [vmem:[#allocation3 + $0x60] sm:$0xff]
        %v1657 = vld [vmem:[#allocation3 + $0x68] sm:$0xff]
        %v1658 = vld [vmem:[#allocation3 + $0x70] sm:$0xff]
        %v1659 = vld [vmem:[#allocation3 + $0x78] sm:$0xff]
        %v1660 = vld [vmem:[%s10] sm:$0xff]
        %v1661 = vld [vmem:[%s10 + $0x8] sm:$0xff]
        %v1662 = vld [vmem:[%s10 + $0x10] sm:$0xff]
        %v1663 = vld [vmem:[%s10 + $0x18] sm:$0xff]
        %v1664 = vld [vmem:[#allocation4] sm:$0xff]
        %v1665 = vld [vmem:[#allocation4 + $0x8] sm:$0xff]
        %v1666 = vld [vmem:[#allocation4 + $0x10] sm:$0xff]
        %v1667 = vld [vmem:[#allocation4 + $0x18] sm:$0xff]
        %v1668 = vld [vmem:[#allocation4 + $0x20] sm:$0xff]
        %v1669 = vld [vmem:[#allocation4 + $0x28] sm:$0xff]
        %v1670 = vld [vmem:[#allocation4 + $0x30] sm:$0xff]
        %v1671 = vld [vmem:[#allocation4 + $0x38] sm:$0xff]
        %v1672 = vld [vmem:[#allocation4 + $0x40] sm:$0xff]
        %v1673 = vld [vmem:[#allocation4 + $0x48] sm:$0xff]
        %v1674 = vld [vmem:[#allocation4 + $0x50] sm:$0xff]
        %v1675 = vld [vmem:[#allocation4 + $0x58] sm:$0xff]
        %v1676 = vld [vmem:[#allocation4 + $0x60] sm:$0xff]
        %v1677 = vld [vmem:[#allocation4 + $0x68] sm:$0xff]
        %v1678 = vld [vmem:[#allocation4 + $0x70] sm:$0xff]
        %v1679 = vld [vmem:[#allocation4 + $0x78] sm:$0xff]
        %v1680 = vld [vmem:[%s11] sm:$0xff]
        %v1681 = vld [vmem:[%s11 + $0x8] sm:$0xff]
        %v1682 = vld [vmem:[%s11 + $0x10] sm:$0xff]
        %v1683 = vld [vmem:[%s11 + $0x18] sm:$0xff]
        %v1684 = vld [vmem:[%s11 + $0x20] sm:$0xff]
        %v1685 = vld [vmem:[%s11 + $0x28] sm:$0xff]
        %v1686 = vld [vmem:[%s11 + $0x30] sm:$0xff]
        %v1687 = vld [vmem:[%s11 + $0x38] sm:$0xff]
        %v1689 = vsel %vm1102, %v1664, 0
        %v1692 = vsel %vm1102, %v1665, 0
        %v1695 = vsel %vm1102, %v1666, 0
        %v1698 = vsel %vm1102, %v1667, 0
        %v1701 = vsel %vm1102, %v1668, 0
        %v1704 = vsel %vm1102, %v1669, 0
        %v1707 = vsel %vm1102, %v1670, 0
        %v1710 = vsel %vm1102, %v1671, 0
        %v1713 = vsel %vm1102, %v1672, 0
        %v1716 = vsel %vm1102, %v1673, 0
        %v1719 = vsel %vm1102, %v1674, 0
        %v1722 = vsel %vm1102, %v1675, 0
        %v1725 = vsel %vm1102, %v1676, 0
        %v1728 = vsel %vm1102, %v1677, 0
        %v1731 = vsel %vm1102, %v1678, 0
        %v1734 = vsel %vm1102, %v1679, 0
        %1736 = vmatpush.msra.mxu0 0.0
        %1737 = vmatpush.msra.mxu0 0.0
        %1738 = vmatpush.msra.mxu0 0.0
        %1739 = vmatpush.msra.mxu0 0.0
        %1740 = vmatpush.msra.mxu0 0.0
        %1741 = vmatpush.msra.mxu0 0.0
        %1742 = vmatpush.msra.mxu0 0.0
        %1743 = vmatpush.msra.mxu0 0.0
        %1744 = vmatpush.msra.mxu0 %v1687
        %1745 = vmatpush.msra.mxu0 %v1686
        %1746 = vmatpush.msra.mxu0 %v1685
        %1747 = vmatpush.msra.mxu0 %v1684
        %1748 = vmatpush.msra.mxu0 %v1683
        %1749 = vmatpush.msra.mxu0 %v1682
        %1750 = vmatpush.msra.mxu0 %v1681
        %1751 = vmatpush.msra.mxu0 %v1680
        %1752 = vmatmul.f32.gmra.mxu0 %v1689
        %v1753 = vpop.f32.mrf.mxu0
        %v1754 = vadd.f32 0.0, %v1753
        %1755 = vmatmul.f32.gmra.mxu0 %v1692
        %v1756 = vpop.f32.mrf.mxu0
        %v1757 = vadd.f32 0.0, %v1756
        %1758 = vmatmul.f32.gmra.mxu0 %v1695
        %v1759 = vpop.f32.mrf.mxu0
        %v1760 = vadd.f32 0.0, %v1759
        %1761 = vmatmul.f32.gmra.mxu0 %v1698
        %v1762 = vpop.f32.mrf.mxu0
        %v1763 = vadd.f32 0.0, %v1762
        %1764 = vmatmul.f32.gmra.mxu0 %v1701
        %v1765 = vpop.f32.mrf.mxu0
        %v1766 = vadd.f32 0.0, %v1765
        %1767 = vmatmul.f32.gmra.mxu0 %v1704
        %v1768 = vpop.f32.mrf.mxu0
        %v1769 = vadd.f32 0.0, %v1768
        %1770 = vmatmul.f32.gmra.mxu0 %v1707
        %v1771 = vpop.f32.mrf.mxu0
        %v1772 = vadd.f32 0.0, %v1771
        %1773 = vmatmul.f32.gmra.mxu0 %v1710
        %v1774 = vpop.f32.mrf.mxu0
        %v1775 = vadd.f32 0.0, %v1774
        %1776 = vmatmul.f32.gmra.mxu0 %v1713
        %v1777 = vpop.f32.mrf.mxu0
        %v1778 = vadd.f32 0.0, %v1777
        %1779 = vmatmul.f32.gmra.mxu0 %v1716
        %v1780 = vpop.f32.mrf.mxu0
        %v1781 = vadd.f32 0.0, %v1780
        %1782 = vmatmul.f32.gmra.mxu0 %v1719
        %v1783 = vpop.f32.mrf.mxu0
        %v1784 = vadd.f32 0.0, %v1783
        %1785 = vmatmul.f32.gmra.mxu0 %v1722
        %v1786 = vpop.f32.mrf.mxu0
        %v1787 = vadd.f32 0.0, %v1786
        %1788 = vmatmul.f32.gmra.mxu0 %v1725
        %v1789 = vpop.f32.mrf.mxu0
        %v1790 = vadd.f32 0.0, %v1789
        %1791 = vmatmul.f32.gmra.mxu0 %v1728
        %v1792 = vpop.f32.mrf.mxu0
        %v1793 = vadd.f32 0.0, %v1792
        %1794 = vmatmul.f32.gmra.mxu0 %v1731
        %v1795 = vpop.f32.mrf.mxu0
        %v1796 = vadd.f32 0.0, %v1795
        %1797 = vmatmul.f32.gmra.mxu0 %v1734
        %v1798 = vpop.f32.mrf.mxu0
        %v1799 = vadd.f32 0.0, %v1798
        %1800 = vdwg.mxu0
        %v1802 = vsel %vm1225, %v1644, 0
        %v1805 = vsel %vm1225, %v1645, 0
        %v1808 = vsel %vm1225, %v1646, 0
        %v1811 = vsel %vm1225, %v1647, 0
        %v1814 = vsel %vm1225, %v1648, 0
        %v1817 = vsel %vm1225, %v1649, 0
        %v1820 = vsel %vm1225, %v1650, 0
        %v1823 = vsel %vm1225, %v1651, 0
        %v1826 = vsel %vm1225, %v1652, 0
        %v1829 = vsel %vm1225, %v1653, 0
        %v1832 = vsel %vm1225, %v1654, 0
        %v1835 = vsel %vm1225, %v1655, 0
        %v1838 = vsel %vm1225, %v1656, 0
        %v1841 = vsel %vm1225, %v1657, 0
        %v1844 = vsel %vm1225, %v1658, 0
        %v1847 = vsel %vm1225, %v1659, 0
        %1849 = vmatpush.msra.mxu0 0.0
        %1850 = vmatpush.msra.mxu0 0.0
        %1851 = vmatpush.msra.mxu0 0.0
        %1852 = vmatpush.msra.mxu0 0.0
        %1853 = vmatpush.msra.mxu0 0.0
        %1854 = vmatpush.msra.mxu0 0.0
        %1855 = vmatpush.msra.mxu0 0.0
        %1856 = vmatpush.msra.mxu0 0.0
        %1857 = vmatpush.msra.mxu0 0.0
        %1858 = vmatpush.msra.mxu0 0.0
        %1859 = vmatpush.msra.mxu0 0.0
        %1860 = vmatpush.msra.mxu0 0.0
        %1861 = vmatpush.msra.mxu0 %v1663
        %1862 = vmatpush.msra.mxu0 %v1662
        %1863 = vmatpush.msra.mxu0 %v1661
        %1864 = vmatpush.msra.mxu0 %v1660
        %1865 = vmatmul.f32.gmra.mxu0 %v1802
        %v1866 = vpop.f32.mrf.mxu0
        %v1867 = vadd.f32 %v1754, %v1866
        %1868 = vmatmul.f32.gmra.mxu0 %v1805
        %v1869 = vpop.f32.mrf.mxu0
        %v1870 = vadd.f32 %v1757, %v1869
        %1871 = vmatmul.f32.gmra.mxu0 %v1808
        %v1872 = vpop.f32.mrf.mxu0
        %v1873 = vadd.f32 %v1760, %v1872
        %1874 = vmatmul.f32.gmra.mxu0 %v1811
        %v1875 = vpop.f32.mrf.mxu0
        %v1876 = vadd.f32 %v1763, %v1875
        %1877 = vmatmul.f32.gmra.mxu0 %v1814
        %v1878 = vpop.f32.mrf.mxu0
        %v1879 = vadd.f32 %v1766, %v1878
        %1880 = vmatmul.f32.gmra.mxu0 %v1817
        %v1881 = vpop.f32.mrf.mxu0
        %v1882 = vadd.f32 %v1769, %v1881
        %1883 = vmatmul.f32.gmra.mxu0 %v1820
        %v1884 = vpop.f32.mrf.mxu0
        %v1885 = vadd.f32 %v1772, %v1884
        %1886 = vmatmul.f32.gmra.mxu0 %v1823
        %v1887 = vpop.f32.mrf.mxu0
        %v1888 = vadd.f32 %v1775, %v1887
        %1889 = vmatmul.f32.gmra.mxu0 %v1826
        %v1890 = vpop.f32.mrf.mxu0
        %v1891 = vadd.f32 %v1778, %v1890
        %1892 = vmatmul.f32.gmra.mxu0 %v1829
        %v1893 = vpop.f32.mrf.mxu0
        %v1894 = vadd.f32 %v1781, %v1893
        %1895 = vmatmul.f32.gmra.mxu0 %v1832
        %v1896 = vpop.f32.mrf.mxu0
        %v1897 = vadd.f32 %v1784, %v1896
        %1898 = vmatmul.f32.gmra.mxu0 %v1835
        %v1899 = vpop.f32.mrf.mxu0
        %v1900 = vadd.f32 %v1787, %v1899
        %1901 = vmatmul.f32.gmra.mxu0 %v1838
        %v1902 = vpop.f32.mrf.mxu0
        %v1903 = vadd.f32 %v1790, %v1902
        %1904 = vmatmul.f32.gmra.mxu0 %v1841
        %v1905 = vpop.f32.mrf.mxu0
        %v1906 = vadd.f32 %v1793, %v1905
        %1907 = vmatmul.f32.gmra.mxu0 %v1844
        %v1908 = vpop.f32.mrf.mxu0
        %v1909 = vadd.f32 %v1796, %v1908
        %1910 = vmatmul.f32.gmra.mxu0 %v1847
        %v1911 = vpop.f32.mrf.mxu0
        %v1912 = vadd.f32 %v1799, %v1911
        %1913 = vdwg.mxu0
        %v1914 = vld [vmem:[#allocation3 + $0x10] sm:$0xff]
        %v1915 = vld [vmem:[#allocation3 + $0x18] sm:$0xff]
        %v1916 = vld [vmem:[#allocation3 + $0x20] sm:$0xff]
        %v1917 = vld [vmem:[#allocation3 + $0x28] sm:$0xff]
        %v1918 = vld [vmem:[#allocation3 + $0x30] sm:$0xff]
        %v1919 = vld [vmem:[#allocation3 + $0x38] sm:$0xff]
        %v1920 = vld [vmem:[#allocation3 + $0x40] sm:$0xff]
        %v1921 = vld [vmem:[#allocation3 + $0x48] sm:$0xff]
        %v1922 = vld [vmem:[#allocation3 + $0x50] sm:$0xff]
        %v1923 = vld [vmem:[#allocation3 + $0x58] sm:$0xff]
        %v1924 = vld [vmem:[#allocation3 + $0x60] sm:$0xff]
        %v1925 = vld [vmem:[#allocation3 + $0x68] sm:$0xff]
        %v1926 = vld [vmem:[#allocation3 + $0x70] sm:$0xff]
        %v1927 = vld [vmem:[#allocation3 + $0x78] sm:$0xff]
        %v1928 = vld [vmem:[#allocation3 + $0x80] sm:$0xff]
        %v1929 = vld [vmem:[#allocation3 + $0x88] sm:$0xff]
        %s1930 = scalar_lea.vmem %s10, 32
        %v1931 = vld [vmem:[%s1930] sm:$0xff]
        %v1932 = vld [vmem:[%s1930 + $0x8] sm:$0xff]
        %v1933 = vld [vmem:[%s1930 + $0x10] sm:$0xff]
        %v1934 = vld [vmem:[%s1930 + $0x18] sm:$0xff]
        %v1936 = vsel %vm1225, %v1914, 0
        %v1939 = vsel %vm1225, %v1915, 0
        %v1942 = vsel %vm1225, %v1916, 0
        %v1945 = vsel %vm1225, %v1917, 0
        %v1948 = vsel %vm1225, %v1918, 0
        %v1951 = vsel %vm1225, %v1919, 0
        %v1954 = vsel %vm1225, %v1920, 0
        %v1957 = vsel %vm1225, %v1921, 0
        %v1960 = vsel %vm1225, %v1922, 0
        %v1963 = vsel %vm1225, %v1923, 0
        %v1966 = vsel %vm1225, %v1924, 0
        %v1969 = vsel %vm1225, %v1925, 0
        %v1972 = vsel %vm1225, %v1926, 0
        %v1975 = vsel %vm1225, %v1927, 0
        %v1978 = vsel %vm1225, %v1928, 0
        %v1981 = vsel %vm1225, %v1929, 0
        %1983 = vmatpush.msra.mxu0 0.0
        %1984 = vmatpush.msra.mxu0 0.0
        %1985 = vmatpush.msra.mxu0 0.0
        %1986 = vmatpush.msra.mxu0 0.0
        %1987 = vmatpush.msra.mxu0 0.0
        %1988 = vmatpush.msra.mxu0 0.0
        %1989 = vmatpush.msra.mxu0 0.0
        %1990 = vmatpush.msra.mxu0 0.0
        %1991 = vmatpush.msra.mxu0 0.0
        %1992 = vmatpush.msra.mxu0 0.0
        %1993 = vmatpush.msra.mxu0 0.0
        %1994 = vmatpush.msra.mxu0 0.0
        %1995 = vmatpush.msra.mxu0 %v1934
        %1996 = vmatpush.msra.mxu0 %v1933
        %1997 = vmatpush.msra.mxu0 %v1932
        %1998 = vmatpush.msra.mxu0 %v1931
        %1999 = vmatmul.f32.gmra.mxu0 %v1936
        %v2000 = vpop.f32.mrf.mxu0
        %v2001 = vadd.f32 0.0, %v2000
        %2002 = vmatmul.f32.gmra.mxu0 %v1939
        %v2003 = vpop.f32.mrf.mxu0
        %v2004 = vadd.f32 0.0, %v2003
        %2005 = vmatmul.f32.gmra.mxu0 %v1942
        %v2006 = vpop.f32.mrf.mxu0
        %v2007 = vadd.f32 0.0, %v2006
        %2008 = vmatmul.f32.gmra.mxu0 %v1945
        %v2009 = vpop.f32.mrf.mxu0
        %v2010 = vadd.f32 0.0, %v2009
        %2011 = vmatmul.f32.gmra.mxu0 %v1948
        %v2012 = vpop.f32.mrf.mxu0
        %v2013 = vadd.f32 0.0, %v2012
        %2014 = vmatmul.f32.gmra.mxu0 %v1951
        %v2015 = vpop.f32.mrf.mxu0
        %v2016 = vadd.f32 0.0, %v2015
        %2017 = vmatmul.f32.gmra.mxu0 %v1954
        %v2018 = vpop.f32.mrf.mxu0
        %v2019 = vadd.f32 0.0, %v2018
        %2020 = vmatmul.f32.gmra.mxu0 %v1957
        %v2021 = vpop.f32.mrf.mxu0
        %v2022 = vadd.f32 0.0, %v2021
        %2023 = vmatmul.f32.gmra.mxu0 %v1960
        %v2024 = vpop.f32.mrf.mxu0
        %v2025 = vadd.f32 0.0, %v2024
        %2026 = vmatmul.f32.gmra.mxu0 %v1963
        %v2027 = vpop.f32.mrf.mxu0
        %v2028 = vadd.f32 0.0, %v2027
        %2029 = vmatmul.f32.gmra.mxu0 %v1966
        %v2030 = vpop.f32.mrf.mxu0
        %v2031 = vadd.f32 0.0, %v2030
        %2032 = vmatmul.f32.gmra.mxu0 %v1969
        %v2033 = vpop.f32.mrf.mxu0
        %v2034 = vadd.f32 0.0, %v2033
        %2035 = vmatmul.f32.gmra.mxu0 %v1972
        %v2036 = vpop.f32.mrf.mxu0
        %v2037 = vadd.f32 0.0, %v2036
        %2038 = vmatmul.f32.gmra.mxu0 %v1975
        %v2039 = vpop.f32.mrf.mxu0
        %v2040 = vadd.f32 0.0, %v2039
        %2041 = vmatmul.f32.gmra.mxu0 %v1978
        %v2042 = vpop.f32.mrf.mxu0
        %v2043 = vadd.f32 0.0, %v2042
        %2044 = vmatmul.f32.gmra.mxu0 %v1981
        %v2045 = vpop.f32.mrf.mxu0
        %v2046 = vadd.f32 0.0, %v2045
        %2047 = vdwg.mxu0
        %v2048 = vadd.f32 %v1867, %v2001
        %v2049 = vadd.f32 %v1870, %v2004
        %v2050 = vadd.f32 %v1873, %v2007
        %v2051 = vadd.f32 %v1876, %v2010
        %v2052 = vadd.f32 %v1879, %v2013
        %v2053 = vadd.f32 %v1882, %v2016
        %v2054 = vadd.f32 %v1885, %v2019
        %v2055 = vadd.f32 %v1888, %v2022
        %v2056 = vadd.f32 %v1891, %v2025
        %v2057 = vadd.f32 %v1894, %v2028
        %v2058 = vadd.f32 %v1897, %v2031
        %v2059 = vadd.f32 %v1900, %v2034
        %v2060 = vadd.f32 %v1903, %v2037
        %v2061 = vadd.f32 %v1906, %v2040
        %v2062 = vadd.f32 %v1909, %v2043
        %v2063 = vadd.f32 %v1912, %v2046
        %v2064 = vld [vmem:[#allocation4 + $0x10] sm:$0xff]
        %v2065 = vld [vmem:[#allocation4 + $0x18] sm:$0xff]
        %v2066 = vld [vmem:[#allocation4 + $0x20] sm:$0xff]
        %v2067 = vld [vmem:[#allocation4 + $0x28] sm:$0xff]
        %v2068 = vld [vmem:[#allocation4 + $0x30] sm:$0xff]
        %v2069 = vld [vmem:[#allocation4 + $0x38] sm:$0xff]
        %v2070 = vld [vmem:[#allocation4 + $0x40] sm:$0xff]
        %v2071 = vld [vmem:[#allocation4 + $0x48] sm:$0xff]
        %v2072 = vld [vmem:[#allocation4 + $0x50] sm:$0xff]
        %v2073 = vld [vmem:[#allocation4 + $0x58] sm:$0xff]
        %v2074 = vld [vmem:[#allocation4 + $0x60] sm:$0xff]
        %v2075 = vld [vmem:[#allocation4 + $0x68] sm:$0xff]
        %v2076 = vld [vmem:[#allocation4 + $0x70] sm:$0xff]
        %v2077 = vld [vmem:[#allocation4 + $0x78] sm:$0xff]
        %v2078 = vld [vmem:[#allocation4 + $0x80] sm:$0xff]
        %v2079 = vld [vmem:[#allocation4 + $0x88] sm:$0xff]
        %s2080 = scalar_lea.vmem %s11, 64
        %v2081 = vld [vmem:[%s2080] sm:$0xff]
        %v2082 = vld [vmem:[%s2080 + $0x8] sm:$0xff]
        %v2083 = vld [vmem:[%s2080 + $0x10] sm:$0xff]
        %v2084 = vld [vmem:[%s2080 + $0x18] sm:$0xff]
        %v2085 = vld [vmem:[%s2080 + $0x20] sm:$0xff]
        %v2086 = vld [vmem:[%s2080 + $0x28] sm:$0xff]
        %v2087 = vld [vmem:[%s2080 + $0x30] sm:$0xff]
        %v2088 = vld [vmem:[%s2080 + $0x38] sm:$0xff]
        %v2090 = vsel %vm1102, %v2064, 0
        %v2093 = vsel %vm1102, %v2065, 0
        %v2096 = vsel %vm1102, %v2066, 0
        %v2099 = vsel %vm1102, %v2067, 0
        %v2102 = vsel %vm1102, %v2068, 0
        %v2105 = vsel %vm1102, %v2069, 0
        %v2108 = vsel %vm1102, %v2070, 0
        %v2111 = vsel %vm1102, %v2071, 0
        %v2114 = vsel %vm1102, %v2072, 0
        %v2117 = vsel %vm1102, %v2073, 0
        %v2120 = vsel %vm1102, %v2074, 0
        %v2123 = vsel %vm1102, %v2075, 0
        %v2126 = vsel %vm1102, %v2076, 0
        %v2129 = vsel %vm1102, %v2077, 0
        %v2132 = vsel %vm1102, %v2078, 0
        %v2135 = vsel %vm1102, %v2079, 0
        %2137 = vmatpush.msra.mxu0 0.0
        %2138 = vmatpush.msra.mxu0 0.0
        %2139 = vmatpush.msra.mxu0 0.0
        %2140 = vmatpush.msra.mxu0 0.0
        %2141 = vmatpush.msra.mxu0 0.0
        %2142 = vmatpush.msra.mxu0 0.0
        %2143 = vmatpush.msra.mxu0 0.0
        %2144 = vmatpush.msra.mxu0 0.0
        %2145 = vmatpush.msra.mxu0 %v2088
        %2146 = vmatpush.msra.mxu0 %v2087
        %2147 = vmatpush.msra.mxu0 %v2086
        %2148 = vmatpush.msra.mxu0 %v2085
        %2149 = vmatpush.msra.mxu0 %v2084
        %2150 = vmatpush.msra.mxu0 %v2083
        %2151 = vmatpush.msra.mxu0 %v2082
        %2152 = vmatpush.msra.mxu0 %v2081
        %2153 = vmatmul.f32.gmra.mxu0 %v2090
        %v2154 = vpop.f32.mrf.mxu0
        %v2155 = vadd.f32 0.0, %v2154
        %2156 = vmatmul.f32.gmra.mxu0 %v2093
        %v2157 = vpop.f32.mrf.mxu0
        %v2158 = vadd.f32 0.0, %v2157
        %2159 = vmatmul.f32.gmra.mxu0 %v2096
        %v2160 = vpop.f32.mrf.mxu0
        %v2161 = vadd.f32 0.0, %v2160
        %2162 = vmatmul.f32.gmra.mxu0 %v2099
        %v2163 = vpop.f32.mrf.mxu0
        %v2164 = vadd.f32 0.0, %v2163
        %2165 = vmatmul.f32.gmra.mxu0 %v2102
        %v2166 = vpop.f32.mrf.mxu0
        %v2167 = vadd.f32 0.0, %v2166
        %2168 = vmatmul.f32.gmra.mxu0 %v2105
        %v2169 = vpop.f32.mrf.mxu0
        %v2170 = vadd.f32 0.0, %v2169
        %2171 = vmatmul.f32.gmra.mxu0 %v2108
        %v2172 = vpop.f32.mrf.mxu0
        %v2173 = vadd.f32 0.0, %v2172
        %2174 = vmatmul.f32.gmra.mxu0 %v2111
        %v2175 = vpop.f32.mrf.mxu0
        %v2176 = vadd.f32 0.0, %v2175
        %2177 = vmatmul.f32.gmra.mxu0 %v2114
        %v2178 = vpop.f32.mrf.mxu0
        %v2179 = vadd.f32 0.0, %v2178
        %2180 = vmatmul.f32.gmra.mxu0 %v2117
        %v2181 = vpop.f32.mrf.mxu0
        %v2182 = vadd.f32 0.0, %v2181
        %2183 = vmatmul.f32.gmra.mxu0 %v2120
        %v2184 = vpop.f32.mrf.mxu0
        %v2185 = vadd.f32 0.0, %v2184
        %2186 = vmatmul.f32.gmra.mxu0 %v2123
        %v2187 = vpop.f32.mrf.mxu0
        %v2188 = vadd.f32 0.0, %v2187
        %2189 = vmatmul.f32.gmra.mxu0 %v2126
        %v2190 = vpop.f32.mrf.mxu0
        %v2191 = vadd.f32 0.0, %v2190
        %2192 = vmatmul.f32.gmra.mxu0 %v2129
        %v2193 = vpop.f32.mrf.mxu0
        %v2194 = vadd.f32 0.0, %v2193
        %2195 = vmatmul.f32.gmra.mxu0 %v2132
        %v2196 = vpop.f32.mrf.mxu0
        %v2197 = vadd.f32 0.0, %v2196
        %2198 = vmatmul.f32.gmra.mxu0 %v2135
        %v2199 = vpop.f32.mrf.mxu0
        %v2200 = vadd.f32 0.0, %v2199
        %2201 = vdwg.mxu0
        %v2202 = vadd.f32 %v2048, %v2155
        %v2203 = vadd.f32 %v2049, %v2158
        %v2204 = vadd.f32 %v2050, %v2161
        %v2205 = vadd.f32 %v2051, %v2164
        %v2206 = vadd.f32 %v2052, %v2167
        %v2207 = vadd.f32 %v2053, %v2170
        %v2208 = vadd.f32 %v2054, %v2173
        %v2209 = vadd.f32 %v2055, %v2176
        %v2210 = vadd.f32 %v2056, %v2179
        %v2211 = vadd.f32 %v2057, %v2182
        %v2212 = vadd.f32 %v2058, %v2185
        %v2213 = vadd.f32 %v2059, %v2188
        %v2214 = vadd.f32 %v2060, %v2191
        %v2215 = vadd.f32 %v2061, %v2194
        %v2216 = vadd.f32 %v2062, %v2197
        %v2217 = vadd.f32 %v2063, %v2200
        %v2218 = vld [vmem:[#allocation3 + $0x20] sm:$0xff]
        %v2219 = vld [vmem:[#allocation3 + $0x28] sm:$0xff]
        %v2220 = vld [vmem:[#allocation3 + $0x30] sm:$0xff]
        %v2221 = vld [vmem:[#allocation3 + $0x38] sm:$0xff]
        %v2222 = vld [vmem:[#allocation3 + $0x40] sm:$0xff]
        %v2223 = vld [vmem:[#allocation3 + $0x48] sm:$0xff]
        %v2224 = vld [vmem:[#allocation3 + $0x50] sm:$0xff]
        %v2225 = vld [vmem:[#allocation3 + $0x58] sm:$0xff]
        %v2226 = vld [vmem:[#allocation3 + $0x60] sm:$0xff]
        %v2227 = vld [vmem:[#allocation3 + $0x68] sm:$0xff]
        %v2228 = vld [vmem:[#allocation3 + $0x70] sm:$0xff]
        %v2229 = vld [vmem:[#allocation3 + $0x78] sm:$0xff]
        %v2230 = vld [vmem:[#allocation3 + $0x80] sm:$0xff]
        %v2231 = vld [vmem:[#allocation3 + $0x88] sm:$0xff]
        %v2232 = vld [vmem:[#allocation3 + $0x90] sm:$0xff]
        %v2233 = vld [vmem:[#allocation3 + $0x98] sm:$0xff]
        %s2234 = scalar_lea.vmem %s10, 64
        %v2235 = vld [vmem:[%s2234] sm:$0xff]
        %v2236 = vld [vmem:[%s2234 + $0x8] sm:$0xff]
        %v2237 = vld [vmem:[%s2234 + $0x10] sm:$0xff]
        %v2238 = vld [vmem:[%s2234 + $0x18] sm:$0xff]
        %v2240 = vsel %vm1225, %v2218, 0
        %v2243 = vsel %vm1225, %v2219, 0
        %v2246 = vsel %vm1225, %v2220, 0
        %v2249 = vsel %vm1225, %v2221, 0
        %v2252 = vsel %vm1225, %v2222, 0
        %v2255 = vsel %vm1225, %v2223, 0
        %v2258 = vsel %vm1225, %v2224, 0
        %v2261 = vsel %vm1225, %v2225, 0
        %v2264 = vsel %vm1225, %v2226, 0
        %v2267 = vsel %vm1225, %v2227, 0
        %v2270 = vsel %vm1225, %v2228, 0
        %v2273 = vsel %vm1225, %v2229, 0
        %v2276 = vsel %vm1225, %v2230, 0
        %v2279 = vsel %vm1225, %v2231, 0
        %v2282 = vsel %vm1225, %v2232, 0
        %v2285 = vsel %vm1225, %v2233, 0
        %2287 = vmatpush.msra.mxu0 0.0
        %2288 = vmatpush.msra.mxu0 0.0
        %2289 = vmatpush.msra.mxu0 0.0
        %2290 = vmatpush.msra.mxu0 0.0
        %2291 = vmatpush.msra.mxu0 0.0
        %2292 = vmatpush.msra.mxu0 0.0
        %2293 = vmatpush.msra.mxu0 0.0
        %2294 = vmatpush.msra.mxu0 0.0
        %2295 = vmatpush.msra.mxu0 0.0
        %2296 = vmatpush.msra.mxu0 0.0
        %2297 = vmatpush.msra.mxu0 0.0
        %2298 = vmatpush.msra.mxu0 0.0
        %2299 = vmatpush.msra.mxu0 %v2238
        %2300 = vmatpush.msra.mxu0 %v2237
        %2301 = vmatpush.msra.mxu0 %v2236
        %2302 = vmatpush.msra.mxu0 %v2235
        %2303 = vmatmul.f32.gmra.mxu0 %v2240
        %v2304 = vpop.f32.mrf.mxu0
        %v2305 = vadd.f32 0.0, %v2304
        %2306 = vmatmul.f32.gmra.mxu0 %v2243
        %v2307 = vpop.f32.mrf.mxu0
        %v2308 = vadd.f32 0.0, %v2307
        %2309 = vmatmul.f32.gmra.mxu0 %v2246
        %v2310 = vpop.f32.mrf.mxu0
        %v2311 = vadd.f32 0.0, %v2310
        %2312 = vmatmul.f32.gmra.mxu0 %v2249
        %v2313 = vpop.f32.mrf.mxu0
        %v2314 = vadd.f32 0.0, %v2313
        %2315 = vmatmul.f32.gmra.mxu0 %v2252
        %v2316 = vpop.f32.mrf.mxu0
        %v2317 = vadd.f32 0.0, %v2316
        %2318 = vmatmul.f32.gmra.mxu0 %v2255
        %v2319 = vpop.f32.mrf.mxu0
        %v2320 = vadd.f32 0.0, %v2319
        %2321 = vmatmul.f32.gmra.mxu0 %v2258
        %v2322 = vpop.f32.mrf.mxu0
        %v2323 = vadd.f32 0.0, %v2322
        %2324 = vmatmul.f32.gmra.mxu0 %v2261
        %v2325 = vpop.f32.mrf.mxu0
        %v2326 = vadd.f32 0.0, %v2325
        %2327 = vmatmul.f32.gmra.mxu0 %v2264
        %v2328 = vpop.f32.mrf.mxu0
        %v2329 = vadd.f32 0.0, %v2328
        %2330 = vmatmul.f32.gmra.mxu0 %v2267
        %v2331 = vpop.f32.mrf.mxu0
        %v2332 = vadd.f32 0.0, %v2331
        %2333 = vmatmul.f32.gmra.mxu0 %v2270
        %v2334 = vpop.f32.mrf.mxu0
        %v2335 = vadd.f32 0.0, %v2334
        %2336 = vmatmul.f32.gmra.mxu0 %v2273
        %v2337 = vpop.f32.mrf.mxu0
        %v2338 = vadd.f32 0.0, %v2337
        %2339 = vmatmul.f32.gmra.mxu0 %v2276
        %v2340 = vpop.f32.mrf.mxu0
        %v2341 = vadd.f32 0.0, %v2340
        %2342 = vmatmul.f32.gmra.mxu0 %v2279
        %v2343 = vpop.f32.mrf.mxu0
        %v2344 = vadd.f32 0.0, %v2343
        %2345 = vmatmul.f32.gmra.mxu0 %v2282
        %v2346 = vpop.f32.mrf.mxu0
        %v2347 = vadd.f32 0.0, %v2346
        %2348 = vmatmul.f32.gmra.mxu0 %v2285
        %v2349 = vpop.f32.mrf.mxu0
        %v2350 = vadd.f32 0.0, %v2349
        %2351 = vdwg.mxu0
        %v2352 = vadd.f32 %v2202, %v2305
        %v2353 = vadd.f32 %v2203, %v2308
        %v2354 = vadd.f32 %v2204, %v2311
        %v2355 = vadd.f32 %v2205, %v2314
        %v2356 = vadd.f32 %v2206, %v2317
        %v2357 = vadd.f32 %v2207, %v2320
        %v2358 = vadd.f32 %v2208, %v2323
        %v2359 = vadd.f32 %v2209, %v2326
        %v2360 = vadd.f32 %v2210, %v2329
        %v2361 = vadd.f32 %v2211, %v2332
        %v2362 = vadd.f32 %v2212, %v2335
        %v2363 = vadd.f32 %v2213, %v2338
        %v2364 = vadd.f32 %v2214, %v2341
        %v2365 = vadd.f32 %v2215, %v2344
        %v2366 = vadd.f32 %v2216, %v2347
        %v2367 = vadd.f32 %v2217, %v2350
        %v2368 = vld [vmem:[#allocation4 + $0x20] sm:$0xff]
        %v2369 = vld [vmem:[#allocation4 + $0x28] sm:$0xff]
        %v2370 = vld [vmem:[#allocation4 + $0x30] sm:$0xff]
        %v2371 = vld [vmem:[#allocation4 + $0x38] sm:$0xff]
        %v2372 = vld [vmem:[#allocation4 + $0x40] sm:$0xff]
        %v2373 = vld [vmem:[#allocation4 + $0x48] sm:$0xff]
        %v2374 = vld [vmem:[#allocation4 + $0x50] sm:$0xff]
        %v2375 = vld [vmem:[#allocation4 + $0x58] sm:$0xff]
        %v2376 = vld [vmem:[#allocation4 + $0x60] sm:$0xff]
        %v2377 = vld [vmem:[#allocation4 + $0x68] sm:$0xff]
        %v2378 = vld [vmem:[#allocation4 + $0x70] sm:$0xff]
        %v2379 = vld [vmem:[#allocation4 + $0x78] sm:$0xff]
        %v2380 = vld [vmem:[#allocation4 + $0x80] sm:$0xff]
        %v2381 = vld [vmem:[#allocation4 + $0x88] sm:$0xff]
        %v2382 = vld [vmem:[#allocation4 + $0x90] sm:$0xff]
        %v2383 = vld [vmem:[#allocation4 + $0x98] sm:$0xff]
        %s2384 = scalar_lea.vmem %s11, 128
        %v2385 = vld [vmem:[%s2384] sm:$0xff]
        %v2386 = vld [vmem:[%s2384 + $0x8] sm:$0xff]
        %v2387 = vld [vmem:[%s2384 + $0x10] sm:$0xff]
        %v2388 = vld [vmem:[%s2384 + $0x18] sm:$0xff]
        %v2389 = vld [vmem:[%s2384 + $0x20] sm:$0xff]
        %v2390 = vld [vmem:[%s2384 + $0x28] sm:$0xff]
        %v2391 = vld [vmem:[%s2384 + $0x30] sm:$0xff]
        %v2392 = vld [vmem:[%s2384 + $0x38] sm:$0xff]
        %v2394 = vsel %vm1102, %v2368, 0
        %v2397 = vsel %vm1102, %v2369, 0
        %v2400 = vsel %vm1102, %v2370, 0
        %v2403 = vsel %vm1102, %v2371, 0
        %v2406 = vsel %vm1102, %v2372, 0
        %v2409 = vsel %vm1102, %v2373, 0
        %v2412 = vsel %vm1102, %v2374, 0
        %v2415 = vsel %vm1102, %v2375, 0
        %v2418 = vsel %vm1102, %v2376, 0
        %v2421 = vsel %vm1102, %v2377, 0
        %v2424 = vsel %vm1102, %v2378, 0
        %v2427 = vsel %vm1102, %v2379, 0
        %v2430 = vsel %vm1102, %v2380, 0
        %v2433 = vsel %vm1102, %v2381, 0
        %v2436 = vsel %vm1102, %v2382, 0
        %v2439 = vsel %vm1102, %v2383, 0
        %2441 = vmatpush.msra.mxu0 0.0
        %2442 = vmatpush.msra.mxu0 0.0
        %2443 = vmatpush.msra.mxu0 0.0
        %2444 = vmatpush.msra.mxu0 0.0
        %2445 = vmatpush.msra.mxu0 0.0
        %2446 = vmatpush.msra.mxu0 0.0
        %2447 = vmatpush.msra.mxu0 0.0
        %2448 = vmatpush.msra.mxu0 0.0
        %2449 = vmatpush.msra.mxu0 %v2392
        %2450 = vmatpush.msra.mxu0 %v2391
        %2451 = vmatpush.msra.mxu0 %v2390
        %2452 = vmatpush.msra.mxu0 %v2389
        %2453 = vmatpush.msra.mxu0 %v2388
        %2454 = vmatpush.msra.mxu0 %v2387
        %2455 = vmatpush.msra.mxu0 %v2386
        %2456 = vmatpush.msra.mxu0 %v2385
        %2457 = vmatmul.f32.gmra.mxu0 %v2394
        %v2458 = vpop.f32.mrf.mxu0
        %v2459 = vadd.f32 0.0, %v2458
        %2460 = vmatmul.f32.gmra.mxu0 %v2397
        %v2461 = vpop.f32.mrf.mxu0
        %v2462 = vadd.f32 0.0, %v2461
        %2463 = vmatmul.f32.gmra.mxu0 %v2400
        %v2464 = vpop.f32.mrf.mxu0
        %v2465 = vadd.f32 0.0, %v2464
        %2466 = vmatmul.f32.gmra.mxu0 %v2403
        %v2467 = vpop.f32.mrf.mxu0
        %v2468 = vadd.f32 0.0, %v2467
        %2469 = vmatmul.f32.gmra.mxu0 %v2406
        %v2470 = vpop.f32.mrf.mxu0
        %v2471 = vadd.f32 0.0, %v2470
        %2472 = vmatmul.f32.gmra.mxu0 %v2409
        %v2473 = vpop.f32.mrf.mxu0
        %v2474 = vadd.f32 0.0, %v2473
        %2475 = vmatmul.f32.gmra.mxu0 %v2412
        %v2476 = vpop.f32.mrf.mxu0
        %v2477 = vadd.f32 0.0, %v2476
        %2478 = vmatmul.f32.gmra.mxu0 %v2415
        %v2479 = vpop.f32.mrf.mxu0
        %v2480 = vadd.f32 0.0, %v2479
        %2481 = vmatmul.f32.gmra.mxu0 %v2418
        %v2482 = vpop.f32.mrf.mxu0
        %v2483 = vadd.f32 0.0, %v2482
        %2484 = vmatmul.f32.gmra.mxu0 %v2421
        %v2485 = vpop.f32.mrf.mxu0
        %v2486 = vadd.f32 0.0, %v2485
        %2487 = vmatmul.f32.gmra.mxu0 %v2424
        %v2488 = vpop.f32.mrf.mxu0
        %v2489 = vadd.f32 0.0, %v2488
        %2490 = vmatmul.f32.gmra.mxu0 %v2427
        %v2491 = vpop.f32.mrf.mxu0
        %v2492 = vadd.f32 0.0, %v2491
        %2493 = vmatmul.f32.gmra.mxu0 %v2430
        %v2494 = vpop.f32.mrf.mxu0
        %v2495 = vadd.f32 0.0, %v2494
        %2496 = vmatmul.f32.gmra.mxu0 %v2433
        %v2497 = vpop.f32.mrf.mxu0
        %v2498 = vadd.f32 0.0, %v2497
        %2499 = vmatmul.f32.gmra.mxu0 %v2436
        %v2500 = vpop.f32.mrf.mxu0
        %v2501 = vadd.f32 0.0, %v2500
        %2502 = vmatmul.f32.gmra.mxu0 %v2439
        %v2503 = vpop.f32.mrf.mxu0
        %v2504 = vadd.f32 0.0, %v2503
        %2505 = vdwg.mxu0
        %v2506 = vadd.f32 %v2352, %v2459
        %v2507 = vadd.f32 %v2353, %v2462
        %v2508 = vadd.f32 %v2354, %v2465
        %v2509 = vadd.f32 %v2355, %v2468
        %v2510 = vadd.f32 %v2356, %v2471
        %v2511 = vadd.f32 %v2357, %v2474
        %v2512 = vadd.f32 %v2358, %v2477
        %v2513 = vadd.f32 %v2359, %v2480
        %v2514 = vadd.f32 %v2360, %v2483
        %v2515 = vadd.f32 %v2361, %v2486
        %v2516 = vadd.f32 %v2362, %v2489
        %v2517 = vadd.f32 %v2363, %v2492
        %v2518 = vadd.f32 %v2364, %v2495
        %v2519 = vadd.f32 %v2365, %v2498
        %v2520 = vadd.f32 %v2366, %v2501
        %v2521 = vadd.f32 %v2367, %v2504
        %v2522 = vld [vmem:[%s12] sm:$0x1]
        %v2524 = vperm.slane %v2522, 0
        %v2526 = vadd.f32 %v2506, %v2524
        %v2527 = vadd.f32 %v2507, %v2524
        %v2528 = vadd.f32 %v2508, %v2524
        %v2529 = vadd.f32 %v2509, %v2524
        %v2530 = vadd.f32 %v2510, %v2524
        %v2531 = vadd.f32 %v2511, %v2524
        %v2532 = vadd.f32 %v2512, %v2524
        %v2533 = vadd.f32 %v2513, %v2524
        %v2534 = vadd.f32 %v2514, %v2524
        %v2535 = vadd.f32 %v2515, %v2524
        %v2536 = vadd.f32 %v2516, %v2524
        %v2537 = vadd.f32 %v2517, %v2524
        %v2538 = vadd.f32 %v2518, %v2524
        %v2539 = vadd.f32 %v2519, %v2524
        %v2540 = vadd.f32 %v2520, %v2524
        %v2541 = vadd.f32 %v2521, %v2524
        %v2542 = vld [vmem:[%s13] sm:$0xff]
        %v2543 = vld [vmem:[%s13 + $0x8] sm:$0xff]
        %v2544 = vld [vmem:[%s13 + $0x10] sm:$0xff]
        %v2545 = vld [vmem:[%s13 + $0x18] sm:$0xff]
        %v2546 = vld [vmem:[%s13 + $0x20] sm:$0xff]
        %v2547 = vld [vmem:[%s13 + $0x28] sm:$0xff]
        %v2548 = vld [vmem:[%s13 + $0x30] sm:$0xff]
        %v2549 = vld [vmem:[%s13 + $0x38] sm:$0xff]
        %s2550 = scalar_lea.vmem %s13, 64
        %v2551 = vld [vmem:[%s2550] sm:$0xff]
        %v2552 = vld [vmem:[%s2550 + $0x8] sm:$0xff]
        %v2553 = vld [vmem:[%s2550 + $0x10] sm:$0xff]
        %v2554 = vld [vmem:[%s2550 + $0x18] sm:$0xff]
        %v2555 = vld [vmem:[%s2550 + $0x20] sm:$0xff]
        %v2556 = vld [vmem:[%s2550 + $0x28] sm:$0xff]
        %v2557 = vld [vmem:[%s2550 + $0x30] sm:$0xff]
        %v2558 = vld [vmem:[%s2550 + $0x38] sm:$0xff]
        %v2560 = vsel %vm1225, %v2528, 0
        %v2563 = vsel %vm1225, %v2529, 0
        %2565 = vmatpush.msra.mxu0 0.0
        %2566 = vmatpush.msra.mxu0 0.0
        %2567 = vmatpush.msra.mxu0 0.0
        %2568 = vmatpush.msra.mxu0 0.0
        %2569 = vmatpush.msra.mxu0 0.0
        %2570 = vmatpush.msra.mxu0 0.0
        %2571 = vmatpush.msra.mxu0 0.0
        %2572 = vmatpush.msra.mxu0 0.0
        %2573 = vmatpush.msra.mxu0 0.0
        %2574 = vmatpush.msra.mxu0 0.0
        %2575 = vmatpush.msra.mxu0 0.0
        %2576 = vmatpush.msra.mxu0 0.0
        %2577 = vmatpush.msra.mxu0 %v2557
        %2578 = vmatpush.msra.mxu0 %v2555
        %2579 = vmatpush.msra.mxu0 %v2553
        %2580 = vmatpush.msra.mxu0 %v2551
        %2581 = vmatmul.f32.gmra.mxu0 %v2560
        %v2582 = vpop.f32.mrf.mxu0
        %v2583 = vadd.f32 0.0, %v2582
        %2584 = vmatmul.f32.gmra.mxu0 %v2563
        %v2585 = vpop.f32.mrf.mxu0
        %v2586 = vadd.f32 0.0, %v2585
        %2587 = vdwg.mxu0
        %2588 = vmatpush.msra.mxu0 0.0
        %2589 = vmatpush.msra.mxu0 0.0
        %2590 = vmatpush.msra.mxu0 0.0
        %2591 = vmatpush.msra.mxu0 0.0
        %2592 = vmatpush.msra.mxu0 0.0
        %2593 = vmatpush.msra.mxu0 0.0
        %2594 = vmatpush.msra.mxu0 0.0
        %2595 = vmatpush.msra.mxu0 0.0
        %2596 = vmatpush.msra.mxu0 0.0
        %2597 = vmatpush.msra.mxu0 0.0
        %2598 = vmatpush.msra.mxu0 0.0
        %2599 = vmatpush.msra.mxu0 0.0
        %2600 = vmatpush.msra.mxu0 %v2558
        %2601 = vmatpush.msra.mxu0 %v2556
        %2602 = vmatpush.msra.mxu0 %v2554
        %2603 = vmatpush.msra.mxu0 %v2552
        %2604 = vmatmul.f32.gmra.mxu0 %v2560
        %v2605 = vpop.f32.mrf.mxu0
        %v2606 = vadd.f32 0.0, %v2605
        %2607 = vmatmul.f32.gmra.mxu0 %v2563
        %v2608 = vpop.f32.mrf.mxu0
        %v2609 = vadd.f32 0.0, %v2608
        %2610 = vdwg.mxu0
        %s2611 = scalar_lea.vmem %s13, 128
        %v2612 = vld [vmem:[%s2611] sm:$0xff]
        %v2613 = vld [vmem:[%s2611 + $0x8] sm:$0xff]
        %v2614 = vld [vmem:[%s2611 + $0x10] sm:$0xff]
        %v2615 = vld [vmem:[%s2611 + $0x18] sm:$0xff]
        %v2616 = vld [vmem:[%s2611 + $0x20] sm:$0xff]
        %v2617 = vld [vmem:[%s2611 + $0x28] sm:$0xff]
        %v2618 = vld [vmem:[%s2611 + $0x30] sm:$0xff]
        %v2619 = vld [vmem:[%s2611 + $0x38] sm:$0xff]
        %s2620 = scalar_lea.vmem %s13, 192
        %v2621 = vld [vmem:[%s2620] sm:$0xff]
        %v2622 = vld [vmem:[%s2620 + $0x8] sm:$0xff]
        %v2623 = vld [vmem:[%s2620 + $0x10] sm:$0xff]
        %v2624 = vld [vmem:[%s2620 + $0x18] sm:$0xff]
        %v2625 = vld [vmem:[%s2620 + $0x20] sm:$0xff]
        %v2626 = vld [vmem:[%s2620 + $0x28] sm:$0xff]
        %v2627 = vld [vmem:[%s2620 + $0x30] sm:$0xff]
        %v2628 = vld [vmem:[%s2620 + $0x38] sm:$0xff]
        %v2630 = vsel %vm1225, %v2532, 0
        %v2633 = vsel %vm1225, %v2533, 0
        %2635 = vmatpush.msra.mxu0 0.0
        %2636 = vmatpush.msra.mxu0 0.0
        %2637 = vmatpush.msra.mxu0 0.0
        %2638 = vmatpush.msra.mxu0 0.0
        %2639 = vmatpush.msra.mxu0 0.0
        %2640 = vmatpush.msra.mxu0 0.0
        %2641 = vmatpush.msra.mxu0 0.0
        %2642 = vmatpush.msra.mxu0 0.0
        %2643 = vmatpush.msra.mxu0 0.0
        %2644 = vmatpush.msra.mxu0 0.0
        %2645 = vmatpush.msra.mxu0 0.0
        %2646 = vmatpush.msra.mxu0 0.0
        %2647 = vmatpush.msra.mxu0 %v2627
        %2648 = vmatpush.msra.mxu0 %v2625
        %2649 = vmatpush.msra.mxu0 %v2623
        %2650 = vmatpush.msra.mxu0 %v2621
        %2651 = vmatmul.f32.gmra.mxu0 %v2630
        %v2652 = vpop.f32.mrf.mxu0
        %v2653 = vadd.f32 0.0, %v2652
        %2654 = vmatmul.f32.gmra.mxu0 %v2633
        %v2655 = vpop.f32.mrf.mxu0
        %v2656 = vadd.f32 0.0, %v2655
        %2657 = vdwg.mxu0
        %2658 = vmatpush.msra.mxu0 0.0
        %2659 = vmatpush.msra.mxu0 0.0
        %2660 = vmatpush.msra.mxu0 0.0
        %2661 = vmatpush.msra.mxu0 0.0
        %2662 = vmatpush.msra.mxu0 0.0
        %2663 = vmatpush.msra.mxu0 0.0
        %2664 = vmatpush.msra.mxu0 0.0
        %2665 = vmatpush.msra.mxu0 0.0
        %2666 = vmatpush.msra.mxu0 0.0
        %2667 = vmatpush.msra.mxu0 0.0
        %2668 = vmatpush.msra.mxu0 0.0
        %2669 = vmatpush.msra.mxu0 0.0
        %2670 = vmatpush.msra.mxu0 %v2628
        %2671 = vmatpush.msra.mxu0 %v2626
        %2672 = vmatpush.msra.mxu0 %v2624
        %2673 = vmatpush.msra.mxu0 %v2622
        %2674 = vmatmul.f32.gmra.mxu0 %v2630
        %v2675 = vpop.f32.mrf.mxu0
        %v2676 = vadd.f32 0.0, %v2675
        %2677 = vmatmul.f32.gmra.mxu0 %v2633
        %v2678 = vpop.f32.mrf.mxu0
        %v2679 = vadd.f32 0.0, %v2678
        %2680 = vdwg.mxu0
        %s2681 = scalar_lea.vmem %s13, 256
        %v2682 = vld [vmem:[%s2681] sm:$0xff]
        %v2683 = vld [vmem:[%s2681 + $0x8] sm:$0xff]
        %v2684 = vld [vmem:[%s2681 + $0x10] sm:$0xff]
        %v2685 = vld [vmem:[%s2681 + $0x18] sm:$0xff]
        %v2686 = vld [vmem:[%s2681 + $0x20] sm:$0xff]
        %v2687 = vld [vmem:[%s2681 + $0x28] sm:$0xff]
        %v2688 = vld [vmem:[%s2681 + $0x30] sm:$0xff]
        %v2689 = vld [vmem:[%s2681 + $0x38] sm:$0xff]
        %s2690 = scalar_lea.vmem %s13, 320
        %v2691 = vld [vmem:[%s2690] sm:$0xff]
        %v2692 = vld [vmem:[%s2690 + $0x8] sm:$0xff]
        %v2693 = vld [vmem:[%s2690 + $0x10] sm:$0xff]
        %v2694 = vld [vmem:[%s2690 + $0x18] sm:$0xff]
        %v2695 = vld [vmem:[%s2690 + $0x20] sm:$0xff]
        %v2696 = vld [vmem:[%s2690 + $0x28] sm:$0xff]
        %v2697 = vld [vmem:[%s2690 + $0x30] sm:$0xff]
        %v2698 = vld [vmem:[%s2690 + $0x38] sm:$0xff]
        %v2700 = vsel %vm1225, %v2536, 0
        %v2703 = vsel %vm1225, %v2537, 0
        %2705 = vmatpush.msra.mxu0 0.0
        %2706 = vmatpush.msra.mxu0 0.0
        %2707 = vmatpush.msra.mxu0 0.0
        %2708 = vmatpush.msra.mxu0 0.0
        %2709 = vmatpush.msra.mxu0 0.0
        %2710 = vmatpush.msra.mxu0 0.0
        %2711 = vmatpush.msra.mxu0 0.0
        %2712 = vmatpush.msra.mxu0 0.0
        %2713 = vmatpush.msra.mxu0 0.0
        %2714 = vmatpush.msra.mxu0 0.0
        %2715 = vmatpush.msra.mxu0 0.0
        %2716 = vmatpush.msra.mxu0 0.0
        %2717 = vmatpush.msra.mxu0 %v2697
        %2718 = vmatpush.msra.mxu0 %v2695
        %2719 = vmatpush.msra.mxu0 %v2693
        %2720 = vmatpush.msra.mxu0 %v2691
        %2721 = vmatmul.f32.gmra.mxu0 %v2700
        %v2722 = vpop.f32.mrf.mxu0
        %v2723 = vadd.f32 0.0, %v2722
        %2724 = vmatmul.f32.gmra.mxu0 %v2703
        %v2725 = vpop.f32.mrf.mxu0
        %v2726 = vadd.f32 0.0, %v2725
        %2727 = vdwg.mxu0
        %2728 = vmatpush.msra.mxu0 0.0
        %2729 = vmatpush.msra.mxu0 0.0
        %2730 = vmatpush.msra.mxu0 0.0
        %2731 = vmatpush.msra.mxu0 0.0
        %2732 = vmatpush.msra.mxu0 0.0
        %2733 = vmatpush.msra.mxu0 0.0
        %2734 = vmatpush.msra.mxu0 0.0
        %2735 = vmatpush.msra.mxu0 0.0
        %2736 = vmatpush.msra.mxu0 0.0
        %2737 = vmatpush.msra.mxu0 0.0
        %2738 = vmatpush.msra.mxu0 0.0
        %2739 = vmatpush.msra.mxu0 0.0
        %2740 = vmatpush.msra.mxu0 %v2698
        %2741 = vmatpush.msra.mxu0 %v2696
        %2742 = vmatpush.msra.mxu0 %v2694
        %2743 = vmatpush.msra.mxu0 %v2692
        %2744 = vmatmul.f32.gmra.mxu0 %v2700
        %v2745 = vpop.f32.mrf.mxu0
        %v2746 = vadd.f32 0.0, %v2745
        %2747 = vmatmul.f32.gmra.mxu0 %v2703
        %v2748 = vpop.f32.mrf.mxu0
        %v2749 = vadd.f32 0.0, %v2748
        %2750 = vdwg.mxu0
        %s2751 = scalar_lea.vmem %s13, 384
        %v2752 = vld [vmem:[%s2751] sm:$0xff]
        %v2753 = vld [vmem:[%s2751 + $0x8] sm:$0xff]
        %v2754 = vld [vmem:[%s2751 + $0x10] sm:$0xff]
        %v2755 = vld [vmem:[%s2751 + $0x18] sm:$0xff]
        %v2756 = vld [vmem:[%s2751 + $0x20] sm:$0xff]
        %v2757 = vld [vmem:[%s2751 + $0x28] sm:$0xff]
        %v2758 = vld [vmem:[%s2751 + $0x30] sm:$0xff]
        %v2759 = vld [vmem:[%s2751 + $0x38] sm:$0xff]
        %s2760 = scalar_lea.vmem %s13, 448
        %v2761 = vld [vmem:[%s2760] sm:$0xff]
        %v2762 = vld [vmem:[%s2760 + $0x8] sm:$0xff]
        %v2763 = vld [vmem:[%s2760 + $0x10] sm:$0xff]
        %v2764 = vld [vmem:[%s2760 + $0x18] sm:$0xff]
        %v2765 = vld [vmem:[%s2760 + $0x20] sm:$0xff]
        %v2766 = vld [vmem:[%s2760 + $0x28] sm:$0xff]
        %v2767 = vld [vmem:[%s2760 + $0x30] sm:$0xff]
        %v2768 = vld [vmem:[%s2760 + $0x38] sm:$0xff]
        %v2770 = vsel %vm1225, %v2540, 0
        %v2773 = vsel %vm1225, %v2541, 0
        %2775 = vmatpush.msra.mxu0 0.0
        %2776 = vmatpush.msra.mxu0 0.0
        %2777 = vmatpush.msra.mxu0 0.0
        %2778 = vmatpush.msra.mxu0 0.0
        %2779 = vmatpush.msra.mxu0 0.0
        %2780 = vmatpush.msra.mxu0 0.0
        %2781 = vmatpush.msra.mxu0 0.0
        %2782 = vmatpush.msra.mxu0 0.0
        %2783 = vmatpush.msra.mxu0 0.0
        %2784 = vmatpush.msra.mxu0 0.0
        %2785 = vmatpush.msra.mxu0 0.0
        %2786 = vmatpush.msra.mxu0 0.0
        %2787 = vmatpush.msra.mxu0 %v2767
        %2788 = vmatpush.msra.mxu0 %v2765
        %2789 = vmatpush.msra.mxu0 %v2763
        %2790 = vmatpush.msra.mxu0 %v2761
        %2791 = vmatmul.f32.gmra.mxu0 %v2770
        %v2792 = vpop.f32.mrf.mxu0
        %v2793 = vadd.f32 0.0, %v2792
        %2794 = vmatmul.f32.gmra.mxu0 %v2773
        %v2795 = vpop.f32.mrf.mxu0
        %v2796 = vadd.f32 0.0, %v2795
        %2797 = vdwg.mxu0
        %2798 = vmatpush.msra.mxu0 0.0
        %2799 = vmatpush.msra.mxu0 0.0
        %2800 = vmatpush.msra.mxu0 0.0
        %2801 = vmatpush.msra.mxu0 0.0
        %2802 = vmatpush.msra.mxu0 0.0
        %2803 = vmatpush.msra.mxu0 0.0
        %2804 = vmatpush.msra.mxu0 0.0
        %2805 = vmatpush.msra.mxu0 0.0
        %2806 = vmatpush.msra.mxu0 0.0
        %2807 = vmatpush.msra.mxu0 0.0
        %2808 = vmatpush.msra.mxu0 0.0
        %2809 = vmatpush.msra.mxu0 0.0
        %2810 = vmatpush.msra.mxu0 %v2768
        %2811 = vmatpush.msra.mxu0 %v2766
        %2812 = vmatpush.msra.mxu0 %v2764
        %2813 = vmatpush.msra.mxu0 %v2762
        %2814 = vmatmul.f32.gmra.mxu0 %v2770
        %v2815 = vpop.f32.mrf.mxu0
        %v2816 = vadd.f32 0.0, %v2815
        %2817 = vmatmul.f32.gmra.mxu0 %v2773
        %v2818 = vpop.f32.mrf.mxu0
        %v2819 = vadd.f32 0.0, %v2818
        %2820 = vdwg.mxu0
        %v2822 = vsel %vm1225, %v2526, 0
        %v2825 = vsel %vm1225, %v2527, 0
        %2827 = vmatpush.msra.mxu0 0.0
        %2828 = vmatpush.msra.mxu0 0.0
        %2829 = vmatpush.msra.mxu0 0.0
        %2830 = vmatpush.msra.mxu0 0.0
        %2831 = vmatpush.msra.mxu0 0.0
        %2832 = vmatpush.msra.mxu0 0.0
        %2833 = vmatpush.msra.mxu0 0.0
        %2834 = vmatpush.msra.mxu0 0.0
        %2835 = vmatpush.msra.mxu0 0.0
        %2836 = vmatpush.msra.mxu0 0.0
        %2837 = vmatpush.msra.mxu0 0.0
        %2838 = vmatpush.msra.mxu0 0.0
        %2839 = vmatpush.msra.mxu0 %v2548
        %2840 = vmatpush.msra.mxu0 %v2546
        %2841 = vmatpush.msra.mxu0 %v2544
        %2842 = vmatpush.msra.mxu0 %v2542
        %2843 = vmatmul.f32.gmra.mxu0 %v2822
        %v2844 = vpop.f32.mrf.mxu0
        %v2845 = vadd.f32 %v2583, %v2844
        %2846 = vmatmul.f32.gmra.mxu0 %v2825
        %v2847 = vpop.f32.mrf.mxu0
        %v2848 = vadd.f32 %v2586, %v2847
        %2849 = vdwg.mxu0
        %2850 = vmatpush.msra.mxu0 0.0
        %2851 = vmatpush.msra.mxu0 0.0
        %2852 = vmatpush.msra.mxu0 0.0
        %2853 = vmatpush.msra.mxu0 0.0
        %2854 = vmatpush.msra.mxu0 0.0
        %2855 = vmatpush.msra.mxu0 0.0
        %2856 = vmatpush.msra.mxu0 0.0
        %2857 = vmatpush.msra.mxu0 0.0
        %2858 = vmatpush.msra.mxu0 0.0
        %2859 = vmatpush.msra.mxu0 0.0
        %2860 = vmatpush.msra.mxu0 0.0
        %2861 = vmatpush.msra.mxu0 0.0
        %2862 = vmatpush.msra.mxu0 %v2549
        %2863 = vmatpush.msra.mxu0 %v2547
        %2864 = vmatpush.msra.mxu0 %v2545
        %2865 = vmatpush.msra.mxu0 %v2543
        %2866 = vmatmul.f32.gmra.mxu0 %v2822
        %v2867 = vpop.f32.mrf.mxu0
        %v2868 = vadd.f32 %v2606, %v2867
        %2869 = vmatmul.f32.gmra.mxu0 %v2825
        %v2870 = vpop.f32.mrf.mxu0
        %v2871 = vadd.f32 %v2609, %v2870
        %2872 = vdwg.mxu0
        %v2874 = vsel %vm1225, %v2530, 0
        %v2877 = vsel %vm1225, %v2531, 0
        %2879 = vmatpush.msra.mxu0 0.0
        %2880 = vmatpush.msra.mxu0 0.0
        %2881 = vmatpush.msra.mxu0 0.0
        %2882 = vmatpush.msra.mxu0 0.0
        %2883 = vmatpush.msra.mxu0 0.0
        %2884 = vmatpush.msra.mxu0 0.0
        %2885 = vmatpush.msra.mxu0 0.0
        %2886 = vmatpush.msra.mxu0 0.0
        %2887 = vmatpush.msra.mxu0 0.0
        %2888 = vmatpush.msra.mxu0 0.0
        %2889 = vmatpush.msra.mxu0 0.0
        %2890 = vmatpush.msra.mxu0 0.0
        %2891 = vmatpush.msra.mxu0 %v2618
        %2892 = vmatpush.msra.mxu0 %v2616
        %2893 = vmatpush.msra.mxu0 %v2614
        %2894 = vmatpush.msra.mxu0 %v2612
        %2895 = vmatmul.f32.gmra.mxu0 %v2874
        %v2896 = vpop.f32.mrf.mxu0
        %v2897 = vadd.f32 %v2653, %v2896
        %2898 = vmatmul.f32.gmra.mxu0 %v2877
        %v2899 = vpop.f32.mrf.mxu0
        %v2900 = vadd.f32 %v2656, %v2899
        %2901 = vdwg.mxu0
        %2902 = vmatpush.msra.mxu0 0.0
        %2903 = vmatpush.msra.mxu0 0.0
        %2904 = vmatpush.msra.mxu0 0.0
        %2905 = vmatpush.msra.mxu0 0.0
        %2906 = vmatpush.msra.mxu0 0.0
        %2907 = vmatpush.msra.mxu0 0.0
        %2908 = vmatpush.msra.mxu0 0.0
        %2909 = vmatpush.msra.mxu0 0.0
        %2910 = vmatpush.msra.mxu0 0.0
        %2911 = vmatpush.msra.mxu0 0.0
        %2912 = vmatpush.msra.mxu0 0.0
        %2913 = vmatpush.msra.mxu0 0.0
        %2914 = vmatpush.msra.mxu0 %v2619
        %2915 = vmatpush.msra.mxu0 %v2617
        %2916 = vmatpush.msra.mxu0 %v2615
        %2917 = vmatpush.msra.mxu0 %v2613
        %2918 = vmatmul.f32.gmra.mxu0 %v2874
        %v2919 = vpop.f32.mrf.mxu0
        %v2920 = vadd.f32 %v2676, %v2919
        %2921 = vmatmul.f32.gmra.mxu0 %v2877
        %v2922 = vpop.f32.mrf.mxu0
        %v2923 = vadd.f32 %v2679, %v2922
        %2924 = vdwg.mxu0
        %v2926 = vsel %vm1225, %v2534, 0
        %v2929 = vsel %vm1225, %v2535, 0
        %2931 = vmatpush.msra.mxu0 0.0
        %2932 = vmatpush.msra.mxu0 0.0
        %2933 = vmatpush.msra.mxu0 0.0
        %2934 = vmatpush.msra.mxu0 0.0
        %2935 = vmatpush.msra.mxu0 0.0
        %2936 = vmatpush.msra.mxu0 0.0
        %2937 = vmatpush.msra.mxu0 0.0
        %2938 = vmatpush.msra.mxu0 0.0
        %2939 = vmatpush.msra.mxu0 0.0
        %2940 = vmatpush.msra.mxu0 0.0
        %2941 = vmatpush.msra.mxu0 0.0
        %2942 = vmatpush.msra.mxu0 0.0
        %2943 = vmatpush.msra.mxu0 %v2688
        %2944 = vmatpush.msra.mxu0 %v2686
        %2945 = vmatpush.msra.mxu0 %v2684
        %2946 = vmatpush.msra.mxu0 %v2682
        %2947 = vmatmul.f32.gmra.mxu0 %v2926
        %v2948 = vpop.f32.mrf.mxu0
        %v2949 = vadd.f32 %v2723, %v2948
        %2950 = vmatmul.f32.gmra.mxu0 %v2929
        %v2951 = vpop.f32.mrf.mxu0
        %v2952 = vadd.f32 %v2726, %v2951
        %2953 = vdwg.mxu0
        %2954 = vmatpush.msra.mxu0 0.0
        %2955 = vmatpush.msra.mxu0 0.0
        %2956 = vmatpush.msra.mxu0 0.0
        %2957 = vmatpush.msra.mxu0 0.0
        %2958 = vmatpush.msra.mxu0 0.0
        %2959 = vmatpush.msra.mxu0 0.0
        %2960 = vmatpush.msra.mxu0 0.0
        %2961 = vmatpush.msra.mxu0 0.0
        %2962 = vmatpush.msra.mxu0 0.0
        %2963 = vmatpush.msra.mxu0 0.0
        %2964 = vmatpush.msra.mxu0 0.0
        %2965 = vmatpush.msra.mxu0 0.0
        %2966 = vmatpush.msra.mxu0 %v2689
        %2967 = vmatpush.msra.mxu0 %v2687
        %2968 = vmatpush.msra.mxu0 %v2685
        %2969 = vmatpush.msra.mxu0 %v2683
        %2970 = vmatmul.f32.gmra.mxu0 %v2926
        %v2971 = vpop.f32.mrf.mxu0
        %v2972 = vadd.f32 %v2746, %v2971
        %2973 = vmatmul.f32.gmra.mxu0 %v2929
        %v2974 = vpop.f32.mrf.mxu0
        %v2975 = vadd.f32 %v2749, %v2974
        %2976 = vdwg.mxu0
        %v2978 = vsel %vm1225, %v2538, 0
        %v2981 = vsel %vm1225, %v2539, 0
        %2983 = vmatpush.msra.mxu0 0.0
        %2984 = vmatpush.msra.mxu0 0.0
        %2985 = vmatpush.msra.mxu0 0.0
        %2986 = vmatpush.msra.mxu0 0.0
        %2987 = vmatpush.msra.mxu0 0.0
        %2988 = vmatpush.msra.mxu0 0.0
        %2989 = vmatpush.msra.mxu0 0.0
        %2990 = vmatpush.msra.mxu0 0.0
        %2991 = vmatpush.msra.mxu0 0.0
        %2992 = vmatpush.msra.mxu0 0.0
        %2993 = vmatpush.msra.mxu0 0.0
        %2994 = vmatpush.msra.mxu0 0.0
        %2995 = vmatpush.msra.mxu0 %v2758
        %2996 = vmatpush.msra.mxu0 %v2756
        %2997 = vmatpush.msra.mxu0 %v2754
        %2998 = vmatpush.msra.mxu0 %v2752
        %2999 = vmatmul.f32.gmra.mxu0 %v2978
        %v3000 = vpop.f32.mrf.mxu0
        %v3001 = vadd.f32 %v2793, %v3000
        %3002 = vmatmul.f32.gmra.mxu0 %v2981
        %v3003 = vpop.f32.mrf.mxu0
        %v3004 = vadd.f32 %v2796, %v3003
        %3005 = vdwg.mxu0
        %3006 = vmatpush.msra.mxu0 0.0
        %3007 = vmatpush.msra.mxu0 0.0
        %3008 = vmatpush.msra.mxu0 0.0
        %3009 = vmatpush.msra.mxu0 0.0
        %3010 = vmatpush.msra.mxu0 0.0
        %3011 = vmatpush.msra.mxu0 0.0
        %3012 = vmatpush.msra.mxu0 0.0
        %3013 = vmatpush.msra.mxu0 0.0
        %3014 = vmatpush.msra.mxu0 0.0
        %3015 = vmatpush.msra.mxu0 0.0
        %3016 = vmatpush.msra.mxu0 0.0
        %3017 = vmatpush.msra.mxu0 0.0
        %3018 = vmatpush.msra.mxu0 %v2759
        %3019 = vmatpush.msra.mxu0 %v2757
        %3020 = vmatpush.msra.mxu0 %v2755
        %3021 = vmatpush.msra.mxu0 %v2753
        %3022 = vmatmul.f32.gmra.mxu0 %v2978
        %v3023 = vpop.f32.mrf.mxu0
        %v3024 = vadd.f32 %v2816, %v3023
        %3025 = vmatmul.f32.gmra.mxu0 %v2981
        %v3026 = vpop.f32.mrf.mxu0
        %v3027 = vadd.f32 %v2819, %v3026
        %3028 = vdwg.mxu0
        %v3029 = vadd.f32 %v2845, %v2897
        %v3030 = vadd.f32 %v2868, %v2920
        %v3031 = vadd.f32 %v2848, %v2900
        %v3032 = vadd.f32 %v2871, %v2923
        %v3033 = vadd.f32 %v2949, %v3001
        %v3034 = vadd.f32 %v2972, %v3024
        %v3035 = vadd.f32 %v2952, %v3004
        %v3036 = vadd.f32 %v2975, %v3027
        %v3037 = vadd.f32 %v3029, %v3033
        %v3038 = vadd.f32 %v3030, %v3034
        %v3039 = vadd.f32 %v3031, %v3035
        %v3040 = vadd.f32 %v3032, %v3036
        %v3041 = vld [vmem:[%s14] sm:$0x3]
        %v3043 = vperm.slane %v3041, 0
        %v3044 = vperm.slane %v3041, 1
        %v3047 = vadd.f32 %v3037, %v3043
        %v3048 = vadd.f32 %v3038, %v3044
        %v3049 = vadd.f32 %v3039, %v3043
        %v3050 = vadd.f32 %v3040, %v3044
        %v3051 = vmax.f32 %v3047, 0.0
        %v3052 = vmax.f32 %v3048, 0.0
        %v3053 = vmax.f32 %v3049, 0.0
        %v3054 = vmax.f32 %v3050, 0.0
        %v3055 = vld [vmem:[%s15] sm:$0xff]
        %v3056 = vld [vmem:[%s15 + $0x8] sm:$0xff]
        %v3057 = vld [vmem:[%s15 + $0x10] sm:$0xff]
        %v3058 = vld [vmem:[%s15 + $0x18] sm:$0xff]
        %v3059 = vld [vmem:[%s15 + $0x20] sm:$0xff]
        %v3060 = vld [vmem:[%s15 + $0x28] sm:$0xff]
        %v3061 = vld [vmem:[%s15 + $0x30] sm:$0xff]
        %v3062 = vld [vmem:[%s15 + $0x38] sm:$0xff]
        %v3063 = vld [vmem:[%s15 + $0x40] sm:$0xff]
        %v3064 = vld [vmem:[%s15 + $0x48] sm:$0xff]
        %v3065 = vld [vmem:[%s15 + $0x50] sm:$0xff]
        %v3066 = vld [vmem:[%s15 + $0x58] sm:$0xff]
        %v3067 = vld [vmem:[%s15 + $0x60] sm:$0xff]
        %v3068 = vld [vmem:[%s15 + $0x68] sm:$0xff]
        %v3069 = vld [vmem:[%s15 + $0x70] sm:$0xff]
        %v3070 = vld [vmem:[%s15 + $0x78] sm:$0xff]
        %v3071 = vld [vmem:[%s15 + $0x80] sm:$0xff]
        %v3072 = vld [vmem:[%s15 + $0x88] sm:$0xff]
        %v3073 = vld [vmem:[%s15 + $0x90] sm:$0xff]
        %v3074 = vld [vmem:[%s15 + $0x98] sm:$0xff]
        %v3075 = vld [vmem:[%s15 + $0xa0] sm:$0xff]
        %v3076 = vld [vmem:[%s15 + $0xa8] sm:$0xff]
        %v3077 = vld [vmem:[%s15 + $0xb0] sm:$0xff]
        %v3078 = vld [vmem:[%s15 + $0xb8] sm:$0xff]
        %v3079 = vld [vmem:[%s15 + $0xc0] sm:$0xff]
        %v3080 = vld [vmem:[%s15 + $0xc8] sm:$0xff]
        %v3081 = vld [vmem:[%s15 + $0xd0] sm:$0xff]
        %v3082 = vld [vmem:[%s15 + $0xd8] sm:$0xff]
        %v3083 = vld [vmem:[%s15 + $0xe0] sm:$0xff]
        %v3084 = vld [vmem:[%s15 + $0xe8] sm:$0xff]
        %v3085 = vld [vmem:[%s15 + $0xf0] sm:$0xff]
        %v3086 = vld [vmem:[%s15 + $0xf8] sm:$0xff]
        %v3087 = vld [vmem:[%s16] sm:$0x1]
        %v3089 = vperm.slane %v3087, 0
        %3091 = vmatpush.msra.mxu0 %v3070
        %3092 = vmatpush.msra.mxu0 %v3069
        %3093 = vmatpush.msra.mxu0 %v3068
        %3094 = vmatpush.msra.mxu0 %v3067
        %3095 = vmatpush.msra.mxu0 %v3066
        %3096 = vmatpush.msra.mxu0 %v3065
        %3097 = vmatpush.msra.mxu0 %v3064
        %3098 = vmatpush.msra.mxu0 %v3063
        %3099 = vmatpush.msra.mxu0 %v3062
        %3100 = vmatpush.msra.mxu0 %v3061
        %3101 = vmatpush.msra.mxu0 %v3060
        %3102 = vmatpush.msra.mxu0 %v3059
        %3103 = vmatpush.msra.mxu0 %v3058
        %3104 = vmatpush.msra.mxu0 %v3057
        %3105 = vmatpush.msra.mxu0 %v3056
        %3106 = vmatpush.msra.mxu0 %v3055
        %3107 = vmatmul.f32.gmra.mxu0 %v3051
        %v3108 = vpop.f32.mrf.mxu0
        %v3109 = vadd.f32 %v3089, %v3108
        %3110 = vmatmul.f32.gmra.mxu0 %v3053
        %v3111 = vpop.f32.mrf.mxu0
        %v3112 = vadd.f32 %v3089, %v3111
        %3113 = vdwg.mxu0
        %3114 = vmatpush.msra.mxu0 %v3086
        %3115 = vmatpush.msra.mxu0 %v3085
        %3116 = vmatpush.msra.mxu0 %v3084
        %3117 = vmatpush.msra.mxu0 %v3083
        %3118 = vmatpush.msra.mxu0 %v3082
        %3119 = vmatpush.msra.mxu0 %v3081
        %3120 = vmatpush.msra.mxu0 %v3080
        %3121 = vmatpush.msra.mxu0 %v3079
        %3122 = vmatpush.msra.mxu0 %v3078
        %3123 = vmatpush.msra.mxu0 %v3077
        %3124 = vmatpush.msra.mxu0 %v3076
        %3125 = vmatpush.msra.mxu0 %v3075
        %3126 = vmatpush.msra.mxu0 %v3074
        %3127 = vmatpush.msra.mxu0 %v3073
        %3128 = vmatpush.msra.mxu0 %v3072
        %3129 = vmatpush.msra.mxu0 %v3071
        %3130 = vmatmul.f32.gmra.mxu0 %v3052
        %v3131 = vpop.f32.mrf.mxu0
        %v3132 = vadd.f32 %v3109, %v3131
        %3133 = vmatmul.f32.gmra.mxu0 %v3054
        %v3134 = vpop.f32.mrf.mxu0
        %v3135 = vadd.f32 %v3112, %v3134
        %3136 = vdwg.mxu0
        %3137 = vst.msk [vmem:[%s542] sm:$0xff] %vm1225, %v3132
        %3138 = vst.msk [vmem:[%s542 + $0x8] sm:$0xff] %vm1225, %v3135
        %s3139 = sand.u32 %s401, 1
        %s3140 = scalar_lea.sflag [#allocation6], %s3139
        %s3141 = sand.u32 %s401, 1
        %s3142 = smul.addr %s3141, 16
        %s3143 = scalar_lea.vmem [#allocation5], %s3142
        // Predicated region
        $region89: #{unet_byol_forward.1} parent=87 // pred_check
          %p3144 = pneg %p411
        $region90: #{unet_byol_forward.1} parent=87 // pred_check_branch
          %3146 = sbr.rel (%p3144) target = $region92
        $region91: #{unet_byol_forward.1} parent=87 // pred_region
          %s3147 = smul.u32 2, %s31
          %3149 = vsyncadd %s3140, 0
          %s3150 = smul.addr %s3147, 8
          %s3151 = scalar_lea.hbm %s17, %s3150
          %s3152 = sshll.u32 %s3143, 4
          %s3153 = int_to_ptr.vmem [resolvable:$true] %s3152
          %s3154 = sshll.u32 %s3151, 4
          %s3155 = int_to_ptr.hbm [resolvable:$true] %s3154
          %3160 = dma.vmem_to_hbm [thread:$0]  %s3153, 256, %s3155, %s3140, 128, 128, 8
        $region92: #{unet_byol_forward.1} parent=87 // pred_fallthru
          _
      $region88: #{unet_byol_forward.1} parent=5 // pred_fallthru
        _
      %p3161 = scmp.le.s32.totalorder 2, %s26
      // Predicated region
      $region93: #{unet_byol_forward.1} parent=5 // pred_check
        %p3162 = pneg %p3161
      $region94: #{unet_byol_forward.1} parent=5 // pred_check_branch
        %3164 = sbr.rel (%p3162) target = $region96
      $region95: #{unet_byol_forward.1} parent=5 // pred_region
        %s3165 = ssub.s32 %s26, 2
        // Predicated region
        $region97: #{unet_byol_forward.1} parent=95 // pred_check
          %p3166 = pneg %p417
        $region98: #{unet_byol_forward.1} parent=95 // pred_check_branch
          %3168 = sbr.rel (%p3166) target = $region100
        $region99: #{unet_byol_forward.1} parent=95 // pred_region
          %s3169 = sand.u32 %s402, 1
          %s3170 = scalar_lea.sflag [#allocation6], %s3169
          %s3171 = sand.u32 %s402, 1
          %s3172 = smul.addr %s3171, 16
          %s3173 = scalar_lea.vmem [#allocation5], %s3172
          %3175 = dma.done %s3170, 256
        $region100: #{unet_byol_forward.1} parent=95 // pred_fallthru
          _
      $region96: #{unet_byol_forward.1} parent=5 // pred_fallthru
        _
    $region6: #{unet_byol_forward.1} parent=1 // loop_footer
      %s30 = sadd.s32 1, %s26
    $region7: #{unet_byol_forward.1} parent=1 // loop_footer_branch
      %25 = sbr.rel target = $region3
    $region8: #{unet_byol_forward.1} parent=1 // loop_exit
      _
    %3176 = vsyncpa [#allocation6], 1
    %s3177 = scalar_lea.sflag [#allocation6], 1
    %3178 = vsyncpa %s3177, 1

</llo_original>
